<compile_context>
chip_gen: v6e
topology: v6e:2x2x1
jax: 0.10.0
libtpu: 0.0.40
codegen_flags: <defaults>
</compile_context>

<pallas_src>
import functools

import numpy as np
import jax
import jax.numpy as jnp
from jax.experimental import pallas as pl
from jax.experimental.pallas import tpu as pltpu


@functools.lru_cache(maxsize=None)
def _packed_dft(n, inverse, transpose):
    """Centered-DFT matrix packed as (3, n, n) = [real, imag, real + imag]."""
    eye = np.eye(n, dtype=np.complex64)
    x = np.fft.ifftshift(eye, axes=0)
    x = np.fft.ifft(x, axis=0) if inverse else np.fft.fft(x, axis=0)
    a = np.fft.fftshift(x, axes=0)
    if transpose:
        a = a.T
    r = a.real.astype(np.float32)
    i = a.imag.astype(np.float32)
    return jnp.asarray(np.stack([r, i, r + i], axis=0))


def _dc_kspace_kernel(src_r_ref, src_i_ref, tgt_r_ref, tgt_i_ref,
                      cm_r_ref, cm_i_ref, mask_ref,
                      mf_row_ref, mf_col_ref, mi_row_ref, mi_col_ref,
                      out_ref):
    C = src_r_ref.shape[1]
    H = src_r_ref.shape[2]
    W = src_r_ref.shape[3]

    # packed centered-DFT matrices: [0]=real, [1]=imag, [2]=real+imag
    fr_r, fr_i, fr_s = mf_row_ref[0], mf_row_ref[1], mf_row_ref[2]   # A_H      (H,H)
    fc_r, fc_i, fc_s = mf_col_ref[0], mf_col_ref[1], mf_col_ref[2]   # A_W^T    (W,W)
    ir_r, ir_i, ir_s = mi_row_ref[0], mi_row_ref[1], mi_row_ref[2]   # B_H      (H,H)
    ic_r, ic_i, ic_s = mi_col_ref[0], mi_col_ref[1], mi_col_ref[2]   # B_W^T    (W,W)

    m = mask_ref[0, 0]                                               # (H, W)

    def dot(a, b):
        return jnp.dot(a, b, preferred_element_type=jnp.float32)

    def gauss_lhs_const(mr, mi_, ms, dr, di):
        # (mr + i*mi) @ (dr + i*di), Gauss 3-multiply; ms = mr + mi precomputed.
        t1 = dot(mr, dr)
        t2 = dot(mi_, di)
        t3 = dot(ms, dr + di)
        return t1 - t2, t3 - t1 - t2

    def gauss_rhs_const(dr, di, mr, mi_, ms):
        # (dr + i*di) @ (mr + i*mi), Gauss 3-multiply; ms = mr + mi precomputed.
        t1 = dot(dr, mr)
        t2 = dot(di, mi_)
        t3 = dot(dr + di, ms)
        return t1 - t2, t3 - t1 - t2

    # ---- elementwise source * coilmap (per coil, natural (H, W) slabs) ------
    xr, xi = [], []
    for c in range(C):
        sr, si = src_r_ref[0, c], src_i_ref[0, c]
        cr, ci = cm_r_ref[0, c], cm_i_ref[0, c]
        xr.append(sr * cr - si * ci)
        xi.append(sr * ci + si * cr)
    tr = [tgt_r_ref[0, c] for c in range(C)]
    ti = [tgt_i_ref[0, c] for c in range(C)]

    # ---- forward column transform, batched over all 2C images ---------------
    # "natural" layout: rows = (image, H) stacked along sublanes, lanes = W
    n_r = jnp.concatenate(xr + tr, axis=0)        # (2C*H, W)
    n_i = jnp.concatenate(xi + ti, axis=0)
    kc_r, kc_i = gauss_rhs_const(n_r, n_i, fc_r, fc_i, fc_s)      # @ A_W^T

    # ---- switch to lane-stacked layout (H, 2C*W) -----------------------------
    t_r = jnp.concatenate([kc_r[j * H:(j + 1) * H, :] for j in range(2 * C)],
                          axis=-1)
    t_i = jnp.concatenate([kc_i[j * H:(j + 1) * H, :] for j in range(2 * C)],
                          axis=-1)

    # ---- forward row transform, one (H,H) @ (H, 2C*W) per Gauss term --------
    k_r, k_i = gauss_lhs_const(fr_r, fr_i, fr_s, t_r, t_i)        # A_H @ .

    # ---- k-space data consistency:  dc = sk + m * (tk - sk) -----------------
    m_t = jnp.concatenate([m] * C, axis=-1)       # (H, C*W)
    sk_r, tk_r = k_r[:, :C * W], k_r[:, C * W:]
    sk_i, tk_i = k_i[:, :C * W], k_i[:, C * W:]
    dc_r = sk_r + m_t * (tk_r - sk_r)
    dc_i = sk_i + m_t * (tk_i - sk_i)

    # ---- inverse row transform (still lane-stacked, C images) ---------------
    z_r, z_i = gauss_lhs_const(ir_r, ir_i, ir_s, dc_r, dc_i)      # B_H @ .

    # ---- back to natural layout (C*H, W) -------------------------------------
    zn_r = jnp.concatenate([z_r[:, c * W:(c + 1) * W] for c in range(C)], axis=0)
    zn_i = jnp.concatenate([z_i[:, c * W:(c + 1) * W] for c in range(C)], axis=0)

    # ---- inverse column transform, batched over C images ---------------------
    o_r, o_i = gauss_rhs_const(zn_r, zn_i, ic_r, ic_i, ic_s)      # @ B_W^T

    # ---- conj(coilmap) * out, summed over coils -------------------------------
    acc_r = jnp.zeros((H, W), jnp.float32)
    acc_i = jnp.zeros((H, W), jnp.float32)
    for c in range(C):
        cr, ci = cm_r_ref[0, c], cm_i_ref[0, c]
        orr = o_r[c * H:(c + 1) * H, :]
        oii = o_i[c * H:(c + 1) * H, :]
        acc_r = acc_r + cr * orr + ci * oii
        acc_i = acc_i + cr * oii - ci * orr

    out_ref[0, 0] = acc_r
    out_ref[0, 1] = acc_i


def data_consistency_kspace(source, target_r, target_i, mask, coilmap_r, coilmap_i):
    B, C2, H, W = source.shape
    C = C2 // 2
    src_r = source[:, :C]
    src_i = source[:, C:]

    mf_row = _packed_dft(H, False, False)   # A_H      (3, H, H)
    mf_col = _packed_dft(W, False, True)    # A_W^T    (3, W, W)
    mi_row = _packed_dft(H, True, False)    # B_H      (3, H, H)
    mi_col = _packed_dft(W, True, True)     # B_W^T    (3, W, W)

    coil_spec = pl.BlockSpec((1, C, H, W), lambda b: (b, 0, 0, 0))
    mask_spec = pl.BlockSpec((1, 1, H, W), lambda b: (b, 0, 0, 0))
    mat_h_spec = pl.BlockSpec((3, H, H), lambda b: (0, 0, 0))
    mat_w_spec = pl.BlockSpec((3, W, W), lambda b: (0, 0, 0))

    # Scoped-VMEM budget from the chosen block shapes (+ headroom for live
    # in-kernel temporaries and compiler scratch), capped for v7x's 64 MiB VMEM.
    f32 = 4
    img = H * W * f32
    bytes_io = 2 * (6 * C * img + img + 2 * img)            # double-buffered I/O
    bytes_mats = 2 * 2 * 3 * (H * H + W * W) * f32          # 4 matrix inputs, x2
    bytes_tmp = 16 * 2 * C * img + (4 << 20)                # live temps + scratch
    vmem_limit = int(min(max(bytes_io + bytes_mats + bytes_tmp, 32 << 20), 64 << 20))

    out = pl.pallas_call(
        _dc_kspace_kernel,
        out_shape=jax.ShapeDtypeStruct((B, 2, H, W), jnp.float32),
        grid=(B,),
        in_specs=[coil_spec, coil_spec,          # src_r, src_i
                  coil_spec, coil_spec,          # tgt_r, tgt_i
                  coil_spec, coil_spec,          # cm_r, cm_i
                  mask_spec,                     # mask
                  mat_h_spec, mat_w_spec,        # forward: A_H, A_W^T (packed)
                  mat_h_spec, mat_w_spec],       # inverse: B_H, B_W^T (packed)
        out_specs=pl.BlockSpec((1, 2, H, W), lambda b: (b, 0, 0, 0)),
        compiler_params=pltpu.CompilerParams(
            dimension_semantics=("parallel",),
            vmem_limit_bytes=vmem_limit),
    )(src_r, src_i, target_r, target_i, coilmap_r, coilmap_i, mask,
      mf_row, mf_col, mi_row, mi_col)
    return out


def _reference_numpy(source, target_r, target_i, mask, coilmap_r, coilmap_i):
    source = np.asarray(source)
    C = source.shape[1] // 2
    s = source[:, :C] + 1j * source[:, C:]
    t = np.asarray(target_r) + 1j * np.asarray(target_i)
    cm = np.asarray(coilmap_r) + 1j * np.asarray(coilmap_i)
    m = np.asarray(mask)

    def fft2c(x):
        x = np.fft.ifftshift(x, axes=(-2, -1))
        x = np.fft.fft2(x, axes=(-2, -1))
        return np.fft.fftshift(x, axes=(-2, -1))

    def ifft2c(x):
        x = np.fft.ifftshift(x, axes=(-2, -1))
        x = np.fft.ifft2(x, axes=(-2, -1))
        return np.fft.fftshift(x, axes=(-2, -1))

    sk = fft2c(s * cm)
    tk = fft2c(t)
    dc = (1 - m) * sk + m * tk
    o = ifft2c(dc)
    o = (np.conj(cm) * o).sum(axis=1, keepdims=True)
    return np.concatenate((o.real, o.imag), axis=1).astype(np.float32)


if __name__ == "__main__":
    B, C, H, W = 2, 4, 16, 16
    key = jax.random.PRNGKey(0)
    ks = jax.random.split(key, 7)

    source = jax.random.normal(ks[0], (B, 2 * C, H, W), dtype=jnp.float32)
    target_r = jax.random.normal(ks[1], (B, C, H, W), dtype=jnp.float32)
    target_i = jax.random.normal(ks[2], (B, C, H, W), dtype=jnp.float32)
    coilmap_r = jax.random.normal(ks[3], (B, C, H, W), dtype=jnp.float32)
    coilmap_i = jax.random.normal(ks[4], (B, C, H, W), dtype=jnp.float32)
    mask = (jax.random.uniform(ks[5], (B, 1, H, W)) > 0.5).astype(jnp.float32)

    out = data_consistency_kspace(source, target_r, target_i, mask,
                                  coilmap_r, coilmap_i)
    out = jax.block_until_ready(out)

    ref = _reference_numpy(source, target_r, target_i, mask,
                           coilmap_r, coilmap_i)
    np.testing.assert_allclose(np.asarray(out), ref, rtol=2e-3, atol=2e-3)

    print("KERNEL_OK")
</pallas_src>

<mosaic_0001>
module attributes {stable_mosaic.version = 11 : i64} {
  func.func @_dc_kspace_kernel(%arg0: i32, %arg1: memref<1x4x16x16xf32, #tpu.memory_space<vmem>>, %arg2: memref<1x4x16x16xf32, #tpu.memory_space<vmem>>, %arg3: memref<1x4x16x16xf32, #tpu.memory_space<vmem>>, %arg4: memref<1x4x16x16xf32, #tpu.memory_space<vmem>>, %arg5: memref<1x4x16x16xf32, #tpu.memory_space<vmem>>, %arg6: memref<1x4x16x16xf32, #tpu.memory_space<vmem>>, %arg7: memref<1x1x16x16xf32, #tpu.memory_space<vmem>>, %arg8: memref<3x16x16xf32, #tpu.memory_space<vmem>>, %arg9: memref<3x16x16xf32, #tpu.memory_space<vmem>>, %arg10: memref<3x16x16xf32, #tpu.memory_space<vmem>>, %arg11: memref<3x16x16xf32, #tpu.memory_space<vmem>>, %arg12: memref<1x2x16x16xf32, #tpu.memory_space<vmem>>) attributes {dimension_semantics = [#tpu.dimension_semantics<parallel>], iteration_bounds = array<i64: 2>, scalar_prefetch = 0 : i64, scratch_operands = 0 : i64, tpu.core_type = #tpu.core_type<tc>, window_params = [{transform_indices = @transform_0, window_bounds = array<i64: 1, 4, 16, 16>}, {transform_indices = @transform_1, window_bounds = array<i64: 1, 4, 16, 16>}, {transform_indices = @transform_2, window_bounds = array<i64: 1, 4, 16, 16>}, {transform_indices = @transform_3, window_bounds = array<i64: 1, 4, 16, 16>}, {transform_indices = @transform_4, window_bounds = array<i64: 1, 4, 16, 16>}, {transform_indices = @transform_5, window_bounds = array<i64: 1, 4, 16, 16>}, {transform_indices = @transform_6, window_bounds = array<i64: 1, 1, 16, 16>}, {pipeline_mode = #tpu.pipeline_mode<synchronous>, transform_indices = @transform_7, window_bounds = array<i64: 3, 16, 16>}, {pipeline_mode = #tpu.pipeline_mode<synchronous>, transform_indices = @transform_8, window_bounds = array<i64: 3, 16, 16>}, {pipeline_mode = #tpu.pipeline_mode<synchronous>, transform_indices = @transform_9, window_bounds = array<i64: 3, 16, 16>}, {pipeline_mode = #tpu.pipeline_mode<synchronous>, transform_indices = @transform_10, window_bounds = array<i64: 3, 16, 16>}, {transform_indices = @transform_11, window_bounds = array<i64: 1, 2, 16, 16>}]} {
    %c0 = arith.constant 0 : index
    %c0_0 = arith.constant 0 : index
    %c0_1 = arith.constant 0 : index
    %0 = vector.load %arg8[%c0, %c0_0, %c0_1] : memref<3x16x16xf32, #tpu.memory_space<vmem>>, vector<1x16x16xf32>
    %1 = vector.shape_cast %0 : vector<1x16x16xf32> to vector<16x16xf32>
    %c1 = arith.constant 1 : index
    %c0_2 = arith.constant 0 : index
    %c0_3 = arith.constant 0 : index
    %2 = vector.load %arg8[%c1, %c0_2, %c0_3] : memref<3x16x16xf32, #tpu.memory_space<vmem>>, vector<1x16x16xf32>
    %3 = vector.shape_cast %2 : vector<1x16x16xf32> to vector<16x16xf32>
    %c2 = arith.constant 2 : index
    %c0_4 = arith.constant 0 : index
    %c0_5 = arith.constant 0 : index
    %4 = vector.load %arg8[%c2, %c0_4, %c0_5] : memref<3x16x16xf32, #tpu.memory_space<vmem>>, vector<1x16x16xf32>
    %5 = vector.shape_cast %4 : vector<1x16x16xf32> to vector<16x16xf32>
    %c0_6 = arith.constant 0 : index
    %c0_7 = arith.constant 0 : index
    %c0_8 = arith.constant 0 : index
    %6 = vector.load %arg9[%c0_6, %c0_7, %c0_8] : memref<3x16x16xf32, #tpu.memory_space<vmem>>, vector<1x16x16xf32>
    %7 = vector.shape_cast %6 : vector<1x16x16xf32> to vector<16x16xf32>
    %c1_9 = arith.constant 1 : index
    %c0_10 = arith.constant 0 : index
    %c0_11 = arith.constant 0 : index
    %8 = vector.load %arg9[%c1_9, %c0_10, %c0_11] : memref<3x16x16xf32, #tpu.memory_space<vmem>>, vector<1x16x16xf32>
    %9 = vector.shape_cast %8 : vector<1x16x16xf32> to vector<16x16xf32>
    %c2_12 = arith.constant 2 : index
    %c0_13 = arith.constant 0 : index
    %c0_14 = arith.constant 0 : index
    %10 = vector.load %arg9[%c2_12, %c0_13, %c0_14] : memref<3x16x16xf32, #tpu.memory_space<vmem>>, vector<1x16x16xf32>
    %11 = vector.shape_cast %10 : vector<1x16x16xf32> to vector<16x16xf32>
    %c0_15 = arith.constant 0 : index
    %c0_16 = arith.constant 0 : index
    %c0_17 = arith.constant 0 : index
    %12 = vector.load %arg10[%c0_15, %c0_16, %c0_17] : memref<3x16x16xf32, #tpu.memory_space<vmem>>, vector<1x16x16xf32>
    %13 = vector.shape_cast %12 : vector<1x16x16xf32> to vector<16x16xf32>
    %c1_18 = arith.constant 1 : index
    %c0_19 = arith.constant 0 : index
    %c0_20 = arith.constant 0 : index
    %14 = vector.load %arg10[%c1_18, %c0_19, %c0_20] : memref<3x16x16xf32, #tpu.memory_space<vmem>>, vector<1x16x16xf32>
    %15 = vector.shape_cast %14 : vector<1x16x16xf32> to vector<16x16xf32>
    %c2_21 = arith.constant 2 : index
    %c0_22 = arith.constant 0 : index
    %c0_23 = arith.constant 0 : index
    %16 = vector.load %arg10[%c2_21, %c0_22, %c0_23] : memref<3x16x16xf32, #tpu.memory_space<vmem>>, vector<1x16x16xf32>
    %17 = vector.shape_cast %16 : vector<1x16x16xf32> to vector<16x16xf32>
    %c0_24 = arith.constant 0 : index
    %c0_25 = arith.constant 0 : index
    %c0_26 = arith.constant 0 : index
    %18 = vector.load %arg11[%c0_24, %c0_25, %c0_26] : memref<3x16x16xf32, #tpu.memory_space<vmem>>, vector<1x16x16xf32>
    %19 = vector.shape_cast %18 : vector<1x16x16xf32> to vector<16x16xf32>
    %c1_27 = arith.constant 1 : index
    %c0_28 = arith.constant 0 : index
    %c0_29 = arith.constant 0 : index
    %20 = vector.load %arg11[%c1_27, %c0_28, %c0_29] : memref<3x16x16xf32, #tpu.memory_space<vmem>>, vector<1x16x16xf32>
    %21 = vector.shape_cast %20 : vector<1x16x16xf32> to vector<16x16xf32>
    %c2_30 = arith.constant 2 : index
    %c0_31 = arith.constant 0 : index
    %c0_32 = arith.constant 0 : index
    %22 = vector.load %arg11[%c2_30, %c0_31, %c0_32] : memref<3x16x16xf32, #tpu.memory_space<vmem>>, vector<1x16x16xf32>
    %23 = vector.shape_cast %22 : vector<1x16x16xf32> to vector<16x16xf32>
    %c0_33 = arith.constant 0 : index
    %c0_34 = arith.constant 0 : index
    %c0_35 = arith.constant 0 : index
    %c0_36 = arith.constant 0 : index
    %24 = vector.load %arg7[%c0_33, %c0_34, %c0_35, %c0_36] : memref<1x1x16x16xf32, #tpu.memory_space<vmem>>, vector<1x1x16x16xf32>
    %25 = vector.shape_cast %24 : vector<1x1x16x16xf32> to vector<16x16xf32>
    %c0_37 = arith.constant 0 : index
    %c0_38 = arith.constant 0 : index
    %c0_39 = arith.constant 0 : index
    %c0_40 = arith.constant 0 : index
    %26 = vector.load %arg1[%c0_37, %c0_38, %c0_39, %c0_40] : memref<1x4x16x16xf32, #tpu.memory_space<vmem>>, vector<1x1x16x16xf32>
    %27 = vector.shape_cast %26 : vector<1x1x16x16xf32> to vector<16x16xf32>
    %c0_41 = arith.constant 0 : index
    %c0_42 = arith.constant 0 : index
    %c0_43 = arith.constant 0 : index
    %c0_44 = arith.constant 0 : index
    %28 = vector.load %arg2[%c0_41, %c0_42, %c0_43, %c0_44] : memref<1x4x16x16xf32, #tpu.memory_space<vmem>>, vector<1x1x16x16xf32>
    %29 = vector.shape_cast %28 : vector<1x1x16x16xf32> to vector<16x16xf32>
    %c0_45 = arith.constant 0 : index
    %c0_46 = arith.constant 0 : index
    %c0_47 = arith.constant 0 : index
    %c0_48 = arith.constant 0 : index
    %30 = vector.load %arg5[%c0_45, %c0_46, %c0_47, %c0_48] : memref<1x4x16x16xf32, #tpu.memory_space<vmem>>, vector<1x1x16x16xf32>
    %31 = vector.shape_cast %30 : vector<1x1x16x16xf32> to vector<16x16xf32>
    %c0_49 = arith.constant 0 : index
    %c0_50 = arith.constant 0 : index
    %c0_51 = arith.constant 0 : index
    %c0_52 = arith.constant 0 : index
    %32 = vector.load %arg6[%c0_49, %c0_50, %c0_51, %c0_52] : memref<1x4x16x16xf32, #tpu.memory_space<vmem>>, vector<1x1x16x16xf32>
    %33 = vector.shape_cast %32 : vector<1x1x16x16xf32> to vector<16x16xf32>
    %34 = arith.mulf %27, %31 : vector<16x16xf32>
    %35 = arith.mulf %29, %33 : vector<16x16xf32>
    %36 = arith.subf %34, %35 : vector<16x16xf32>
    %37 = arith.mulf %27, %33 : vector<16x16xf32>
    %38 = arith.mulf %29, %31 : vector<16x16xf32>
    %39 = arith.addf %37, %38 : vector<16x16xf32>
    %c0_53 = arith.constant 0 : index
    %c1_54 = arith.constant 1 : index
    %c0_55 = arith.constant 0 : index
    %c0_56 = arith.constant 0 : index
    %40 = vector.load %arg1[%c0_53, %c1_54, %c0_55, %c0_56] : memref<1x4x16x16xf32, #tpu.memory_space<vmem>>, vector<1x1x16x16xf32>
    %41 = vector.shape_cast %40 : vector<1x1x16x16xf32> to vector<16x16xf32>
    %c0_57 = arith.constant 0 : index
    %c1_58 = arith.constant 1 : index
    %c0_59 = arith.constant 0 : index
    %c0_60 = arith.constant 0 : index
    %42 = vector.load %arg2[%c0_57, %c1_58, %c0_59, %c0_60] : memref<1x4x16x16xf32, #tpu.memory_space<vmem>>, vector<1x1x16x16xf32>
    %43 = vector.shape_cast %42 : vector<1x1x16x16xf32> to vector<16x16xf32>
    %c0_61 = arith.constant 0 : index
    %c1_62 = arith.constant 1 : index
    %c0_63 = arith.constant 0 : index
    %c0_64 = arith.constant 0 : index
    %44 = vector.load %arg5[%c0_61, %c1_62, %c0_63, %c0_64] : memref<1x4x16x16xf32, #tpu.memory_space<vmem>>, vector<1x1x16x16xf32>
    %45 = vector.shape_cast %44 : vector<1x1x16x16xf32> to vector<16x16xf32>
    %c0_65 = arith.constant 0 : index
    %c1_66 = arith.constant 1 : index
    %c0_67 = arith.constant 0 : index
    %c0_68 = arith.constant 0 : index
    %46 = vector.load %arg6[%c0_65, %c1_66, %c0_67, %c0_68] : memref<1x4x16x16xf32, #tpu.memory_space<vmem>>, vector<1x1x16x16xf32>
    %47 = vector.shape_cast %46 : vector<1x1x16x16xf32> to vector<16x16xf32>
    %48 = arith.mulf %41, %45 : vector<16x16xf32>
    %49 = arith.mulf %43, %47 : vector<16x16xf32>
    %50 = arith.subf %48, %49 : vector<16x16xf32>
    %51 = arith.mulf %41, %47 : vector<16x16xf32>
    %52 = arith.mulf %43, %45 : vector<16x16xf32>
    %53 = arith.addf %51, %52 : vector<16x16xf32>
    %c0_69 = arith.constant 0 : index
    %c2_70 = arith.constant 2 : index
    %c0_71 = arith.constant 0 : index
    %c0_72 = arith.constant 0 : index
    %54 = vector.load %arg1[%c0_69, %c2_70, %c0_71, %c0_72] : memref<1x4x16x16xf32, #tpu.memory_space<vmem>>, vector<1x1x16x16xf32>
    %55 = vector.shape_cast %54 : vector<1x1x16x16xf32> to vector<16x16xf32>
    %c0_73 = arith.constant 0 : index
    %c2_74 = arith.constant 2 : index
    %c0_75 = arith.constant 0 : index
    %c0_76 = arith.constant 0 : index
    %56 = vector.load %arg2[%c0_73, %c2_74, %c0_75, %c0_76] : memref<1x4x16x16xf32, #tpu.memory_space<vmem>>, vector<1x1x16x16xf32>
    %57 = vector.shape_cast %56 : vector<1x1x16x16xf32> to vector<16x16xf32>
    %c0_77 = arith.constant 0 : index
    %c2_78 = arith.constant 2 : index
    %c0_79 = arith.constant 0 : index
    %c0_80 = arith.constant 0 : index
    %58 = vector.load %arg5[%c0_77, %c2_78, %c0_79, %c0_80] : memref<1x4x16x16xf32, #tpu.memory_space<vmem>>, vector<1x1x16x16xf32>
    %59 = vector.shape_cast %58 : vector<1x1x16x16xf32> to vector<16x16xf32>
    %c0_81 = arith.constant 0 : index
    %c2_82 = arith.constant 2 : index
    %c0_83 = arith.constant 0 : index
    %c0_84 = arith.constant 0 : index
    %60 = vector.load %arg6[%c0_81, %c2_82, %c0_83, %c0_84] : memref<1x4x16x16xf32, #tpu.memory_space<vmem>>, vector<1x1x16x16xf32>
    %61 = vector.shape_cast %60 : vector<1x1x16x16xf32> to vector<16x16xf32>
    %62 = arith.mulf %55, %59 : vector<16x16xf32>
    %63 = arith.mulf %57, %61 : vector<16x16xf32>
    %64 = arith.subf %62, %63 : vector<16x16xf32>
    %65 = arith.mulf %55, %61 : vector<16x16xf32>
    %66 = arith.mulf %57, %59 : vector<16x16xf32>
    %67 = arith.addf %65, %66 : vector<16x16xf32>
    %c0_85 = arith.constant 0 : index
    %c3 = arith.constant 3 : index
    %c0_86 = arith.constant 0 : index
    %c0_87 = arith.constant 0 : index
    %68 = vector.load %arg1[%c0_85, %c3, %c0_86, %c0_87] : memref<1x4x16x16xf32, #tpu.memory_space<vmem>>, vector<1x1x16x16xf32>
    %69 = vector.shape_cast %68 : vector<1x1x16x16xf32> to vector<16x16xf32>
    %c0_88 = arith.constant 0 : index
    %c3_89 = arith.constant 3 : index
    %c0_90 = arith.constant 0 : index
    %c0_91 = arith.constant 0 : index
    %70 = vector.load %arg2[%c0_88, %c3_89, %c0_90, %c0_91] : memref<1x4x16x16xf32, #tpu.memory_space<vmem>>, vector<1x1x16x16xf32>
    %71 = vector.shape_cast %70 : vector<1x1x16x16xf32> to vector<16x16xf32>
    %c0_92 = arith.constant 0 : index
    %c3_93 = arith.constant 3 : index
    %c0_94 = arith.constant 0 : index
    %c0_95 = arith.constant 0 : index
    %72 = vector.load %arg5[%c0_92, %c3_93, %c0_94, %c0_95] : memref<1x4x16x16xf32, #tpu.memory_space<vmem>>, vector<1x1x16x16xf32>
    %73 = vector.shape_cast %72 : vector<1x1x16x16xf32> to vector<16x16xf32>
    %c0_96 = arith.constant 0 : index
    %c3_97 = arith.constant 3 : index
    %c0_98 = arith.constant 0 : index
    %c0_99 = arith.constant 0 : index
    %74 = vector.load %arg6[%c0_96, %c3_97, %c0_98, %c0_99] : memref<1x4x16x16xf32, #tpu.memory_space<vmem>>, vector<1x1x16x16xf32>
    %75 = vector.shape_cast %74 : vector<1x1x16x16xf32> to vector<16x16xf32>
    %76 = arith.mulf %69, %73 : vector<16x16xf32>
    %77 = arith.mulf %71, %75 : vector<16x16xf32>
    %78 = arith.subf %76, %77 : vector<16x16xf32>
    %79 = arith.mulf %69, %75 : vector<16x16xf32>
    %80 = arith.mulf %71, %73 : vector<16x16xf32>
    %81 = arith.addf %79, %80 : vector<16x16xf32>
    %c0_100 = arith.constant 0 : index
    %c0_101 = arith.constant 0 : index
    %c0_102 = arith.constant 0 : index
    %c0_103 = arith.constant 0 : index
    %82 = vector.load %arg3[%c0_100, %c0_101, %c0_102, %c0_103] : memref<1x4x16x16xf32, #tpu.memory_space<vmem>>, vector<1x1x16x16xf32>
    %83 = vector.shape_cast %82 : vector<1x1x16x16xf32> to vector<16x16xf32>
    %c0_104 = arith.constant 0 : index
    %c1_105 = arith.constant 1 : index
    %c0_106 = arith.constant 0 : index
    %c0_107 = arith.constant 0 : index
    %84 = vector.load %arg3[%c0_104, %c1_105, %c0_106, %c0_107] : memref<1x4x16x16xf32, #tpu.memory_space<vmem>>, vector<1x1x16x16xf32>
    %85 = vector.shape_cast %84 : vector<1x1x16x16xf32> to vector<16x16xf32>
    %c0_108 = arith.constant 0 : index
    %c2_109 = arith.constant 2 : index
    %c0_110 = arith.constant 0 : index
    %c0_111 = arith.constant 0 : index
    %86 = vector.load %arg3[%c0_108, %c2_109, %c0_110, %c0_111] : memref<1x4x16x16xf32, #tpu.memory_space<vmem>>, vector<1x1x16x16xf32>
    %87 = vector.shape_cast %86 : vector<1x1x16x16xf32> to vector<16x16xf32>
    %c0_112 = arith.constant 0 : index
    %c3_113 = arith.constant 3 : index
    %c0_114 = arith.constant 0 : index
    %c0_115 = arith.constant 0 : index
    %88 = vector.load %arg3[%c0_112, %c3_113, %c0_114, %c0_115] : memref<1x4x16x16xf32, #tpu.memory_space<vmem>>, vector<1x1x16x16xf32>
    %89 = vector.shape_cast %88 : vector<1x1x16x16xf32> to vector<16x16xf32>
    %c0_116 = arith.constant 0 : index
    %c0_117 = arith.constant 0 : index
    %c0_118 = arith.constant 0 : index
    %c0_119 = arith.constant 0 : index
    %90 = vector.load %arg4[%c0_116, %c0_117, %c0_118, %c0_119] : memref<1x4x16x16xf32, #tpu.memory_space<vmem>>, vector<1x1x16x16xf32>
    %91 = vector.shape_cast %90 : vector<1x1x16x16xf32> to vector<16x16xf32>
    %c0_120 = arith.constant 0 : index
    %c1_121 = arith.constant 1 : index
    %c0_122 = arith.constant 0 : index
    %c0_123 = arith.constant 0 : index
    %92 = vector.load %arg4[%c0_120, %c1_121, %c0_122, %c0_123] : memref<1x4x16x16xf32, #tpu.memory_space<vmem>>, vector<1x1x16x16xf32>
    %93 = vector.shape_cast %92 : vector<1x1x16x16xf32> to vector<16x16xf32>
    %c0_124 = arith.constant 0 : index
    %c2_125 = arith.constant 2 : index
    %c0_126 = arith.constant 0 : index
    %c0_127 = arith.constant 0 : index
    %94 = vector.load %arg4[%c0_124, %c2_125, %c0_126, %c0_127] : memref<1x4x16x16xf32, #tpu.memory_space<vmem>>, vector<1x1x16x16xf32>
    %95 = vector.shape_cast %94 : vector<1x1x16x16xf32> to vector<16x16xf32>
    %c0_128 = arith.constant 0 : index
    %c3_129 = arith.constant 3 : index
    %c0_130 = arith.constant 0 : index
    %c0_131 = arith.constant 0 : index
    %96 = vector.load %arg4[%c0_128, %c3_129, %c0_130, %c0_131] : memref<1x4x16x16xf32, #tpu.memory_space<vmem>>, vector<1x1x16x16xf32>
    %97 = vector.shape_cast %96 : vector<1x1x16x16xf32> to vector<16x16xf32>
    %98 = tpu.concatenate %36, %50, %64, %78, %83, %85, %87, %89 in 0 : vector<16x16xf32>, vector<16x16xf32>, vector<16x16xf32>, vector<16x16xf32>, vector<16x16xf32>, vector<16x16xf32>, vector<16x16xf32>, vector<16x16xf32> -> vector<128x16xf32>
    %99 = tpu.concatenate %39, %53, %67, %81, %91, %93, %95, %97 in 0 : vector<16x16xf32>, vector<16x16xf32>, vector<16x16xf32>, vector<16x16xf32>, vector<16x16xf32>, vector<16x16xf32>, vector<16x16xf32>, vector<16x16xf32> -> vector<128x16xf32>
    %cst = arith.constant dense<0.000000e+00> : vector<128x16xf32>
    %100 = tpu.matmul %98, %7, %cst {dimension_numbers = #tpu.dot_dimension_numbers<[1], [0], [0], [1], [0, 0, 1, 1], [], []>} : vector<128x16xf32>, vector<16x16xf32>, vector<128x16xf32> -> vector<128x16xf32>
    %cst_132 = arith.constant dense<0.000000e+00> : vector<128x16xf32>
    %101 = tpu.matmul %99, %9, %cst_132 {dimension_numbers = #tpu.dot_dimension_numbers<[1], [0], [0], [1], [0, 0, 1, 1], [], []>} : vector<128x16xf32>, vector<16x16xf32>, vector<128x16xf32> -> vector<128x16xf32>
    %102 = arith.addf %98, %99 : vector<128x16xf32>
    %cst_133 = arith.constant dense<0.000000e+00> : vector<128x16xf32>
    %103 = tpu.matmul %102, %11, %cst_133 {dimension_numbers = #tpu.dot_dimension_numbers<[1], [0], [0], [1], [0, 0, 1, 1], [], []>} : vector<128x16xf32>, vector<16x16xf32>, vector<128x16xf32> -> vector<128x16xf32>
    %104 = arith.subf %100, %101 : vector<128x16xf32>
    %105 = arith.subf %103, %100 : vector<128x16xf32>
    %106 = arith.subf %105, %101 : vector<128x16xf32>
    %107 = vector.extract_strided_slice %104 {offsets = [0, 0], sizes = [16, 16], strides = [1, 1]} : vector<128x16xf32> to vector<16x16xf32>
    %108 = vector.extract_strided_slice %104 {offsets = [16, 0], sizes = [16, 16], strides = [1, 1]} : vector<128x16xf32> to vector<16x16xf32>
    %109 = vector.extract_strided_slice %104 {offsets = [32, 0], sizes = [16, 16], strides = [1, 1]} : vector<128x16xf32> to vector<16x16xf32>
    %110 = vector.extract_strided_slice %104 {offsets = [48, 0], sizes = [16, 16], strides = [1, 1]} : vector<128x16xf32> to vector<16x16xf32>
    %111 = vector.extract_strided_slice %104 {offsets = [64, 0], sizes = [16, 16], strides = [1, 1]} : vector<128x16xf32> to vector<16x16xf32>
    %112 = vector.extract_strided_slice %104 {offsets = [80, 0], sizes = [16, 16], strides = [1, 1]} : vector<128x16xf32> to vector<16x16xf32>
    %113 = vector.extract_strided_slice %104 {offsets = [96, 0], sizes = [16, 16], strides = [1, 1]} : vector<128x16xf32> to vector<16x16xf32>
    %114 = vector.extract_strided_slice %104 {offsets = [112, 0], sizes = [16, 16], strides = [1, 1]} : vector<128x16xf32> to vector<16x16xf32>
    %115 = tpu.concatenate %107, %108, %109, %110, %111, %112, %113, %114 in 1 : vector<16x16xf32>, vector<16x16xf32>, vector<16x16xf32>, vector<16x16xf32>, vector<16x16xf32>, vector<16x16xf32>, vector<16x16xf32>, vector<16x16xf32> -> vector<16x128xf32>
    %116 = vector.extract_strided_slice %106 {offsets = [0, 0], sizes = [16, 16], strides = [1, 1]} : vector<128x16xf32> to vector<16x16xf32>
    %117 = vector.extract_strided_slice %106 {offsets = [16, 0], sizes = [16, 16], strides = [1, 1]} : vector<128x16xf32> to vector<16x16xf32>
    %118 = vector.extract_strided_slice %106 {offsets = [32, 0], sizes = [16, 16], strides = [1, 1]} : vector<128x16xf32> to vector<16x16xf32>
    %119 = vector.extract_strided_slice %106 {offsets = [48, 0], sizes = [16, 16], strides = [1, 1]} : vector<128x16xf32> to vector<16x16xf32>
    %120 = vector.extract_strided_slice %106 {offsets = [64, 0], sizes = [16, 16], strides = [1, 1]} : vector<128x16xf32> to vector<16x16xf32>
    %121 = vector.extract_strided_slice %106 {offsets = [80, 0], sizes = [16, 16], strides = [1, 1]} : vector<128x16xf32> to vector<16x16xf32>
    %122 = vector.extract_strided_slice %106 {offsets = [96, 0], sizes = [16, 16], strides = [1, 1]} : vector<128x16xf32> to vector<16x16xf32>
    %123 = vector.extract_strided_slice %106 {offsets = [112, 0], sizes = [16, 16], strides = [1, 1]} : vector<128x16xf32> to vector<16x16xf32>
    %124 = tpu.concatenate %116, %117, %118, %119, %120, %121, %122, %123 in 1 : vector<16x16xf32>, vector<16x16xf32>, vector<16x16xf32>, vector<16x16xf32>, vector<16x16xf32>, vector<16x16xf32>, vector<16x16xf32>, vector<16x16xf32> -> vector<16x128xf32>
    %cst_134 = arith.constant dense<0.000000e+00> : vector<16x128xf32>
    %125 = tpu.matmul %1, %115, %cst_134 {dimension_numbers = #tpu.dot_dimension_numbers<[1], [0], [0], [1], [0, 0, 1, 1], [], []>} : vector<16x16xf32>, vector<16x128xf32>, vector<16x128xf32> -> vector<16x128xf32>
    %cst_135 = arith.constant dense<0.000000e+00> : vector<16x128xf32>
    %126 = tpu.matmul %3, %124, %cst_135 {dimension_numbers = #tpu.dot_dimension_numbers<[1], [0], [0], [1], [0, 0, 1, 1], [], []>} : vector<16x16xf32>, vector<16x128xf32>, vector<16x128xf32> -> vector<16x128xf32>
    %127 = arith.addf %115, %124 : vector<16x128xf32>
    %cst_136 = arith.constant dense<0.000000e+00> : vector<16x128xf32>
    %128 = tpu.matmul %5, %127, %cst_136 {dimension_numbers = #tpu.dot_dimension_numbers<[1], [0], [0], [1], [0, 0, 1, 1], [], []>} : vector<16x16xf32>, vector<16x128xf32>, vector<16x128xf32> -> vector<16x128xf32>
    %129 = arith.subf %125, %126 : vector<16x128xf32>
    %130 = arith.subf %128, %125 : vector<16x128xf32>
    %131 = arith.subf %130, %126 : vector<16x128xf32>
    %132 = tpu.concatenate %25, %25, %25, %25 in 1 : vector<16x16xf32>, vector<16x16xf32>, vector<16x16xf32>, vector<16x16xf32> -> vector<16x64xf32>
    %133 = vector.extract_strided_slice %129 {offsets = [0, 0], sizes = [16, 64], strides = [1, 1]} : vector<16x128xf32> to vector<16x64xf32>
    %134 = vector.extract_strided_slice %129 {offsets = [0, 64], sizes = [16, 64], strides = [1, 1]} : vector<16x128xf32> to vector<16x64xf32>
    %135 = vector.extract_strided_slice %131 {offsets = [0, 0], sizes = [16, 64], strides = [1, 1]} : vector<16x128xf32> to vector<16x64xf32>
    %136 = vector.extract_strided_slice %131 {offsets = [0, 64], sizes = [16, 64], strides = [1, 1]} : vector<16x128xf32> to vector<16x64xf32>
    %137 = arith.subf %134, %133 : vector<16x64xf32>
    %138 = arith.mulf %132, %137 : vector<16x64xf32>
    %139 = arith.addf %133, %138 : vector<16x64xf32>
    %140 = arith.subf %136, %135 : vector<16x64xf32>
    %141 = arith.mulf %132, %140 : vector<16x64xf32>
    %142 = arith.addf %135, %141 : vector<16x64xf32>
    %cst_137 = arith.constant dense<0.000000e+00> : vector<16x64xf32>
    %143 = tpu.matmul %13, %139, %cst_137 {dimension_numbers = #tpu.dot_dimension_numbers<[1], [0], [0], [1], [0, 0, 1, 1], [], []>} : vector<16x16xf32>, vector<16x64xf32>, vector<16x64xf32> -> vector<16x64xf32>
    %cst_138 = arith.constant dense<0.000000e+00> : vector<16x64xf32>
    %144 = tpu.matmul %15, %142, %cst_138 {dimension_numbers = #tpu.dot_dimension_numbers<[1], [0], [0], [1], [0, 0, 1, 1], [], []>} : vector<16x16xf32>, vector<16x64xf32>, vector<16x64xf32> -> vector<16x64xf32>
    %145 = arith.addf %139, %142 : vector<16x64xf32>
    %cst_139 = arith.constant dense<0.000000e+00> : vector<16x64xf32>
    %146 = tpu.matmul %17, %145, %cst_139 {dimension_numbers = #tpu.dot_dimension_numbers<[1], [0], [0], [1], [0, 0, 1, 1], [], []>} : vector<16x16xf32>, vector<16x64xf32>, vector<16x64xf32> -> vector<16x64xf32>
    %147 = arith.subf %143, %144 : vector<16x64xf32>
    %148 = arith.subf %146, %143 : vector<16x64xf32>
    %149 = arith.subf %148, %144 : vector<16x64xf32>
    %150 = vector.extract_strided_slice %147 {offsets = [0, 0], sizes = [16, 16], strides = [1, 1]} : vector<16x64xf32> to vector<16x16xf32>
    %151 = vector.extract_strided_slice %147 {offsets = [0, 16], sizes = [16, 16], strides = [1, 1]} : vector<16x64xf32> to vector<16x16xf32>
    %152 = vector.extract_strided_slice %147 {offsets = [0, 32], sizes = [16, 16], strides = [1, 1]} : vector<16x64xf32> to vector<16x16xf32>
    %153 = vector.extract_strided_slice %147 {offsets = [0, 48], sizes = [16, 16], strides = [1, 1]} : vector<16x64xf32> to vector<16x16xf32>
    %154 = tpu.concatenate %150, %151, %152, %153 in 0 : vector<16x16xf32>, vector<16x16xf32>, vector<16x16xf32>, vector<16x16xf32> -> vector<64x16xf32>
    %155 = vector.extract_strided_slice %149 {offsets = [0, 0], sizes = [16, 16], strides = [1, 1]} : vector<16x64xf32> to vector<16x16xf32>
    %156 = vector.extract_strided_slice %149 {offsets = [0, 16], sizes = [16, 16], strides = [1, 1]} : vector<16x64xf32> to vector<16x16xf32>
    %157 = vector.extract_strided_slice %149 {offsets = [0, 32], sizes = [16, 16], strides = [1, 1]} : vector<16x64xf32> to vector<16x16xf32>
    %158 = vector.extract_strided_slice %149 {offsets = [0, 48], sizes = [16, 16], strides = [1, 1]} : vector<16x64xf32> to vector<16x16xf32>
    %159 = tpu.concatenate %155, %156, %157, %158 in 0 : vector<16x16xf32>, vector<16x16xf32>, vector<16x16xf32>, vector<16x16xf32> -> vector<64x16xf32>
    %cst_140 = arith.constant dense<0.000000e+00> : vector<64x16xf32>
    %160 = tpu.matmul %154, %19, %cst_140 {dimension_numbers = #tpu.dot_dimension_numbers<[1], [0], [0], [1], [0, 0, 1, 1], [], []>} : vector<64x16xf32>, vector<16x16xf32>, vector<64x16xf32> -> vector<64x16xf32>
    %cst_141 = arith.constant dense<0.000000e+00> : vector<64x16xf32>
    %161 = tpu.matmul %159, %21, %cst_141 {dimension_numbers = #tpu.dot_dimension_numbers<[1], [0], [0], [1], [0, 0, 1, 1], [], []>} : vector<64x16xf32>, vector<16x16xf32>, vector<64x16xf32> -> vector<64x16xf32>
    %162 = arith.addf %154, %159 : vector<64x16xf32>
    %cst_142 = arith.constant dense<0.000000e+00> : vector<64x16xf32>
    %163 = tpu.matmul %162, %23, %cst_142 {dimension_numbers = #tpu.dot_dimension_numbers<[1], [0], [0], [1], [0, 0, 1, 1], [], []>} : vector<64x16xf32>, vector<16x16xf32>, vector<64x16xf32> -> vector<64x16xf32>
    %164 = arith.subf %160, %161 : vector<64x16xf32>
    %165 = arith.subf %163, %160 : vector<64x16xf32>
    %166 = arith.subf %165, %161 : vector<64x16xf32>
    %cst_143 = arith.constant 0.000000e+00 : f32
    %167 = vector.broadcast %cst_143 : f32 to vector<16x16xf32>
    %cst_144 = arith.constant 0.000000e+00 : f32
    %168 = vector.broadcast %cst_144 : f32 to vector<16x16xf32>
    %c0_145 = arith.constant 0 : index
    %c0_146 = arith.constant 0 : index
    %c0_147 = arith.constant 0 : index
    %c0_148 = arith.constant 0 : index
    %169 = vector.load %arg5[%c0_145, %c0_146, %c0_147, %c0_148] : memref<1x4x16x16xf32, #tpu.memory_space<vmem>>, vector<1x1x16x16xf32>
    %170 = vector.shape_cast %169 : vector<1x1x16x16xf32> to vector<16x16xf32>
    %c0_149 = arith.constant 0 : index
    %c0_150 = arith.constant 0 : index
    %c0_151 = arith.constant 0 : index
    %c0_152 = arith.constant 0 : index
    %171 = vector.load %arg6[%c0_149, %c0_150, %c0_151, %c0_152] : memref<1x4x16x16xf32, #tpu.memory_space<vmem>>, vector<1x1x16x16xf32>
    %172 = vector.shape_cast %171 : vector<1x1x16x16xf32> to vector<16x16xf32>
    %173 = vector.extract_strided_slice %164 {offsets = [0, 0], sizes = [16, 16], strides = [1, 1]} : vector<64x16xf32> to vector<16x16xf32>
    %174 = vector.extract_strided_slice %166 {offsets = [0, 0], sizes = [16, 16], strides = [1, 1]} : vector<64x16xf32> to vector<16x16xf32>
    %175 = arith.mulf %170, %173 : vector<16x16xf32>
    %176 = arith.addf %167, %175 : vector<16x16xf32>
    %177 = arith.mulf %172, %174 : vector<16x16xf32>
    %178 = arith.addf %176, %177 : vector<16x16xf32>
    %179 = arith.mulf %170, %174 : vector<16x16xf32>
    %180 = arith.addf %168, %179 : vector<16x16xf32>
    %181 = arith.mulf %172, %173 : vector<16x16xf32>
    %182 = arith.subf %180, %181 : vector<16x16xf32>
    %c0_153 = arith.constant 0 : index
    %c1_154 = arith.constant 1 : index
    %c0_155 = arith.constant 0 : index
    %c0_156 = arith.constant 0 : index
    %183 = vector.load %arg5[%c0_153, %c1_154, %c0_155, %c0_156] : memref<1x4x16x16xf32, #tpu.memory_space<vmem>>, vector<1x1x16x16xf32>
    %184 = vector.shape_cast %183 : vector<1x1x16x16xf32> to vector<16x16xf32>
    %c0_157 = arith.constant 0 : index
    %c1_158 = arith.constant 1 : index
    %c0_159 = arith.constant 0 : index
    %c0_160 = arith.constant 0 : index
    %185 = vector.load %arg6[%c0_157, %c1_158, %c0_159, %c0_160] : memref<1x4x16x16xf32, #tpu.memory_space<vmem>>, vector<1x1x16x16xf32>
    %186 = vector.shape_cast %185 : vector<1x1x16x16xf32> to vector<16x16xf32>
    %187 = vector.extract_strided_slice %164 {offsets = [16, 0], sizes = [16, 16], strides = [1, 1]} : vector<64x16xf32> to vector<16x16xf32>
    %188 = vector.extract_strided_slice %166 {offsets = [16, 0], sizes = [16, 16], strides = [1, 1]} : vector<64x16xf32> to vector<16x16xf32>
    %189 = arith.mulf %184, %187 : vector<16x16xf32>
    %190 = arith.addf %178, %189 : vector<16x16xf32>
    %191 = arith.mulf %186, %188 : vector<16x16xf32>
    %192 = arith.addf %190, %191 : vector<16x16xf32>
    %193 = arith.mulf %184, %188 : vector<16x16xf32>
    %194 = arith.addf %182, %193 : vector<16x16xf32>
    %195 = arith.mulf %186, %187 : vector<16x16xf32>
    %196 = arith.subf %194, %195 : vector<16x16xf32>
    %c0_161 = arith.constant 0 : index
    %c2_162 = arith.constant 2 : index
    %c0_163 = arith.constant 0 : index
    %c0_164 = arith.constant 0 : index
    %197 = vector.load %arg5[%c0_161, %c2_162, %c0_163, %c0_164] : memref<1x4x16x16xf32, #tpu.memory_space<vmem>>, vector<1x1x16x16xf32>
    %198 = vector.shape_cast %197 : vector<1x1x16x16xf32> to vector<16x16xf32>
    %c0_165 = arith.constant 0 : index
    %c2_166 = arith.constant 2 : index
    %c0_167 = arith.constant 0 : index
    %c0_168 = arith.constant 0 : index
    %199 = vector.load %arg6[%c0_165, %c2_166, %c0_167, %c0_168] : memref<1x4x16x16xf32, #tpu.memory_space<vmem>>, vector<1x1x16x16xf32>
    %200 = vector.shape_cast %199 : vector<1x1x16x16xf32> to vector<16x16xf32>
    %201 = vector.extract_strided_slice %164 {offsets = [32, 0], sizes = [16, 16], strides = [1, 1]} : vector<64x16xf32> to vector<16x16xf32>
    %202 = vector.extract_strided_slice %166 {offsets = [32, 0], sizes = [16, 16], strides = [1, 1]} : vector<64x16xf32> to vector<16x16xf32>
    %203 = arith.mulf %198, %201 : vector<16x16xf32>
    %204 = arith.addf %192, %203 : vector<16x16xf32>
    %205 = arith.mulf %200, %202 : vector<16x16xf32>
    %206 = arith.addf %204, %205 : vector<16x16xf32>
    %207 = arith.mulf %198, %202 : vector<16x16xf32>
    %208 = arith.addf %196, %207 : vector<16x16xf32>
    %209 = arith.mulf %200, %201 : vector<16x16xf32>
    %210 = arith.subf %208, %209 : vector<16x16xf32>
    %c0_169 = arith.constant 0 : index
    %c3_170 = arith.constant 3 : index
    %c0_171 = arith.constant 0 : index
    %c0_172 = arith.constant 0 : index
    %211 = vector.load %arg5[%c0_169, %c3_170, %c0_171, %c0_172] : memref<1x4x16x16xf32, #tpu.memory_space<vmem>>, vector<1x1x16x16xf32>
    %212 = vector.shape_cast %211 : vector<1x1x16x16xf32> to vector<16x16xf32>
    %c0_173 = arith.constant 0 : index
    %c3_174 = arith.constant 3 : index
    %c0_175 = arith.constant 0 : index
    %c0_176 = arith.constant 0 : index
    %213 = vector.load %arg6[%c0_173, %c3_174, %c0_175, %c0_176] : memref<1x4x16x16xf32, #tpu.memory_space<vmem>>, vector<1x1x16x16xf32>
    %214 = vector.shape_cast %213 : vector<1x1x16x16xf32> to vector<16x16xf32>
    %215 = vector.extract_strided_slice %164 {offsets = [48, 0], sizes = [16, 16], strides = [1, 1]} : vector<64x16xf32> to vector<16x16xf32>
    %216 = vector.extract_strided_slice %166 {offsets = [48, 0], sizes = [16, 16], strides = [1, 1]} : vector<64x16xf32> to vector<16x16xf32>
    %217 = arith.mulf %212, %215 : vector<16x16xf32>
    %218 = arith.addf %206, %217 : vector<16x16xf32>
    %219 = arith.mulf %214, %216 : vector<16x16xf32>
    %220 = arith.addf %218, %219 : vector<16x16xf32>
    %221 = arith.mulf %212, %216 : vector<16x16xf32>
    %222 = arith.addf %210, %221 : vector<16x16xf32>
    %223 = arith.mulf %214, %215 : vector<16x16xf32>
    %224 = arith.subf %222, %223 : vector<16x16xf32>
    %c0_177 = arith.constant 0 : index
    %c0_178 = arith.constant 0 : index
    %c0_179 = arith.constant 0 : index
    %c0_180 = arith.constant 0 : index
    %225 = vector.load %arg12[%c0_177, %c0_178, %c0_179, %c0_180] : memref<1x2x16x16xf32, #tpu.memory_space<vmem>>, vector<1x1x16x16xf32>
    %226 = vector.shape_cast %225 : vector<1x1x16x16xf32> to vector<16x16xf32>
    %227 = vector.shape_cast %220 : vector<16x16xf32> to vector<1x1x16x16xf32>
    tpu.vector_store %arg12[%c0_177, %c0_178, %c0_179, %c0_180], %227 {strides = array<i32>} : memref<1x2x16x16xf32, #tpu.memory_space<vmem>>, vector<1x1x16x16xf32>,
    %c0_181 = arith.constant 0 : index
    %c1_182 = arith.constant 1 : index
    %c0_183 = arith.constant 0 : index
    %c0_184 = arith.constant 0 : index
    %228 = vector.load %arg12[%c0_181, %c1_182, %c0_183, %c0_184] : memref<1x2x16x16xf32, #tpu.memory_space<vmem>>, vector<1x1x16x16xf32>
    %229 = vector.shape_cast %228 : vector<1x1x16x16xf32> to vector<16x16xf32>
    %230 = vector.shape_cast %224 : vector<16x16xf32> to vector<1x1x16x16xf32>
    tpu.vector_store %arg12[%c0_181, %c1_182, %c0_183, %c0_184], %230 {strides = array<i32>} : memref<1x2x16x16xf32, #tpu.memory_space<vmem>>, vector<1x1x16x16xf32>,
    return
  }
  func.func @transform_0(%arg0: i32) -> (i32, i32, i32, i32) {
    %c0_i32 = arith.constant 0 : i32
    %c0_i32_0 = arith.constant 0 : i32
    %c0_i32_1 = arith.constant 0 : i32
    %c0_i32_2 = arith.constant 0 : i32
    return %arg0, %c0_i32, %c0_i32_0, %c0_i32_1 : i32, i32, i32, i32
  }
  func.func @transform_1(%arg0: i32) -> (i32, i32, i32, i32) {
    %c0_i32 = arith.constant 0 : i32
    %c0_i32_0 = arith.constant 0 : i32
    %c0_i32_1 = arith.constant 0 : i32
    %c0_i32_2 = arith.constant 0 : i32
    return %arg0, %c0_i32, %c0_i32_0, %c0_i32_1 : i32, i32, i32, i32
  }
  func.func @transform_2(%arg0: i32) -> (i32, i32, i32, i32) {
    %c0_i32 = arith.constant 0 : i32
    %c0_i32_0 = arith.constant 0 : i32
    %c0_i32_1 = arith.constant 0 : i32
    %c0_i32_2 = arith.constant 0 : i32
    return %arg0, %c0_i32, %c0_i32_0, %c0_i32_1 : i32, i32, i32, i32
  }
  func.func @transform_3(%arg0: i32) -> (i32, i32, i32, i32) {
    %c0_i32 = arith.constant 0 : i32
    %c0_i32_0 = arith.constant 0 : i32
    %c0_i32_1 = arith.constant 0 : i32
    %c0_i32_2 = arith.constant 0 : i32
    return %arg0, %c0_i32, %c0_i32_0, %c0_i32_1 : i32, i32, i32, i32
  }
  func.func @transform_4(%arg0: i32) -> (i32, i32, i32, i32) {
    %c0_i32 = arith.constant 0 : i32
    %c0_i32_0 = arith.constant 0 : i32
    %c0_i32_1 = arith.constant 0 : i32
    %c0_i32_2 = arith.constant 0 : i32
    return %arg0, %c0_i32, %c0_i32_0, %c0_i32_1 : i32, i32, i32, i32
  }
  func.func @transform_5(%arg0: i32) -> (i32, i32, i32, i32) {
    %c0_i32 = arith.constant 0 : i32
    %c0_i32_0 = arith.constant 0 : i32
    %c0_i32_1 = arith.constant 0 : i32
    %c0_i32_2 = arith.constant 0 : i32
    return %arg0, %c0_i32, %c0_i32_0, %c0_i32_1 : i32, i32, i32, i32
  }
  func.func @transform_6(%arg0: i32) -> (i32, i32, i32, i32) {
    %c0_i32 = arith.constant 0 : i32
    %c0_i32_0 = arith.constant 0 : i32
    %c0_i32_1 = arith.constant 0 : i32
    %c0_i32_2 = arith.constant 0 : i32
    return %arg0, %c0_i32, %c0_i32_0, %c0_i32_1 : i32, i32, i32, i32
  }
  func.func @transform_7(%arg0: i32) -> (i32, i32, i32) {
    %c0_i32 = arith.constant 0 : i32
    %c0_i32_0 = arith.constant 0 : i32
    %c0_i32_1 = arith.constant 0 : i32
    %c0_i32_2 = arith.constant 0 : i32
    return %c0_i32, %c0_i32_0, %c0_i32_1 : i32, i32, i32
  }
  func.func @transform_8(%arg0: i32) -> (i32, i32, i32) {
    %c0_i32 = arith.constant 0 : i32
    %c0_i32_0 = arith.constant 0 : i32
    %c0_i32_1 = arith.constant 0 : i32
    %c0_i32_2 = arith.constant 0 : i32
    return %c0_i32, %c0_i32_0, %c0_i32_1 : i32, i32, i32
  }
  func.func @transform_9(%arg0: i32) -> (i32, i32, i32) {
    %c0_i32 = arith.constant 0 : i32
    %c0_i32_0 = arith.constant 0 : i32
    %c0_i32_1 = arith.constant 0 : i32
    %c0_i32_2 = arith.constant 0 : i32
    return %c0_i32, %c0_i32_0, %c0_i32_1 : i32, i32, i32
  }
  func.func @transform_10(%arg0: i32) -> (i32, i32, i32) {
    %c0_i32 = arith.constant 0 : i32
    %c0_i32_0 = arith.constant 0 : i32
    %c0_i32_1 = arith.constant 0 : i32
    %c0_i32_2 = arith.constant 0 : i32
    return %c0_i32, %c0_i32_0, %c0_i32_1 : i32, i32, i32
  }
  func.func @transform_11(%arg0: i32) -> (i32, i32, i32, i32) {
    %c0_i32 = arith.constant 0 : i32
    %c0_i32_0 = arith.constant 0 : i32
    %c0_i32_1 = arith.constant 0 : i32
    %c0_i32_2 = arith.constant 0 : i32
    return %arg0, %c0_i32, %c0_i32_0, %c0_i32_1 : i32, i32, i32, i32
  }
}

</mosaic_0001>

<llo_original>
// kernel: tpu_custom_call.1
$region0: #{tpu_custom_call.1}
  #allocation0 [shape = 'u32[]', space=smem, size = 0x4, offset = 0x4, fixed_abs, tag = 'smem constant byte address 0x4 - core index']
  #allocation1 [shape = 'u32[144,128]{1,0:T(1,128)}', space=vmem, size = 0x12000, scoped, tag = 'internal scratch']
  %s0 = inlined_call_operand.hbm [shape: f32[2,4,16,16], index: 0, kind: input, shape index: {}]
  %s1 = inlined_call_operand.hbm [shape: f32[2,4,16,16], index: 1, kind: input, shape index: {}]
  %s2 = inlined_call_operand.hbm [shape: f32[2,4,16,16], index: 2, kind: input, shape index: {}]
  %s3 = inlined_call_operand.hbm [shape: f32[2,4,16,16], index: 3, kind: input, shape index: {}]
  %s4 = inlined_call_operand.hbm [shape: f32[2,4,16,16], index: 4, kind: input, shape index: {}]
  %s5 = inlined_call_operand.hbm [shape: f32[2,4,16,16], index: 5, kind: input, shape index: {}]
  %s6 = inlined_call_operand.hbm [shape: f32[2,1,16,16], index: 6, kind: input, shape index: {}]
  %s7 = inlined_call_operand.hbm [shape: f32[3,16,16], index: 7, kind: input, shape index: {}]
  %s8 = inlined_call_operand.hbm [shape: f32[3,16,16], index: 8, kind: input, shape index: {}]
  %s9 = inlined_call_operand.hbm [shape: f32[3,16,16], index: 9, kind: input, shape index: {}]
  %s10 = inlined_call_operand.hbm [shape: f32[3,16,16], index: 10, kind: input, shape index: {}]
  %s11 = inlined_call_operand.hbm [shape: f32[2,2,16,16], index: 11, kind: output, shape index: {}]
  %s12 = sld [smem:[#allocation0]]
  $region121: #{tpu_custom_call.1} parent=0
    _
  %s14 = ssub.s32 1, %s12
  %s15 = scalar_select 0, %s14, %s12
  $region1: #{tpu_custom_call.1} parent=0
    #allocation2 [shape = 'u8[65536]{0}', space=vmem, size = 0x10000, scoped, tag = 'input window, operand 0']
    #allocation3 [shape = 's32[2]{0}', space=sflag, size = 0x8, scoped, tag = 'scoped memory for tpu_custom_call.1']
    #allocation4 [shape = 's32[2]{0}', space=sflag, size = 0x8, scoped, tag = 'scoped memory for tpu_custom_call.1']
    #allocation5 [shape = 'u8[65536]{0}', space=vmem, size = 0x10000, scoped, tag = 'input window, operand 1']
    #allocation6 [shape = 's32[2]{0}', space=sflag, size = 0x8, scoped, tag = 'scoped memory for tpu_custom_call.1']
    #allocation7 [shape = 'u8[65536]{0}', space=vmem, size = 0x10000, scoped, tag = 'input window, operand 2']
    #allocation8 [shape = 'u8[65536]{0}', space=vmem, size = 0x10000, scoped, tag = 'input window, operand 3']
    #allocation9 [shape = 's32[2]{0}', space=sflag, size = 0x8, scoped, tag = 'scoped memory for tpu_custom_call.1']
    #allocation10 [shape = 'u8[65536]{0}', space=vmem, size = 0x10000, scoped, tag = 'input window, operand 4']
    #allocation11 [shape = 'u8[65536]{0}', space=vmem, size = 0x10000, scoped, tag = 'input window, operand 5']
    #allocation12 [shape = 's32[2]{0}', space=sflag, size = 0x8, scoped, tag = 'scoped memory for tpu_custom_call.1']
    #allocation13 [shape = 'u8[16384]{0}', space=vmem, size = 0x4000, scoped, tag = 'input window, operand 6']
    #allocation14 [shape = 'u8[24576]{0}', space=vmem, size = 0x6000, scoped, tag = 'input window, operand 7, single buffered']
    #allocation15 [shape = 's32[1]{0}', space=sflag, size = 0x4, scoped, tag = 'scoped memory for tpu_custom_call.1']
    #allocation16 [shape = 'u8[24576]{0}', space=vmem, size = 0x6000, scoped, tag = 'input window, operand 8, single buffered']
    #allocation17 [shape = 'u8[24576]{0}', space=vmem, size = 0x6000, scoped, tag = 'input window, operand 9, single buffered']
    #allocation18 [shape = 's32[1]{0}', space=sflag, size = 0x4, scoped, tag = 'scoped memory for tpu_custom_call.1']
    #allocation19 [shape = 'u8[24576]{0}', space=vmem, size = 0x6000, scoped, tag = 'input window, operand 10, single buffered']
    #allocation20 [shape = 'u8[32768]{0}', space=vmem, size = 0x8000, scoped, tag = 'output window, operand 0']
    %16 = vsyncpa [#allocation3], 0
    %s17 = scalar_lea.sflag [#allocation3], 1
    %18 = vsyncpa %s17, 0
    %19 = vsyncpa [#allocation6], 0
    %s20 = scalar_lea.sflag [#allocation6], 1
    %21 = vsyncpa %s20, 0
    %22 = vsyncpa [#allocation9], 0
    %s23 = scalar_lea.sflag [#allocation9], 1
    %24 = vsyncpa %s23, 0
    %25 = vsyncpa [#allocation12], 0
    %s26 = scalar_lea.sflag [#allocation12], 1
    %27 = vsyncpa %s26, 0
    %28 = vsyncpa [#allocation15], 0
    %29 = vsyncpa [#allocation18], 0
    %30 = vsyncpa [#allocation4], 0
    %s31 = scalar_lea.sflag [#allocation4], 1
    %32 = vsyncpa %s31, 0
    loop: start=0, step=1, limit=4
    $region2: #{tpu_custom_call.1} parent=1 // loop_pre_header
      _
    $region3: #{tpu_custom_call.1} parent=1 // loop_header
      %s34 = sphi 0, %s38
      %p35 = scmp.ge.s32.totalorder %s34, 4
      %s44 = sphi 0, %s46
      %s47 = sphi 0, %s44
      %s48 = sphi 0, %s47
      %s64 = sphi 0, %s48
      %s70 = sphi 0, %s72
      %s73 = sphi 0, %s70
      %s74 = sphi 0, %s73
      %s90 = sphi 0, %s74
      %s96 = sphi 0, %s98
      %s99 = sphi 0, %s96
      %s100 = sphi 0, %s99
      %s116 = sphi 0, %s100
      %s122 = sphi 0, %s124
      %s125 = sphi 0, %s122
      %s126 = sphi 0, %s125
      %s142 = sphi 0, %s126
      %s148 = sphi 0, %s150
      %s151 = sphi 0, %s148
      %s152 = sphi 0, %s151
      %s168 = sphi 0, %s152
      %s174 = sphi 0, %s176
      %s177 = sphi 0, %s174
      %s178 = sphi 0, %s177
      %s194 = sphi 0, %s178
      %s200 = sphi 0, %s202
      %s203 = sphi 0, %s200
      %s204 = sphi 0, %s203
      %s220 = sphi 0, %s204
      %s224 = sphi 0, %s224
      %s226 = sphi 0, %s224
      %s227 = sphi 0, %s226
      %s241 = sphi 0, %s227
      %s245 = sphi 0, %s245
      %s247 = sphi 0, %s245
      %s248 = sphi 0, %s247
      %s262 = sphi 0, %s248
      %s266 = sphi 0, %s266
      %s268 = sphi 0, %s266
      %s269 = sphi 0, %s268
      %s283 = sphi 0, %s269
      %s287 = sphi 0, %s287
      %s289 = sphi 0, %s287
      %s290 = sphi 0, %s289
      %s304 = sphi 0, %s290
      %s310 = sphi 0, %s312
      %s313 = sphi 0, %s310
      %s314 = sphi 0, %s313
      %s330 = sphi 0, %s314
    $region4: #{tpu_custom_call.1} parent=1 // loop_header_branch
      %37 = sbr.rel (%p35) target = $region8
    $region5: #{tpu_custom_call.1} parent=1 // loop_body
      %s39 = ssub.s32 %s34, 1
      %s40 = ssub.s32 %s34, 2
      %s41 = sadd.s32 %s34, 1
      %s42 = ssub.s32 %s34, %s41
      %p43 = scmp.eq.s32.totalorder %s42, 0
      %s45 = sadd.s32 %s44, 1
      %s46 = scalar_select %p43, %s44, %s45
      %p49 = pneg %p43
      %p50 = scmp.eq.s32.totalorder %s34, 1
      %p51 = por %p49, %p50
      %p52 = scmp.ne.s32.totalorder %s44, %s47
      %p53 = scmp.eq.s32.totalorder %s34, 0
      %p54 = por %p52, %p53
      %p55 = scmp.ne.s32.totalorder %s44, %s47
      %p56 = scmp.eq.s32.totalorder %s39, 1
      %p57 = por %p55, %p56
      %p58 = scmp.ne.s32.totalorder %s47, %s48
      %p59 = scmp.eq.s32.totalorder %s39, 0
      %p60 = por %p58, %p59
      %p61 = scmp.ne.s32.totalorder %s47, %s48
      %p62 = scmp.eq.s32.totalorder %s40, 1
      %p63 = por %p61, %p62
      %p65 = scmp.ne.s32.totalorder %s48, %s64
      %p66 = scmp.eq.s32.totalorder %s40, 0
      %p67 = por %p65, %p66
      %s68 = ssub.s32 %s34, %s41
      %p69 = scmp.eq.s32.totalorder %s68, 0
      %s71 = sadd.s32 %s70, 1
      %s72 = scalar_select %p69, %s70, %s71
      %p75 = pneg %p69
      %p76 = scmp.eq.s32.totalorder %s34, 1
      %p77 = por %p75, %p76
      %p78 = scmp.ne.s32.totalorder %s70, %s73
      %p79 = scmp.eq.s32.totalorder %s34, 0
      %p80 = por %p78, %p79
      %p81 = scmp.ne.s32.totalorder %s70, %s73
      %p82 = scmp.eq.s32.totalorder %s39, 1
      %p83 = por %p81, %p82
      %p84 = scmp.ne.s32.totalorder %s73, %s74
      %p85 = scmp.eq.s32.totalorder %s39, 0
      %p86 = por %p84, %p85
      %p87 = scmp.ne.s32.totalorder %s73, %s74
      %p88 = scmp.eq.s32.totalorder %s40, 1
      %p89 = por %p87, %p88
      %p91 = scmp.ne.s32.totalorder %s74, %s90
      %p92 = scmp.eq.s32.totalorder %s40, 0
      %p93 = por %p91, %p92
      %s94 = ssub.s32 %s34, %s41
      %p95 = scmp.eq.s32.totalorder %s94, 0
      %s97 = sadd.s32 %s96, 1
      %s98 = scalar_select %p95, %s96, %s97
      %p101 = pneg %p95
      %p102 = scmp.eq.s32.totalorder %s34, 1
      %p103 = por %p101, %p102
      %p104 = scmp.ne.s32.totalorder %s96, %s99
      %p105 = scmp.eq.s32.totalorder %s34, 0
      %p106 = por %p104, %p105
      %p107 = scmp.ne.s32.totalorder %s96, %s99
      %p108 = scmp.eq.s32.totalorder %s39, 1
      %p109 = por %p107, %p108
      %p110 = scmp.ne.s32.totalorder %s99, %s100
      %p111 = scmp.eq.s32.totalorder %s39, 0
      %p112 = por %p110, %p111
      %p113 = scmp.ne.s32.totalorder %s99, %s100
      %p114 = scmp.eq.s32.totalorder %s40, 1
      %p115 = por %p113, %p114
      %p117 = scmp.ne.s32.totalorder %s100, %s116
      %p118 = scmp.eq.s32.totalorder %s40, 0
      %p119 = por %p117, %p118
      %s120 = ssub.s32 %s34, %s41
      %p121 = scmp.eq.s32.totalorder %s120, 0
      %s123 = sadd.s32 %s122, 1
      %s124 = scalar_select %p121, %s122, %s123
      %p127 = pneg %p121
      %p128 = scmp.eq.s32.totalorder %s34, 1
      %p129 = por %p127, %p128
      %p130 = scmp.ne.s32.totalorder %s122, %s125
      %p131 = scmp.eq.s32.totalorder %s34, 0
      %p132 = por %p130, %p131
      %p133 = scmp.ne.s32.totalorder %s122, %s125
      %p134 = scmp.eq.s32.totalorder %s39, 1
      %p135 = por %p133, %p134
      %p136 = scmp.ne.s32.totalorder %s125, %s126
      %p137 = scmp.eq.s32.totalorder %s39, 0
      %p138 = por %p136, %p137
      %p139 = scmp.ne.s32.totalorder %s125, %s126
      %p140 = scmp.eq.s32.totalorder %s40, 1
      %p141 = por %p139, %p140
      %p143 = scmp.ne.s32.totalorder %s126, %s142
      %p144 = scmp.eq.s32.totalorder %s40, 0
      %p145 = por %p143, %p144
      %s146 = ssub.s32 %s34, %s41
      %p147 = scmp.eq.s32.totalorder %s146, 0
      %s149 = sadd.s32 %s148, 1
      %s150 = scalar_select %p147, %s148, %s149
      %p153 = pneg %p147
      %p154 = scmp.eq.s32.totalorder %s34, 1
      %p155 = por %p153, %p154
      %p156 = scmp.ne.s32.totalorder %s148, %s151
      %p157 = scmp.eq.s32.totalorder %s34, 0
      %p158 = por %p156, %p157
      %p159 = scmp.ne.s32.totalorder %s148, %s151
      %p160 = scmp.eq.s32.totalorder %s39, 1
      %p161 = por %p159, %p160
      %p162 = scmp.ne.s32.totalorder %s151, %s152
      %p163 = scmp.eq.s32.totalorder %s39, 0
      %p164 = por %p162, %p163
      %p165 = scmp.ne.s32.totalorder %s151, %s152
      %p166 = scmp.eq.s32.totalorder %s40, 1
      %p167 = por %p165, %p166
      %p169 = scmp.ne.s32.totalorder %s152, %s168
      %p170 = scmp.eq.s32.totalorder %s40, 0
      %p171 = por %p169, %p170
      %s172 = ssub.s32 %s34, %s41
      %p173 = scmp.eq.s32.totalorder %s172, 0
      %s175 = sadd.s32 %s174, 1
      %s176 = scalar_select %p173, %s174, %s175
      %p179 = pneg %p173
      %p180 = scmp.eq.s32.totalorder %s34, 1
      %p181 = por %p179, %p180
      %p182 = scmp.ne.s32.totalorder %s174, %s177
      %p183 = scmp.eq.s32.totalorder %s34, 0
      %p184 = por %p182, %p183
      %p185 = scmp.ne.s32.totalorder %s174, %s177
      %p186 = scmp.eq.s32.totalorder %s39, 1
      %p187 = por %p185, %p186
      %p188 = scmp.ne.s32.totalorder %s177, %s178
      %p189 = scmp.eq.s32.totalorder %s39, 0
      %p190 = por %p188, %p189
      %p191 = scmp.ne.s32.totalorder %s177, %s178
      %p192 = scmp.eq.s32.totalorder %s40, 1
      %p193 = por %p191, %p192
      %p195 = scmp.ne.s32.totalorder %s178, %s194
      %p196 = scmp.eq.s32.totalorder %s40, 0
      %p197 = por %p195, %p196
      %s198 = ssub.s32 %s34, %s41
      %p199 = scmp.eq.s32.totalorder %s198, 0
      %s201 = sadd.s32 %s200, 1
      %s202 = scalar_select %p199, %s200, %s201
      %p205 = pneg %p199
      %p206 = scmp.eq.s32.totalorder %s34, 1
      %p207 = por %p205, %p206
      %p208 = scmp.ne.s32.totalorder %s200, %s203
      %p209 = scmp.eq.s32.totalorder %s34, 0
      %p210 = por %p208, %p209
      %p211 = scmp.ne.s32.totalorder %s200, %s203
      %p212 = scmp.eq.s32.totalorder %s39, 1
      %p213 = por %p211, %p212
      %p214 = scmp.ne.s32.totalorder %s203, %s204
      %p215 = scmp.eq.s32.totalorder %s39, 0
      %p216 = por %p214, %p215
      %p217 = scmp.ne.s32.totalorder %s203, %s204
      %p218 = scmp.eq.s32.totalorder %s40, 1
      %p219 = por %p217, %p218
      %p221 = scmp.ne.s32.totalorder %s204, %s220
      %p222 = scmp.eq.s32.totalorder %s40, 0
      %p223 = por %p221, %p222
      %s225 = sadd.s32 %s224, 1
      %p228 = scmp.eq.s32.totalorder %s34, 1
      %p229 = scmp.ne.s32.totalorder %s224, %s226
      %p230 = scmp.eq.s32.totalorder %s34, 0
      %p231 = por %p229, %p230
      %p232 = scmp.ne.s32.totalorder %s224, %s226
      %p233 = scmp.eq.s32.totalorder %s39, 1
      %p234 = por %p232, %p233
      %p235 = scmp.ne.s32.totalorder %s226, %s227
      %p236 = scmp.eq.s32.totalorder %s39, 0
      %p237 = por %p235, %p236
      %p238 = scmp.ne.s32.totalorder %s226, %s227
      %p239 = scmp.eq.s32.totalorder %s40, 1
      %p240 = por %p238, %p239
      %p242 = scmp.ne.s32.totalorder %s227, %s241
      %p243 = scmp.eq.s32.totalorder %s40, 0
      %p244 = por %p242, %p243
      %s246 = sadd.s32 %s245, 1
      %p249 = scmp.eq.s32.totalorder %s34, 1
      %p250 = scmp.ne.s32.totalorder %s245, %s247
      %p251 = scmp.eq.s32.totalorder %s34, 0
      %p252 = por %p250, %p251
      %p253 = scmp.ne.s32.totalorder %s245, %s247
      %p254 = scmp.eq.s32.totalorder %s39, 1
      %p255 = por %p253, %p254
      %p256 = scmp.ne.s32.totalorder %s247, %s248
      %p257 = scmp.eq.s32.totalorder %s39, 0
      %p258 = por %p256, %p257
      %p259 = scmp.ne.s32.totalorder %s247, %s248
      %p260 = scmp.eq.s32.totalorder %s40, 1
      %p261 = por %p259, %p260
      %p263 = scmp.ne.s32.totalorder %s248, %s262
      %p264 = scmp.eq.s32.totalorder %s40, 0
      %p265 = por %p263, %p264
      %s267 = sadd.s32 %s266, 1
      %p270 = scmp.eq.s32.totalorder %s34, 1
      %p271 = scmp.ne.s32.totalorder %s266, %s268
      %p272 = scmp.eq.s32.totalorder %s34, 0
      %p273 = por %p271, %p272
      %p274 = scmp.ne.s32.totalorder %s266, %s268
      %p275 = scmp.eq.s32.totalorder %s39, 1
      %p276 = por %p274, %p275
      %p277 = scmp.ne.s32.totalorder %s268, %s269
      %p278 = scmp.eq.s32.totalorder %s39, 0
      %p279 = por %p277, %p278
      %p280 = scmp.ne.s32.totalorder %s268, %s269
      %p281 = scmp.eq.s32.totalorder %s40, 1
      %p282 = por %p280, %p281
      %p284 = scmp.ne.s32.totalorder %s269, %s283
      %p285 = scmp.eq.s32.totalorder %s40, 0
      %p286 = por %p284, %p285
      %s288 = sadd.s32 %s287, 1
      %p291 = scmp.eq.s32.totalorder %s34, 1
      %p292 = scmp.ne.s32.totalorder %s287, %s289
      %p293 = scmp.eq.s32.totalorder %s34, 0
      %p294 = por %p292, %p293
      %p295 = scmp.ne.s32.totalorder %s287, %s289
      %p296 = scmp.eq.s32.totalorder %s39, 1
      %p297 = por %p295, %p296
      %p298 = scmp.ne.s32.totalorder %s289, %s290
      %p299 = scmp.eq.s32.totalorder %s39, 0
      %p300 = por %p298, %p299
      %p301 = scmp.ne.s32.totalorder %s289, %s290
      %p302 = scmp.eq.s32.totalorder %s40, 1
      %p303 = por %p301, %p302
      %p305 = scmp.ne.s32.totalorder %s290, %s304
      %p306 = scmp.eq.s32.totalorder %s40, 0
      %p307 = por %p305, %p306
      %s308 = ssub.s32 %s34, %s41
      %p309 = scmp.eq.s32.totalorder %s308, 0
      %s311 = sadd.s32 %s310, 1
      %s312 = scalar_select %p309, %s310, %s311
      %p315 = pneg %p309
      %p316 = scmp.eq.s32.totalorder %s34, 1
      %p317 = por %p315, %p316
      %p318 = scmp.ne.s32.totalorder %s310, %s313
      %p319 = scmp.eq.s32.totalorder %s34, 0
      %p320 = por %p318, %p319
      %p321 = scmp.ne.s32.totalorder %s310, %s313
      %p322 = scmp.eq.s32.totalorder %s39, 1
      %p323 = por %p321, %p322
      %p324 = scmp.ne.s32.totalorder %s313, %s314
      %p325 = scmp.eq.s32.totalorder %s39, 0
      %p326 = por %p324, %p325
      %p327 = scmp.ne.s32.totalorder %s313, %s314
      %p328 = scmp.eq.s32.totalorder %s40, 1
      %p329 = por %p327, %p328
      %p331 = scmp.ne.s32.totalorder %s314, %s330
      %p332 = scmp.eq.s32.totalorder %s40, 0
      %p333 = por %p331, %p332
      %p334 = scmp.le.s32.totalorder 1, %s34
      %p335 = scmp.lt.s32.totalorder %s34, 3
      %p336 = pnand %p334, %p335
      %p337 = pneg %p336
      // Predicated region
      $region9: #{tpu_custom_call.1} parent=5 // pred_check
        _
      $region10: #{tpu_custom_call.1} parent=5 // pred_check_branch
        %339 = sbr.rel (%p336) target = $region12
      $region11: #{tpu_custom_call.1} parent=5 // pred_region
        %s340 = ssub.s32 %s34, 1
        // Predicated region
        $region13: #{tpu_custom_call.1} parent=11 // pred_check
          %p341 = pneg %p237
        $region14: #{tpu_custom_call.1} parent=11 // pred_check_branch
          %343 = sbr.rel (%p341) target = $region16
        $region15: #{tpu_custom_call.1} parent=11 // pred_region
          %s345 = ssub.s32 768, 768
          %346 = vsyncadd [#allocation15], %s345
          %s347 = sshll.u32 [#allocation14], 4
          %s348 = int_to_ptr.vmem [resolvable:$true] %s347
          %353 = dma.hbm_to_vmem [thread:$0]  %s7, 768, %s348, [#allocation15], 128, 128, 8
        $region16: #{tpu_custom_call.1} parent=11 // pred_fallthru
          _
        // Predicated region
        $region17: #{tpu_custom_call.1} parent=11 // pred_check
          %p354 = pneg %p258
        $region18: #{tpu_custom_call.1} parent=11 // pred_check_branch
          %356 = sbr.rel (%p354) target = $region20
        $region19: #{tpu_custom_call.1} parent=11 // pred_region
          %s358 = ssub.s32 768, 768
          %359 = vsyncadd [#allocation15], %s358
          %s360 = sshll.u32 [#allocation16], 4
          %s361 = int_to_ptr.vmem [resolvable:$true] %s360
          %366 = dma.hbm_to_vmem [thread:$0]  %s8, 768, %s361, [#allocation15], 128, 128, 8
        $region20: #{tpu_custom_call.1} parent=11 // pred_fallthru
          _
        // Predicated region
        $region21: #{tpu_custom_call.1} parent=11 // pred_check
          %p367 = pneg %p279
        $region22: #{tpu_custom_call.1} parent=11 // pred_check_branch
          %369 = sbr.rel (%p367) target = $region24
        $region23: #{tpu_custom_call.1} parent=11 // pred_region
          %s371 = ssub.s32 768, 768
          %372 = vsyncadd [#allocation18], %s371
          %s373 = sshll.u32 [#allocation17], 4
          %s374 = int_to_ptr.vmem [resolvable:$true] %s373
          %379 = dma.hbm_to_vmem [thread:$0]  %s9, 768, %s374, [#allocation18], 128, 128, 8
        $region24: #{tpu_custom_call.1} parent=11 // pred_fallthru
          _
        // Predicated region
        $region25: #{tpu_custom_call.1} parent=11 // pred_check
          %p380 = pneg %p300
        $region26: #{tpu_custom_call.1} parent=11 // pred_check_branch
          %382 = sbr.rel (%p380) target = $region28
        $region27: #{tpu_custom_call.1} parent=11 // pred_region
          %s384 = ssub.s32 768, 768
          %385 = vsyncadd [#allocation18], %s384
          %s386 = sshll.u32 [#allocation19], 4
          %s387 = int_to_ptr.vmem [resolvable:$true] %s386
          %392 = dma.hbm_to_vmem [thread:$0]  %s10, 768, %s387, [#allocation18], 128, 128, 8
        $region28: #{tpu_custom_call.1} parent=11 // pred_fallthru
          _
      $region12: #{tpu_custom_call.1} parent=5 // pred_fallthru
        _
      %p393 = scmp.lt.s32.totalorder %s34, 2
      // Predicated region
      $region29: #{tpu_custom_call.1} parent=5 // pred_check
        %p394 = pneg %p393
      $region30: #{tpu_custom_call.1} parent=5 // pred_check_branch
        %396 = sbr.rel (%p394) target = $region32
      $region31: #{tpu_custom_call.1} parent=5 // pred_region
        // Predicated region
        $region33: #{tpu_custom_call.1} parent=31 // pred_check
          %p397 = pneg %p54
        $region34: #{tpu_custom_call.1} parent=31 // pred_check_branch
          %399 = sbr.rel (%p397) target = $region36
        $region35: #{tpu_custom_call.1} parent=31 // pred_region
          %s400 = sand.u32 %s44, 1
          %s401 = scalar_lea.sflag [#allocation3], %s400
          %s402 = sand.u32 %s44, 1
          %s403 = smul.addr %s402, 64
          %s404 = scalar_lea.vmem [#allocation2], %s403
          %s406 = ssub.s32 1024, 1024
          %407 = vsyncadd %s401, %s406
          %s408 = smul.addr %s34, 8
          %s409 = smul.addr %s408, 128
          %s410 = scalar_lea.hbm %s0, %s409
          %s411 = sshll.u32 %s404, 4
          %s412 = int_to_ptr.vmem [resolvable:$true] %s411
          %417 = dma.hbm_to_vmem [thread:$0]  %s410, 1024, %s412, %s401, 128, 128, 8
        $region36: #{tpu_custom_call.1} parent=31 // pred_fallthru
          _
        // Predicated region
        $region37: #{tpu_custom_call.1} parent=31 // pred_check
          %p418 = pneg %p80
        $region38: #{tpu_custom_call.1} parent=31 // pred_check_branch
          %420 = sbr.rel (%p418) target = $region40
        $region39: #{tpu_custom_call.1} parent=31 // pred_region
          %s421 = sand.u32 %s34, 1
          %s422 = scalar_lea.sflag [#allocation6], %s421
          %s423 = sand.u32 %s70, 1
          %s424 = smul.addr %s423, 64
          %s425 = scalar_lea.vmem [#allocation5], %s424
          %s427 = ssub.s32 1024, 1024
          %428 = vsyncadd %s422, %s427
          %s429 = smul.addr %s34, 8
          %s430 = smul.addr %s429, 128
          %s431 = scalar_lea.hbm %s1, %s430
          %s432 = sshll.u32 %s425, 4
          %s433 = int_to_ptr.vmem [resolvable:$true] %s432
          %438 = dma.hbm_to_vmem [thread:$0]  %s431, 1024, %s433, %s422, 128, 128, 8
        $region40: #{tpu_custom_call.1} parent=31 // pred_fallthru
          _
        // Predicated region
        $region41: #{tpu_custom_call.1} parent=31 // pred_check
          %p439 = pneg %p106
        $region42: #{tpu_custom_call.1} parent=31 // pred_check_branch
          %441 = sbr.rel (%p439) target = $region44
        $region43: #{tpu_custom_call.1} parent=31 // pred_region
          %s442 = sand.u32 %s34, 1
          %s443 = scalar_lea.sflag [#allocation6], %s442
          %s444 = sand.u32 %s96, 1
          %s445 = smul.addr %s444, 64
          %s446 = scalar_lea.vmem [#allocation7], %s445
          %s448 = ssub.s32 1024, 1024
          %449 = vsyncadd %s443, %s448
          %s450 = smul.addr %s34, 8
          %s451 = smul.addr %s450, 128
          %s452 = scalar_lea.hbm %s2, %s451
          %s453 = sshll.u32 %s446, 4
          %s454 = int_to_ptr.vmem [resolvable:$true] %s453
          %459 = dma.hbm_to_vmem [thread:$0]  %s452, 1024, %s454, %s443, 128, 128, 8
        $region44: #{tpu_custom_call.1} parent=31 // pred_fallthru
          _
        // Predicated region
        $region45: #{tpu_custom_call.1} parent=31 // pred_check
          %p460 = pneg %p132
        $region46: #{tpu_custom_call.1} parent=31 // pred_check_branch
          %462 = sbr.rel (%p460) target = $region48
        $region47: #{tpu_custom_call.1} parent=31 // pred_region
          %s463 = sand.u32 %s34, 1
          %s464 = scalar_lea.sflag [#allocation9], %s463
          %s465 = sand.u32 %s122, 1
          %s466 = smul.addr %s465, 64
          %s467 = scalar_lea.vmem [#allocation8], %s466
          %s469 = ssub.s32 1024, 1024
          %470 = vsyncadd %s464, %s469
          %s471 = smul.addr %s34, 8
          %s472 = smul.addr %s471, 128
          %s473 = scalar_lea.hbm %s3, %s472
          %s474 = sshll.u32 %s467, 4
          %s475 = int_to_ptr.vmem [resolvable:$true] %s474
          %480 = dma.hbm_to_vmem [thread:$0]  %s473, 1024, %s475, %s464, 128, 128, 8
        $region48: #{tpu_custom_call.1} parent=31 // pred_fallthru
          _
        // Predicated region
        $region49: #{tpu_custom_call.1} parent=31 // pred_check
          %p481 = pneg %p158
        $region50: #{tpu_custom_call.1} parent=31 // pred_check_branch
          %483 = sbr.rel (%p481) target = $region52
        $region51: #{tpu_custom_call.1} parent=31 // pred_region
          %s484 = sand.u32 %s34, 1
          %s485 = scalar_lea.sflag [#allocation9], %s484
          %s486 = sand.u32 %s148, 1
          %s487 = smul.addr %s486, 64
          %s488 = scalar_lea.vmem [#allocation10], %s487
          %s490 = ssub.s32 1024, 1024
          %491 = vsyncadd %s485, %s490
          %s492 = smul.addr %s34, 8
          %s493 = smul.addr %s492, 128
          %s494 = scalar_lea.hbm %s4, %s493
          %s495 = sshll.u32 %s488, 4
          %s496 = int_to_ptr.vmem [resolvable:$true] %s495
          %501 = dma.hbm_to_vmem [thread:$0]  %s494, 1024, %s496, %s485, 128, 128, 8
        $region52: #{tpu_custom_call.1} parent=31 // pred_fallthru
          _
        // Predicated region
        $region53: #{tpu_custom_call.1} parent=31 // pred_check
          %p502 = pneg %p184
        $region54: #{tpu_custom_call.1} parent=31 // pred_check_branch
          %504 = sbr.rel (%p502) target = $region56
        $region55: #{tpu_custom_call.1} parent=31 // pred_region
          %s505 = sand.u32 %s34, 1
          %s506 = scalar_lea.sflag [#allocation12], %s505
          %s507 = sand.u32 %s174, 1
          %s508 = smul.addr %s507, 64
          %s509 = scalar_lea.vmem [#allocation11], %s508
          %s511 = ssub.s32 1024, 1024
          %512 = vsyncadd %s506, %s511
          %s513 = smul.addr %s34, 8
          %s514 = smul.addr %s513, 128
          %s515 = scalar_lea.hbm %s5, %s514
          %s516 = sshll.u32 %s509, 4
          %s517 = int_to_ptr.vmem [resolvable:$true] %s516
          %522 = dma.hbm_to_vmem [thread:$0]  %s515, 1024, %s517, %s506, 128, 128, 8
        $region56: #{tpu_custom_call.1} parent=31 // pred_fallthru
          _
        // Predicated region
        $region57: #{tpu_custom_call.1} parent=31 // pred_check
          %p523 = pneg %p210
        $region58: #{tpu_custom_call.1} parent=31 // pred_check_branch
          %525 = sbr.rel (%p523) target = $region60
        $region59: #{tpu_custom_call.1} parent=31 // pred_region
          %s526 = sand.u32 %s34, 1
          %s527 = scalar_lea.sflag [#allocation12], %s526
          %s528 = sand.u32 %s200, 1
          %s529 = smul.addr %s528, 16
          %s530 = scalar_lea.vmem [#allocation13], %s529
          %s532 = ssub.s32 256, 256
          %533 = vsyncadd %s527, %s532
          %s534 = smul.addr %s34, 2
          %s535 = smul.addr %s534, 128
          %s536 = scalar_lea.hbm %s6, %s535
          %s537 = sshll.u32 %s530, 4
          %s538 = int_to_ptr.vmem [resolvable:$true] %s537
          %543 = dma.hbm_to_vmem [thread:$0]  %s536, 256, %s538, %s527, 128, 128, 8
        $region60: #{tpu_custom_call.1} parent=31 // pred_fallthru
          _
      $region32: #{tpu_custom_call.1} parent=5 // pred_fallthru
        _
      %p544 = scmp.le.s32.totalorder 1, %s34
      %p545 = scmp.lt.s32.totalorder %s34, 3
      %p546 = pnand %p544, %p545
      %p547 = pneg %p546
      // Predicated region
      $region61: #{tpu_custom_call.1} parent=5 // pred_check
        _
      $region62: #{tpu_custom_call.1} parent=5 // pred_check_branch
        %549 = sbr.rel (%p546) target = $region64
      $region63: #{tpu_custom_call.1} parent=5 // pred_region
        %s550 = ssub.s32 %s34, 1
        %s551 = sand.u32 %s47, 1
        %s552 = scalar_lea.sflag [#allocation3], %s551
        %s553 = sand.u32 %s47, 1
        %s554 = smul.addr %s553, 64
        %s555 = scalar_lea.vmem [#allocation2], %s554
        // Predicated region
        $region65: #{tpu_custom_call.1} parent=63 // pred_check
          %p556 = pneg %p60
        $region66: #{tpu_custom_call.1} parent=63 // pred_check_branch
          %558 = sbr.rel (%p556) target = $region68
        $region67: #{tpu_custom_call.1} parent=63 // pred_region
          %559 = dma.done %s552, 1024
        $region68: #{tpu_custom_call.1} parent=63 // pred_fallthru
          _
        %s560 = sand.u32 %s39, 1
        %s561 = scalar_lea.sflag [#allocation6], %s560
        %s562 = sand.u32 %s73, 1
        %s563 = smul.addr %s562, 64
        %s564 = scalar_lea.vmem [#allocation5], %s563
        // Predicated region
        $region69: #{tpu_custom_call.1} parent=63 // pred_check
          %p565 = pneg %p86
        $region70: #{tpu_custom_call.1} parent=63 // pred_check_branch
          %567 = sbr.rel (%p565) target = $region72
        $region71: #{tpu_custom_call.1} parent=63 // pred_region
          %568 = dma.done %s561, 1024
        $region72: #{tpu_custom_call.1} parent=63 // pred_fallthru
          _
        %s569 = sand.u32 %s39, 1
        %s570 = scalar_lea.sflag [#allocation6], %s569
        %s571 = sand.u32 %s99, 1
        %s572 = smul.addr %s571, 64
        %s573 = scalar_lea.vmem [#allocation7], %s572
        // Predicated region
        $region73: #{tpu_custom_call.1} parent=63 // pred_check
          %p574 = pneg %p112
        $region74: #{tpu_custom_call.1} parent=63 // pred_check_branch
          %576 = sbr.rel (%p574) target = $region76
        $region75: #{tpu_custom_call.1} parent=63 // pred_region
          %577 = dma.done %s570, 1024
        $region76: #{tpu_custom_call.1} parent=63 // pred_fallthru
          _
        %s578 = sand.u32 %s39, 1
        %s579 = scalar_lea.sflag [#allocation9], %s578
        %s580 = sand.u32 %s125, 1
        %s581 = smul.addr %s580, 64
        %s582 = scalar_lea.vmem [#allocation8], %s581
        // Predicated region
        $region77: #{tpu_custom_call.1} parent=63 // pred_check
          %p583 = pneg %p138
        $region78: #{tpu_custom_call.1} parent=63 // pred_check_branch
          %585 = sbr.rel (%p583) target = $region80
        $region79: #{tpu_custom_call.1} parent=63 // pred_region
          %586 = dma.done %s579, 1024
        $region80: #{tpu_custom_call.1} parent=63 // pred_fallthru
          _
        %s587 = sand.u32 %s39, 1
        %s588 = scalar_lea.sflag [#allocation9], %s587
        %s589 = sand.u32 %s151, 1
        %s590 = smul.addr %s589, 64
        %s591 = scalar_lea.vmem [#allocation10], %s590
        // Predicated region
        $region81: #{tpu_custom_call.1} parent=63 // pred_check
          %p592 = pneg %p164
        $region82: #{tpu_custom_call.1} parent=63 // pred_check_branch
          %594 = sbr.rel (%p592) target = $region84
        $region83: #{tpu_custom_call.1} parent=63 // pred_region
          %595 = dma.done %s588, 1024
        $region84: #{tpu_custom_call.1} parent=63 // pred_fallthru
          _
        %s596 = sand.u32 %s39, 1
        %s597 = scalar_lea.sflag [#allocation12], %s596
        %s598 = sand.u32 %s177, 1
        %s599 = smul.addr %s598, 64
        %s600 = scalar_lea.vmem [#allocation11], %s599
        // Predicated region
        $region85: #{tpu_custom_call.1} parent=63 // pred_check
          %p601 = pneg %p190
        $region86: #{tpu_custom_call.1} parent=63 // pred_check_branch
          %603 = sbr.rel (%p601) target = $region88
        $region87: #{tpu_custom_call.1} parent=63 // pred_region
          %604 = dma.done %s597, 1024
        $region88: #{tpu_custom_call.1} parent=63 // pred_fallthru
          _
        %s605 = sand.u32 %s39, 1
        %s606 = scalar_lea.sflag [#allocation12], %s605
        %s607 = sand.u32 %s203, 1
        %s608 = smul.addr %s607, 16
        %s609 = scalar_lea.vmem [#allocation13], %s608
        // Predicated region
        $region89: #{tpu_custom_call.1} parent=63 // pred_check
          %p610 = pneg %p216
        $region90: #{tpu_custom_call.1} parent=63 // pred_check_branch
          %612 = sbr.rel (%p610) target = $region92
        $region91: #{tpu_custom_call.1} parent=63 // pred_region
          %613 = dma.done %s606, 256
        $region92: #{tpu_custom_call.1} parent=63 // pred_fallthru
          _
        // Predicated region
        $region93: #{tpu_custom_call.1} parent=63 // pred_check
          %p614 = pneg %p237
        $region94: #{tpu_custom_call.1} parent=63 // pred_check_branch
          %616 = sbr.rel (%p614) target = $region96
        $region95: #{tpu_custom_call.1} parent=63 // pred_region
          %617 = dma.done [#allocation15], 768
        $region96: #{tpu_custom_call.1} parent=63 // pred_fallthru
          _
        // Predicated region
        $region97: #{tpu_custom_call.1} parent=63 // pred_check
          %p618 = pneg %p258
        $region98: #{tpu_custom_call.1} parent=63 // pred_check_branch
          %620 = sbr.rel (%p618) target = $region100
        $region99: #{tpu_custom_call.1} parent=63 // pred_region
          %621 = dma.done [#allocation15], 768
        $region100: #{tpu_custom_call.1} parent=63 // pred_fallthru
          _
        // Predicated region
        $region101: #{tpu_custom_call.1} parent=63 // pred_check
          %p622 = pneg %p279
        $region102: #{tpu_custom_call.1} parent=63 // pred_check_branch
          %624 = sbr.rel (%p622) target = $region104
        $region103: #{tpu_custom_call.1} parent=63 // pred_region
          %625 = dma.done [#allocation18], 768
        $region104: #{tpu_custom_call.1} parent=63 // pred_fallthru
          _
        // Predicated region
        $region105: #{tpu_custom_call.1} parent=63 // pred_check
          %p626 = pneg %p300
        $region106: #{tpu_custom_call.1} parent=63 // pred_check_branch
          %628 = sbr.rel (%p626) target = $region108
        $region107: #{tpu_custom_call.1} parent=63 // pred_region
          %629 = dma.done [#allocation18], 768
        $region108: #{tpu_custom_call.1} parent=63 // pred_fallthru
          _
        %s630 = sand.u32 %s47, 1
        %s631 = scalar_lea.sflag [#allocation3], %s630
        %s632 = sand.u32 %s47, 1
        %s633 = smul.addr %s632, 64
        %s634 = scalar_lea.vmem [#allocation2], %s633
        %p635 = pneg %p60
        %p636 = pneg %p57
        %s637 = sand.u32 %s39, 1
        %s638 = scalar_lea.sflag [#allocation6], %s637
        %s639 = sand.u32 %s73, 1
        %s640 = smul.addr %s639, 64
        %s641 = scalar_lea.vmem [#allocation5], %s640
        %p642 = pneg %p86
        %p643 = pneg %p83
        %s644 = sand.u32 %s39, 1
        %s645 = scalar_lea.sflag [#allocation6], %s644
        %s646 = sand.u32 %s99, 1
        %s647 = smul.addr %s646, 64
        %s648 = scalar_lea.vmem [#allocation7], %s647
        %p649 = pneg %p112
        %p650 = pneg %p109
        %s651 = sand.u32 %s39, 1
        %s652 = scalar_lea.sflag [#allocation9], %s651
        %s653 = sand.u32 %s125, 1
        %s654 = smul.addr %s653, 64
        %s655 = scalar_lea.vmem [#allocation8], %s654
        %p656 = pneg %p138
        %p657 = pneg %p135
        %s658 = sand.u32 %s39, 1
        %s659 = scalar_lea.sflag [#allocation9], %s658
        %s660 = sand.u32 %s151, 1
        %s661 = smul.addr %s660, 64
        %s662 = scalar_lea.vmem [#allocation10], %s661
        %p663 = pneg %p164
        %p664 = pneg %p161
        %s665 = sand.u32 %s39, 1
        %s666 = scalar_lea.sflag [#allocation12], %s665
        %s667 = sand.u32 %s177, 1
        %s668 = smul.addr %s667, 64
        %s669 = scalar_lea.vmem [#allocation11], %s668
        %p670 = pneg %p190
        %p671 = pneg %p187
        %s672 = sand.u32 %s39, 1
        %s673 = scalar_lea.sflag [#allocation12], %s672
        %s674 = sand.u32 %s203, 1
        %s675 = smul.addr %s674, 16
        %s676 = scalar_lea.vmem [#allocation13], %s675
        %p677 = pneg %p216
        %p678 = pneg %p213
        %p679 = pneg %p237
        %p680 = pneg %p234
        %p681 = pneg %p258
        %p682 = pneg %p255
        %p683 = pneg %p279
        %p684 = pneg %p276
        %p685 = pneg %p300
        %p686 = pneg %p297
        %p687 = pneg %p326
        %p688 = pneg %p323
        %s689 = sand.u32 %s313, 1
        %s690 = scalar_lea.sflag [#allocation4], %s689
        %s691 = sand.u32 %s313, 1
        %s692 = smul.addr %s691, 32
        %s693 = scalar_lea.vmem [#allocation20], %s692
        %v694 = vld [vmem:[#allocation14] sm:$0xff]
        %v695 = vld [vmem:[#allocation14 + $0x8] sm:$0xff]
        %s696 = scalar_lea.vmem [#allocation14], 16
        %v697 = vld [vmem:[%s696] sm:$0xff]
        %v698 = vld [vmem:[%s696 + $0x8] sm:$0xff]
        %s699 = scalar_lea.vmem [#allocation14], 32
        %v700 = vld [vmem:[%s699] sm:$0xff]
        %v701 = vld [vmem:[%s699 + $0x8] sm:$0xff]
        %v702 = vld [vmem:[#allocation16] sm:$0xff]
        %v703 = vld [vmem:[#allocation16 + $0x8] sm:$0xff]
        %s704 = scalar_lea.vmem [#allocation16], 16
        %v705 = vld [vmem:[%s704] sm:$0xff]
        %v706 = vld [vmem:[%s704 + $0x8] sm:$0xff]
        %s707 = scalar_lea.vmem [#allocation16], 32
        %v708 = vld [vmem:[%s707] sm:$0xff]
        %v709 = vld [vmem:[%s707 + $0x8] sm:$0xff]
        %v710 = vld [vmem:[#allocation17] sm:$0xff]
        %v711 = vld [vmem:[#allocation17 + $0x8] sm:$0xff]
        %s712 = scalar_lea.vmem [#allocation17], 16
        %v713 = vld [vmem:[%s712] sm:$0xff]
        %v714 = vld [vmem:[%s712 + $0x8] sm:$0xff]
        %s715 = scalar_lea.vmem [#allocation17], 32
        %v716 = vld [vmem:[%s715] sm:$0xff]
        %v717 = vld [vmem:[%s715 + $0x8] sm:$0xff]
        %v718 = vld [vmem:[#allocation19] sm:$0xff]
        %v719 = vld [vmem:[#allocation19 + $0x8] sm:$0xff]
        %s720 = scalar_lea.vmem [#allocation19], 16
        %v721 = vld [vmem:[%s720] sm:$0xff]
        %v722 = vld [vmem:[%s720 + $0x8] sm:$0xff]
        %s723 = scalar_lea.vmem [#allocation19], 32
        %v724 = vld [vmem:[%s723] sm:$0xff]
        %v725 = vld [vmem:[%s723 + $0x8] sm:$0xff]
        %v726 = vld [vmem:[%s609] sm:$0xff]
        %v727 = vld [vmem:[%s609 + $0x8] sm:$0xff]
        %v728 = vld [vmem:[%s555] sm:$0xff]
        %v729 = vld [vmem:[%s555 + $0x8] sm:$0xff]
        %v730 = vld [vmem:[%s564] sm:$0xff]
        %v731 = vld [vmem:[%s564 + $0x8] sm:$0xff]
        %v732 = vld [vmem:[%s591] sm:$0xff]
        %v733 = vld [vmem:[%s591 + $0x8] sm:$0xff]
        %v734 = vld [vmem:[%s600] sm:$0xff]
        %v735 = vld [vmem:[%s600 + $0x8] sm:$0xff]
        %v736 = vmul.f32 %v728, %v732
        %v737 = vmul.f32 %v729, %v733
        %v738 = vmul.f32 %v730, %v734
        %v739 = vmul.f32 %v731, %v735
        %v740 = vsub.f32 %v736, %v738
        %v741 = vsub.f32 %v737, %v739
        %v742 = vmul.f32 %v728, %v734
        %v743 = vmul.f32 %v729, %v735
        %v744 = vmul.f32 %v730, %v732
        %v745 = vmul.f32 %v731, %v733
        %v746 = vadd.f32 %v742, %v744
        %v747 = vadd.f32 %v743, %v745
        %s748 = scalar_lea.vmem %s555, 16 [#allocation2]
        %v749 = vld [vmem:[%s748] sm:$0xff]
        %v750 = vld [vmem:[%s748 + $0x8] sm:$0xff]
        %s751 = scalar_lea.vmem %s564, 16 [#allocation5]
        %v752 = vld [vmem:[%s751] sm:$0xff]
        %v753 = vld [vmem:[%s751 + $0x8] sm:$0xff]
        %s754 = scalar_lea.vmem %s591, 16 [#allocation10]
        %v755 = vld [vmem:[%s754] sm:$0xff]
        %v756 = vld [vmem:[%s754 + $0x8] sm:$0xff]
        %s757 = scalar_lea.vmem %s600, 16 [#allocation11]
        %v758 = vld [vmem:[%s757] sm:$0xff]
        %v759 = vld [vmem:[%s757 + $0x8] sm:$0xff]
        %v760 = vmul.f32 %v749, %v755
        %v761 = vmul.f32 %v750, %v756
        %v762 = vmul.f32 %v752, %v758
        %v763 = vmul.f32 %v753, %v759
        %v764 = vsub.f32 %v760, %v762
        %v765 = vsub.f32 %v761, %v763
        %v766 = vmul.f32 %v749, %v758
        %v767 = vmul.f32 %v750, %v759
        %v768 = vmul.f32 %v752, %v755
        %v769 = vmul.f32 %v753, %v756
        %v770 = vadd.f32 %v766, %v768
        %v771 = vadd.f32 %v767, %v769
        %s772 = scalar_lea.vmem %s555, 32 [#allocation2]
        %v773 = vld [vmem:[%s772] sm:$0xff]
        %v774 = vld [vmem:[%s772 + $0x8] sm:$0xff]
        %s775 = scalar_lea.vmem %s564, 32 [#allocation5]
        %v776 = vld [vmem:[%s775] sm:$0xff]
        %v777 = vld [vmem:[%s775 + $0x8] sm:$0xff]
        %s778 = scalar_lea.vmem %s591, 32 [#allocation10]
        %v779 = vld [vmem:[%s778] sm:$0xff]
        %v780 = vld [vmem:[%s778 + $0x8] sm:$0xff]
        %s781 = scalar_lea.vmem %s600, 32 [#allocation11]
        %v782 = vld [vmem:[%s781] sm:$0xff]
        %v783 = vld [vmem:[%s781 + $0x8] sm:$0xff]
        %v784 = vmul.f32 %v773, %v779
        %v785 = vmul.f32 %v774, %v780
        %v786 = vmul.f32 %v776, %v782
        %v787 = vmul.f32 %v777, %v783
        %v788 = vsub.f32 %v784, %v786
        %v789 = vsub.f32 %v785, %v787
        %v790 = vmul.f32 %v773, %v782
        %v791 = vmul.f32 %v774, %v783
        %v792 = vmul.f32 %v776, %v779
        %v793 = vmul.f32 %v777, %v780
        %v794 = vadd.f32 %v790, %v792
        %v795 = vadd.f32 %v791, %v793
        %s796 = scalar_lea.vmem %s555, 48 [#allocation2]
        %v797 = vld [vmem:[%s796] sm:$0xff]
        %v798 = vld [vmem:[%s796 + $0x8] sm:$0xff]
        %s799 = scalar_lea.vmem %s564, 48 [#allocation5]
        %v800 = vld [vmem:[%s799] sm:$0xff]
        %v801 = vld [vmem:[%s799 + $0x8] sm:$0xff]
        %s802 = scalar_lea.vmem %s591, 48 [#allocation10]
        %v803 = vld [vmem:[%s802] sm:$0xff]
        %v804 = vld [vmem:[%s802 + $0x8] sm:$0xff]
        %s805 = scalar_lea.vmem %s600, 48 [#allocation11]
        %v806 = vld [vmem:[%s805] sm:$0xff]
        %v807 = vld [vmem:[%s805 + $0x8] sm:$0xff]
        %v808 = vmul.f32 %v797, %v803
        %v809 = vmul.f32 %v798, %v804
        %v810 = vmul.f32 %v800, %v806
        %v811 = vmul.f32 %v801, %v807
        %v812 = vsub.f32 %v808, %v810
        %v813 = vsub.f32 %v809, %v811
        %v814 = vmul.f32 %v797, %v806
        %v815 = vmul.f32 %v798, %v807
        %v816 = vmul.f32 %v800, %v803
        %v817 = vmul.f32 %v801, %v804
        %v818 = vadd.f32 %v814, %v816
        %v819 = vadd.f32 %v815, %v817
        %v820 = vld [vmem:[%s573] sm:$0xff]
        %v821 = vld [vmem:[%s573 + $0x8] sm:$0xff]
        %s822 = scalar_lea.vmem %s573, 16 [#allocation7]
        %v823 = vld [vmem:[%s822] sm:$0xff]
        %v824 = vld [vmem:[%s822 + $0x8] sm:$0xff]
        %s825 = scalar_lea.vmem %s573, 32 [#allocation7]
        %v826 = vld [vmem:[%s825] sm:$0xff]
        %v827 = vld [vmem:[%s825 + $0x8] sm:$0xff]
        %s828 = scalar_lea.vmem %s573, 48 [#allocation7]
        %v829 = vld [vmem:[%s828] sm:$0xff]
        %v830 = vld [vmem:[%s828 + $0x8] sm:$0xff]
        %v831 = vld [vmem:[%s582] sm:$0xff]
        %v832 = vld [vmem:[%s582 + $0x8] sm:$0xff]
        %s833 = scalar_lea.vmem %s582, 16 [#allocation8]
        %v834 = vld [vmem:[%s833] sm:$0xff]
        %v835 = vld [vmem:[%s833 + $0x8] sm:$0xff]
        %s836 = scalar_lea.vmem %s582, 32 [#allocation8]
        %v837 = vld [vmem:[%s836] sm:$0xff]
        %v838 = vld [vmem:[%s836 + $0x8] sm:$0xff]
        %s839 = scalar_lea.vmem %s582, 48 [#allocation8]
        %v840 = vld [vmem:[%s839] sm:$0xff]
        %v841 = vld [vmem:[%s839 + $0x8] sm:$0xff]
        %vm842 = vcmask 130048
        %v844 = vsel %vm842, %v740, 0
        %v847 = vsel %vm842, %v741, 0
        %v850 = vsel %vm842, %v764, 0
        %v853 = vsel %vm842, %v765, 0
        %v856 = vsel %vm842, %v788, 0
        %v859 = vsel %vm842, %v789, 0
        %v862 = vsel %vm842, %v812, 0
        %v865 = vsel %vm842, %v813, 0
        %v868 = vsel %vm842, %v820, 0
        %v871 = vsel %vm842, %v821, 0
        %v874 = vsel %vm842, %v823, 0
        %v877 = vsel %vm842, %v824, 0
        %v880 = vsel %vm842, %v826, 0
        %v883 = vsel %vm842, %v827, 0
        %v886 = vsel %vm842, %v829, 0
        %v889 = vsel %vm842, %v830, 0
        %891 = vmatprep.subr.mxu0 0.0
        %892 = vmatpush1.msra.mxu0 0.0
        %893 = vmatprep.subr.mxu0 0.0
        %894 = vmatpush1.msra.mxu0 0.0
        %895 = vmatprep.subr.mxu0 0.0
        %896 = vmatpush1.msra.mxu0 0.0
        %897 = vmatprep.subr.mxu0 0.0
        %898 = vmatpush1.msra.mxu0 0.0
        %899 = vmatprep.subr.mxu0 0.0
        %900 = vmatpush1.msra.mxu0 0.0
        %901 = vmatprep.subr.mxu0 0.0
        %902 = vmatpush1.msra.mxu0 0.0
        %903 = vmatprep.subr.mxu0 0.0
        %904 = vmatpush1.msra.mxu0 0.0
        %905 = vmatprep.subr.mxu0 0.0
        %906 = vmatpush1.msra.mxu0 0.0
        %907 = vmatprep.subr.mxu0 0.0
        %908 = vmatpush1.msra.mxu0 0.0
        %909 = vmatprep.subr.mxu0 0.0
        %910 = vmatpush1.msra.mxu0 0.0
        %911 = vmatprep.subr.mxu0 0.0
        %912 = vmatpush1.msra.mxu0 0.0
        %913 = vmatprep.subr.mxu0 0.0
        %914 = vmatpush1.msra.mxu0 0.0
        %915 = vmatprep.subr.mxu0 0.0
        %916 = vmatpush1.msra.mxu0 0.0
        %917 = vmatprep.subr.mxu0 0.0
        %918 = vmatpush1.msra.mxu0 0.0
        %919 = vmatprep.subr.mxu0 0.0
        %920 = vmatpush1.msra.mxu0 %v703
        %921 = vmatprep.subr.mxu0 0.0
        %922 = vmatpush1.msra.mxu0 %v702
        %923 = vmatprep.subr.mxu0 0.0
        %924 = vmatpush2.msra.mxu0 0.0
        %925 = vmatprep.subr.mxu0 0.0
        %926 = vmatpush2.msra.mxu0 0.0
        %927 = vmatprep.subr.mxu0 0.0
        %928 = vmatpush2.msra.mxu0 0.0
        %929 = vmatprep.subr.mxu0 0.0
        %930 = vmatpush2.msra.mxu0 0.0
        %931 = vmatprep.subr.mxu0 0.0
        %932 = vmatpush2.msra.mxu0 0.0
        %933 = vmatprep.subr.mxu0 0.0
        %934 = vmatpush2.msra.mxu0 0.0
        %935 = vmatprep.subr.mxu0 0.0
        %936 = vmatpush2.msra.mxu0 0.0
        %937 = vmatprep.subr.mxu0 0.0
        %938 = vmatpush2.msra.mxu0 0.0
        %939 = vmatprep.subr.mxu0 0.0
        %940 = vmatpush2.msra.mxu0 0.0
        %941 = vmatprep.subr.mxu0 0.0
        %942 = vmatpush2.msra.mxu0 0.0
        %943 = vmatprep.subr.mxu0 0.0
        %944 = vmatpush2.msra.mxu0 0.0
        %945 = vmatprep.subr.mxu0 0.0
        %946 = vmatpush2.msra.mxu0 0.0
        %947 = vmatprep.subr.mxu0 0.0
        %948 = vmatpush2.msra.mxu0 0.0
        %949 = vmatprep.subr.mxu0 0.0
        %950 = vmatpush2.msra.mxu0 0.0
        %951 = vmatprep.subr.mxu0 0.0
        %952 = vmatpush2.msra.mxu0 0.0
        %953 = vmatprep.subr.mxu0 0.0
        %954 = vmatpush2.msra.mxu0 0.0
        %955 = vmatprep.mubr.f32.mxu0 0.0
        %956 = vmatmul.mubr.f32.gmra.mxu0 %v844
        %v957 = vpop.f32.mrf.mxu0
        %v958 = vadd.f32 0.0, %v957
        %v959 = vpop.f32.mrf.mxu0
        %960 = vmatprep.mubr.f32.mxu0 0.0
        %961 = vmatmul.mubr.f32.gmra.mxu0 %v847
        %v962 = vpop.f32.mrf.mxu0
        %v963 = vadd.f32 0.0, %v962
        %v964 = vpop.f32.mrf.mxu0
        %965 = vmatprep.mubr.f32.mxu0 0.0
        %966 = vmatmul.mubr.f32.gmra.mxu0 %v850
        %v967 = vpop.f32.mrf.mxu0
        %v968 = vadd.f32 0.0, %v967
        %v969 = vpop.f32.mrf.mxu0
        %970 = vmatprep.mubr.f32.mxu0 0.0
        %971 = vmatmul.mubr.f32.gmra.mxu0 %v853
        %v972 = vpop.f32.mrf.mxu0
        %v973 = vadd.f32 0.0, %v972
        %v974 = vpop.f32.mrf.mxu0
        %975 = vmatprep.mubr.f32.mxu0 0.0
        %976 = vmatmul.mubr.f32.gmra.mxu0 %v856
        %v977 = vpop.f32.mrf.mxu0
        %v978 = vadd.f32 0.0, %v977
        %v979 = vpop.f32.mrf.mxu0
        %980 = vmatprep.mubr.f32.mxu0 0.0
        %981 = vmatmul.mubr.f32.gmra.mxu0 %v859
        %v982 = vpop.f32.mrf.mxu0
        %v983 = vadd.f32 0.0, %v982
        %v984 = vpop.f32.mrf.mxu0
        %985 = vmatprep.mubr.f32.mxu0 0.0
        %986 = vmatmul.mubr.f32.gmra.mxu0 %v862
        %v987 = vpop.f32.mrf.mxu0
        %v988 = vadd.f32 0.0, %v987
        %v989 = vpop.f32.mrf.mxu0
        %990 = vmatprep.mubr.f32.mxu0 0.0
        %991 = vmatmul.mubr.f32.gmra.mxu0 %v865
        %v992 = vpop.f32.mrf.mxu0
        %v993 = vadd.f32 0.0, %v992
        %v994 = vpop.f32.mrf.mxu0
        %995 = vmatprep.mubr.f32.mxu0 0.0
        %996 = vmatmul.mubr.f32.gmra.mxu0 %v868
        %v997 = vpop.f32.mrf.mxu0
        %v998 = vadd.f32 0.0, %v997
        %v999 = vpop.f32.mrf.mxu0
        %1000 = vmatprep.mubr.f32.mxu0 0.0
        %1001 = vmatmul.mubr.f32.gmra.mxu0 %v871
        %v1002 = vpop.f32.mrf.mxu0
        %v1003 = vadd.f32 0.0, %v1002
        %v1004 = vpop.f32.mrf.mxu0
        %1005 = vmatprep.mubr.f32.mxu0 0.0
        %1006 = vmatmul.mubr.f32.gmra.mxu0 %v874
        %v1007 = vpop.f32.mrf.mxu0
        %v1008 = vadd.f32 0.0, %v1007
        %v1009 = vpop.f32.mrf.mxu0
        %1010 = vmatprep.mubr.f32.mxu0 0.0
        %1011 = vmatmul.mubr.f32.gmra.mxu0 %v877
        %v1012 = vpop.f32.mrf.mxu0
        %v1013 = vadd.f32 0.0, %v1012
        %v1014 = vpop.f32.mrf.mxu0
        %1015 = vmatprep.mubr.f32.mxu0 0.0
        %1016 = vmatmul.mubr.f32.gmra.mxu0 %v880
        %v1017 = vpop.f32.mrf.mxu0
        %v1018 = vadd.f32 0.0, %v1017
        %v1019 = vpop.f32.mrf.mxu0
        %1020 = vmatprep.mubr.f32.mxu0 0.0
        %1021 = vmatmul.mubr.f32.gmra.mxu0 %v883
        %v1022 = vpop.f32.mrf.mxu0
        %v1023 = vadd.f32 0.0, %v1022
        %v1024 = vpop.f32.mrf.mxu0
        %1025 = vmatprep.mubr.f32.mxu0 0.0
        %1026 = vmatmul.mubr.f32.gmra.mxu0 %v886
        %v1027 = vpop.f32.mrf.mxu0
        %v1028 = vadd.f32 0.0, %v1027
        %v1029 = vpop.f32.mrf.mxu0
        %1030 = vmatprep.mubr.f32.mxu0 0.0
        %1031 = vmatmul.mubr.f32.gmra.mxu0 %v889
        %v1032 = vpop.f32.mrf.mxu0
        %v1033 = vadd.f32 0.0, %v1032
        %v1034 = vpop.f32.mrf.mxu0
        %1035 = vdwg.mxu0
        %v1037 = vsel %vm842, %v746, 0
        %v1040 = vsel %vm842, %v747, 0
        %v1043 = vsel %vm842, %v770, 0
        %v1046 = vsel %vm842, %v771, 0
        %v1049 = vsel %vm842, %v794, 0
        %v1052 = vsel %vm842, %v795, 0
        %v1055 = vsel %vm842, %v818, 0
        %v1058 = vsel %vm842, %v819, 0
        %v1061 = vsel %vm842, %v831, 0
        %v1064 = vsel %vm842, %v832, 0
        %v1067 = vsel %vm842, %v834, 0
        %v1070 = vsel %vm842, %v835, 0
        %v1073 = vsel %vm842, %v837, 0
        %v1076 = vsel %vm842, %v838, 0
        %v1079 = vsel %vm842, %v840, 0
        %v1082 = vsel %vm842, %v841, 0
        %1084 = vmatprep.subr.mxu0 0.0
        %1085 = vmatpush1.msra.mxu0 0.0
        %1086 = vmatprep.subr.mxu0 0.0
        %1087 = vmatpush1.msra.mxu0 0.0
        %1088 = vmatprep.subr.mxu0 0.0
        %1089 = vmatpush1.msra.mxu0 0.0
        %1090 = vmatprep.subr.mxu0 0.0
        %1091 = vmatpush1.msra.mxu0 0.0
        %1092 = vmatprep.subr.mxu0 0.0
        %1093 = vmatpush1.msra.mxu0 0.0
        %1094 = vmatprep.subr.mxu0 0.0
        %1095 = vmatpush1.msra.mxu0 0.0
        %1096 = vmatprep.subr.mxu0 0.0
        %1097 = vmatpush1.msra.mxu0 0.0
        %1098 = vmatprep.subr.mxu0 0.0
        %1099 = vmatpush1.msra.mxu0 0.0
        %1100 = vmatprep.subr.mxu0 0.0
        %1101 = vmatpush1.msra.mxu0 0.0
        %1102 = vmatprep.subr.mxu0 0.0
        %1103 = vmatpush1.msra.mxu0 0.0
        %1104 = vmatprep.subr.mxu0 0.0
        %1105 = vmatpush1.msra.mxu0 0.0
        %1106 = vmatprep.subr.mxu0 0.0
        %1107 = vmatpush1.msra.mxu0 0.0
        %1108 = vmatprep.subr.mxu0 0.0
        %1109 = vmatpush1.msra.mxu0 0.0
        %1110 = vmatprep.subr.mxu0 0.0
        %1111 = vmatpush1.msra.mxu0 0.0
        %1112 = vmatprep.subr.mxu0 0.0
        %1113 = vmatpush1.msra.mxu0 %v706
        %1114 = vmatprep.subr.mxu0 0.0
        %1115 = vmatpush1.msra.mxu0 %v705
        %1116 = vmatprep.subr.mxu0 0.0
        %1117 = vmatpush2.msra.mxu0 0.0
        %1118 = vmatprep.subr.mxu0 0.0
        %1119 = vmatpush2.msra.mxu0 0.0
        %1120 = vmatprep.subr.mxu0 0.0
        %1121 = vmatpush2.msra.mxu0 0.0
        %1122 = vmatprep.subr.mxu0 0.0
        %1123 = vmatpush2.msra.mxu0 0.0
        %1124 = vmatprep.subr.mxu0 0.0
        %1125 = vmatpush2.msra.mxu0 0.0
        %1126 = vmatprep.subr.mxu0 0.0
        %1127 = vmatpush2.msra.mxu0 0.0
        %1128 = vmatprep.subr.mxu0 0.0
        %1129 = vmatpush2.msra.mxu0 0.0
        %1130 = vmatprep.subr.mxu0 0.0
        %1131 = vmatpush2.msra.mxu0 0.0
        %1132 = vmatprep.subr.mxu0 0.0
        %1133 = vmatpush2.msra.mxu0 0.0
        %1134 = vmatprep.subr.mxu0 0.0
        %1135 = vmatpush2.msra.mxu0 0.0
        %1136 = vmatprep.subr.mxu0 0.0
        %1137 = vmatpush2.msra.mxu0 0.0
        %1138 = vmatprep.subr.mxu0 0.0
        %1139 = vmatpush2.msra.mxu0 0.0
        %1140 = vmatprep.subr.mxu0 0.0
        %1141 = vmatpush2.msra.mxu0 0.0
        %1142 = vmatprep.subr.mxu0 0.0
        %1143 = vmatpush2.msra.mxu0 0.0
        %1144 = vmatprep.subr.mxu0 0.0
        %1145 = vmatpush2.msra.mxu0 0.0
        %1146 = vmatprep.subr.mxu0 0.0
        %1147 = vmatpush2.msra.mxu0 0.0
        %1148 = vmatprep.mubr.f32.mxu0 0.0
        %1149 = vmatmul.mubr.f32.gmra.mxu0 %v1037
        %v1150 = vpop.f32.mrf.mxu0
        %v1151 = vadd.f32 0.0, %v1150
        %v1152 = vpop.f32.mrf.mxu0
        %1153 = vmatprep.mubr.f32.mxu0 0.0
        %1154 = vmatmul.mubr.f32.gmra.mxu0 %v1040
        %v1155 = vpop.f32.mrf.mxu0
        %v1156 = vadd.f32 0.0, %v1155
        %v1157 = vpop.f32.mrf.mxu0
        %1158 = vmatprep.mubr.f32.mxu0 0.0
        %1159 = vmatmul.mubr.f32.gmra.mxu0 %v1043
        %v1160 = vpop.f32.mrf.mxu0
        %v1161 = vadd.f32 0.0, %v1160
        %v1162 = vpop.f32.mrf.mxu0
        %1163 = vmatprep.mubr.f32.mxu0 0.0
        %1164 = vmatmul.mubr.f32.gmra.mxu0 %v1046
        %v1165 = vpop.f32.mrf.mxu0
        %v1166 = vadd.f32 0.0, %v1165
        %v1167 = vpop.f32.mrf.mxu0
        %1168 = vmatprep.mubr.f32.mxu0 0.0
        %1169 = vmatmul.mubr.f32.gmra.mxu0 %v1049
        %v1170 = vpop.f32.mrf.mxu0
        %v1171 = vadd.f32 0.0, %v1170
        %v1172 = vpop.f32.mrf.mxu0
        %1173 = vmatprep.mubr.f32.mxu0 0.0
        %1174 = vmatmul.mubr.f32.gmra.mxu0 %v1052
        %v1175 = vpop.f32.mrf.mxu0
        %v1176 = vadd.f32 0.0, %v1175
        %v1177 = vpop.f32.mrf.mxu0
        %1178 = vmatprep.mubr.f32.mxu0 0.0
        %1179 = vmatmul.mubr.f32.gmra.mxu0 %v1055
        %v1180 = vpop.f32.mrf.mxu0
        %v1181 = vadd.f32 0.0, %v1180
        %v1182 = vpop.f32.mrf.mxu0
        %1183 = vmatprep.mubr.f32.mxu0 0.0
        %1184 = vmatmul.mubr.f32.gmra.mxu0 %v1058
        %v1185 = vpop.f32.mrf.mxu0
        %v1186 = vadd.f32 0.0, %v1185
        %v1187 = vpop.f32.mrf.mxu0
        %1188 = vmatprep.mubr.f32.mxu0 0.0
        %1189 = vmatmul.mubr.f32.gmra.mxu0 %v1061
        %v1190 = vpop.f32.mrf.mxu0
        %v1191 = vadd.f32 0.0, %v1190
        %v1192 = vpop.f32.mrf.mxu0
        %1193 = vmatprep.mubr.f32.mxu0 0.0
        %1194 = vmatmul.mubr.f32.gmra.mxu0 %v1064
        %v1195 = vpop.f32.mrf.mxu0
        %v1196 = vadd.f32 0.0, %v1195
        %v1197 = vpop.f32.mrf.mxu0
        %1198 = vmatprep.mubr.f32.mxu0 0.0
        %1199 = vmatmul.mubr.f32.gmra.mxu0 %v1067
        %v1200 = vpop.f32.mrf.mxu0
        %v1201 = vadd.f32 0.0, %v1200
        %v1202 = vpop.f32.mrf.mxu0
        %1203 = vmatprep.mubr.f32.mxu0 0.0
        %1204 = vmatmul.mubr.f32.gmra.mxu0 %v1070
        %v1205 = vpop.f32.mrf.mxu0
        %v1206 = vadd.f32 0.0, %v1205
        %v1207 = vpop.f32.mrf.mxu0
        %1208 = vmatprep.mubr.f32.mxu0 0.0
        %1209 = vmatmul.mubr.f32.gmra.mxu0 %v1073
        %v1210 = vpop.f32.mrf.mxu0
        %v1211 = vadd.f32 0.0, %v1210
        %v1212 = vpop.f32.mrf.mxu0
        %1213 = vmatprep.mubr.f32.mxu0 0.0
        %1214 = vmatmul.mubr.f32.gmra.mxu0 %v1076
        %v1215 = vpop.f32.mrf.mxu0
        %v1216 = vadd.f32 0.0, %v1215
        %v1217 = vpop.f32.mrf.mxu0
        %1218 = vmatprep.mubr.f32.mxu0 0.0
        %1219 = vmatmul.mubr.f32.gmra.mxu0 %v1079
        %v1220 = vpop.f32.mrf.mxu0
        %v1221 = vadd.f32 0.0, %v1220
        %v1222 = vpop.f32.mrf.mxu0
        %1223 = vmatprep.mubr.f32.mxu0 0.0
        %1224 = vmatmul.mubr.f32.gmra.mxu0 %v1082
        %v1225 = vpop.f32.mrf.mxu0
        %v1226 = vadd.f32 0.0, %v1225
        %v1227 = vpop.f32.mrf.mxu0
        %1228 = vdwg.mxu0
        %v1229 = vadd.f32 %v740, %v746
        %v1230 = vadd.f32 %v741, %v747
        %v1231 = vadd.f32 %v764, %v770
        %v1232 = vadd.f32 %v765, %v771
        %v1233 = vadd.f32 %v788, %v794
        %v1234 = vadd.f32 %v789, %v795
        %v1235 = vadd.f32 %v812, %v818
        %v1236 = vadd.f32 %v813, %v819
        %v1237 = vadd.f32 %v820, %v831
        %v1238 = vadd.f32 %v821, %v832
        %v1239 = vadd.f32 %v823, %v834
        %v1240 = vadd.f32 %v824, %v835
        %v1241 = vadd.f32 %v826, %v837
        %v1242 = vadd.f32 %v827, %v838
        %v1243 = vadd.f32 %v829, %v840
        %v1244 = vadd.f32 %v830, %v841
        %v1246 = vsel %vm842, %v1229, 0
        %v1249 = vsel %vm842, %v1230, 0
        %v1252 = vsel %vm842, %v1231, 0
        %v1255 = vsel %vm842, %v1232, 0
        %v1258 = vsel %vm842, %v1233, 0
        %v1261 = vsel %vm842, %v1234, 0
        %v1264 = vsel %vm842, %v1235, 0
        %v1267 = vsel %vm842, %v1236, 0
        %v1270 = vsel %vm842, %v1237, 0
        %v1273 = vsel %vm842, %v1238, 0
        %v1276 = vsel %vm842, %v1239, 0
        %v1279 = vsel %vm842, %v1240, 0
        %v1282 = vsel %vm842, %v1241, 0
        %v1285 = vsel %vm842, %v1242, 0
        %v1288 = vsel %vm842, %v1243, 0
        %v1291 = vsel %vm842, %v1244, 0
        %1293 = vmatprep.subr.mxu0 0.0
        %1294 = vmatpush1.msra.mxu0 0.0
        %1295 = vmatprep.subr.mxu0 0.0
        %1296 = vmatpush1.msra.mxu0 0.0
        %1297 = vmatprep.subr.mxu0 0.0
        %1298 = vmatpush1.msra.mxu0 0.0
        %1299 = vmatprep.subr.mxu0 0.0
        %1300 = vmatpush1.msra.mxu0 0.0
        %1301 = vmatprep.subr.mxu0 0.0
        %1302 = vmatpush1.msra.mxu0 0.0
        %1303 = vmatprep.subr.mxu0 0.0
        %1304 = vmatpush1.msra.mxu0 0.0
        %1305 = vmatprep.subr.mxu0 0.0
        %1306 = vmatpush1.msra.mxu0 0.0
        %1307 = vmatprep.subr.mxu0 0.0
        %1308 = vmatpush1.msra.mxu0 0.0
        %1309 = vmatprep.subr.mxu0 0.0
        %1310 = vmatpush1.msra.mxu0 0.0
        %1311 = vmatprep.subr.mxu0 0.0
        %1312 = vmatpush1.msra.mxu0 0.0
        %1313 = vmatprep.subr.mxu0 0.0
        %1314 = vmatpush1.msra.mxu0 0.0
        %1315 = vmatprep.subr.mxu0 0.0
        %1316 = vmatpush1.msra.mxu0 0.0
        %1317 = vmatprep.subr.mxu0 0.0
        %1318 = vmatpush1.msra.mxu0 0.0
        %1319 = vmatprep.subr.mxu0 0.0
        %1320 = vmatpush1.msra.mxu0 0.0
        %1321 = vmatprep.subr.mxu0 0.0
        %1322 = vmatpush1.msra.mxu0 %v709
        %1323 = vmatprep.subr.mxu0 0.0
        %1324 = vmatpush1.msra.mxu0 %v708
        %1325 = vmatprep.subr.mxu0 0.0
        %1326 = vmatpush2.msra.mxu0 0.0
        %1327 = vmatprep.subr.mxu0 0.0
        %1328 = vmatpush2.msra.mxu0 0.0
        %1329 = vmatprep.subr.mxu0 0.0
        %1330 = vmatpush2.msra.mxu0 0.0
        %1331 = vmatprep.subr.mxu0 0.0
        %1332 = vmatpush2.msra.mxu0 0.0
        %1333 = vmatprep.subr.mxu0 0.0
        %1334 = vmatpush2.msra.mxu0 0.0
        %1335 = vmatprep.subr.mxu0 0.0
        %1336 = vmatpush2.msra.mxu0 0.0
        %1337 = vmatprep.subr.mxu0 0.0
        %1338 = vmatpush2.msra.mxu0 0.0
        %1339 = vmatprep.subr.mxu0 0.0
        %1340 = vmatpush2.msra.mxu0 0.0
        %1341 = vmatprep.subr.mxu0 0.0
        %1342 = vmatpush2.msra.mxu0 0.0
        %1343 = vmatprep.subr.mxu0 0.0
        %1344 = vmatpush2.msra.mxu0 0.0
        %1345 = vmatprep.subr.mxu0 0.0
        %1346 = vmatpush2.msra.mxu0 0.0
        %1347 = vmatprep.subr.mxu0 0.0
        %1348 = vmatpush2.msra.mxu0 0.0
        %1349 = vmatprep.subr.mxu0 0.0
        %1350 = vmatpush2.msra.mxu0 0.0
        %1351 = vmatprep.subr.mxu0 0.0
        %1352 = vmatpush2.msra.mxu0 0.0
        %1353 = vmatprep.subr.mxu0 0.0
        %1354 = vmatpush2.msra.mxu0 0.0
        %1355 = vmatprep.subr.mxu0 0.0
        %1356 = vmatpush2.msra.mxu0 0.0
        %1357 = vmatprep.mubr.f32.mxu0 0.0
        %1358 = vmatmul.mubr.f32.gmra.mxu0 %v1246
        %v1359 = vpop.f32.mrf.mxu0
        %v1360 = vadd.f32 0.0, %v1359
        %v1361 = vpop.f32.mrf.mxu0
        %1362 = vmatprep.mubr.f32.mxu0 0.0
        %1363 = vmatmul.mubr.f32.gmra.mxu0 %v1249
        %v1364 = vpop.f32.mrf.mxu0
        %v1365 = vadd.f32 0.0, %v1364
        %v1366 = vpop.f32.mrf.mxu0
        %1367 = vmatprep.mubr.f32.mxu0 0.0
        %1368 = vmatmul.mubr.f32.gmra.mxu0 %v1252
        %v1369 = vpop.f32.mrf.mxu0
        %v1370 = vadd.f32 0.0, %v1369
        %v1371 = vpop.f32.mrf.mxu0
        %1372 = vmatprep.mubr.f32.mxu0 0.0
        %1373 = vmatmul.mubr.f32.gmra.mxu0 %v1255
        %v1374 = vpop.f32.mrf.mxu0
        %v1375 = vadd.f32 0.0, %v1374
        %v1376 = vpop.f32.mrf.mxu0
        %1377 = vmatprep.mubr.f32.mxu0 0.0
        %1378 = vmatmul.mubr.f32.gmra.mxu0 %v1258
        %v1379 = vpop.f32.mrf.mxu0
        %v1380 = vadd.f32 0.0, %v1379
        %v1381 = vpop.f32.mrf.mxu0
        %1382 = vmatprep.mubr.f32.mxu0 0.0
        %1383 = vmatmul.mubr.f32.gmra.mxu0 %v1261
        %v1384 = vpop.f32.mrf.mxu0
        %v1385 = vadd.f32 0.0, %v1384
        %v1386 = vpop.f32.mrf.mxu0
        %1387 = vmatprep.mubr.f32.mxu0 0.0
        %1388 = vmatmul.mubr.f32.gmra.mxu0 %v1264
        %v1389 = vpop.f32.mrf.mxu0
        %v1390 = vadd.f32 0.0, %v1389
        %v1391 = vpop.f32.mrf.mxu0
        %1392 = vmatprep.mubr.f32.mxu0 0.0
        %1393 = vmatmul.mubr.f32.gmra.mxu0 %v1267
        %v1394 = vpop.f32.mrf.mxu0
        %v1395 = vadd.f32 0.0, %v1394
        %v1396 = vpop.f32.mrf.mxu0
        %1397 = vmatprep.mubr.f32.mxu0 0.0
        %1398 = vmatmul.mubr.f32.gmra.mxu0 %v1270
        %v1399 = vpop.f32.mrf.mxu0
        %v1400 = vadd.f32 0.0, %v1399
        %v1401 = vpop.f32.mrf.mxu0
        %1402 = vmatprep.mubr.f32.mxu0 0.0
        %1403 = vmatmul.mubr.f32.gmra.mxu0 %v1273
        %v1404 = vpop.f32.mrf.mxu0
        %v1405 = vadd.f32 0.0, %v1404
        %v1406 = vpop.f32.mrf.mxu0
        %1407 = vmatprep.mubr.f32.mxu0 0.0
        %1408 = vmatmul.mubr.f32.gmra.mxu0 %v1276
        %v1409 = vpop.f32.mrf.mxu0
        %v1410 = vadd.f32 0.0, %v1409
        %v1411 = vpop.f32.mrf.mxu0
        %1412 = vmatprep.mubr.f32.mxu0 0.0
        %1413 = vmatmul.mubr.f32.gmra.mxu0 %v1279
        %v1414 = vpop.f32.mrf.mxu0
        %v1415 = vadd.f32 0.0, %v1414
        %v1416 = vpop.f32.mrf.mxu0
        %1417 = vmatprep.mubr.f32.mxu0 0.0
        %1418 = vmatmul.mubr.f32.gmra.mxu0 %v1282
        %v1419 = vpop.f32.mrf.mxu0
        %v1420 = vadd.f32 0.0, %v1419
        %v1421 = vpop.f32.mrf.mxu0
        %1422 = vmatprep.mubr.f32.mxu0 0.0
        %1423 = vmatmul.mubr.f32.gmra.mxu0 %v1285
        %v1424 = vpop.f32.mrf.mxu0
        %v1425 = vadd.f32 0.0, %v1424
        %v1426 = vpop.f32.mrf.mxu0
        %1427 = vmatprep.mubr.f32.mxu0 0.0
        %1428 = vmatmul.mubr.f32.gmra.mxu0 %v1288
        %v1429 = vpop.f32.mrf.mxu0
        %v1430 = vadd.f32 0.0, %v1429
        %v1431 = vpop.f32.mrf.mxu0
        %1432 = vmatprep.mubr.f32.mxu0 0.0
        %1433 = vmatmul.mubr.f32.gmra.mxu0 %v1291
        %v1434 = vpop.f32.mrf.mxu0
        %v1435 = vadd.f32 0.0, %v1434
        %v1436 = vpop.f32.mrf.mxu0
        %1437 = vdwg.mxu0
        %v1438 = vsub.f32 %v958, %v1151
        %v1439 = vsub.f32 %v963, %v1156
        %v1440 = vsub.f32 %v968, %v1161
        %v1441 = vsub.f32 %v973, %v1166
        %v1442 = vsub.f32 %v978, %v1171
        %v1443 = vsub.f32 %v983, %v1176
        %v1444 = vsub.f32 %v988, %v1181
        %v1445 = vsub.f32 %v993, %v1186
        %v1446 = vsub.f32 %v998, %v1191
        %v1447 = vsub.f32 %v1003, %v1196
        %v1448 = vsub.f32 %v1008, %v1201
        %v1449 = vsub.f32 %v1013, %v1206
        %v1450 = vsub.f32 %v1018, %v1211
        %v1451 = vsub.f32 %v1023, %v1216
        %v1452 = vsub.f32 %v1028, %v1221
        %v1453 = vsub.f32 %v1033, %v1226
        %v1454 = vsub.f32 %v1360, %v958
        %v1455 = vsub.f32 %v1365, %v963
        %v1456 = vsub.f32 %v1370, %v968
        %v1457 = vsub.f32 %v1375, %v973
        %v1458 = vsub.f32 %v1380, %v978
        %v1459 = vsub.f32 %v1385, %v983
        %v1460 = vsub.f32 %v1390, %v988
        %v1461 = vsub.f32 %v1395, %v993
        %v1462 = vsub.f32 %v1400, %v998
        %v1463 = vsub.f32 %v1405, %v1003
        %v1464 = vsub.f32 %v1410, %v1008
        %v1465 = vsub.f32 %v1415, %v1013
        %v1466 = vsub.f32 %v1420, %v1018
        %v1467 = vsub.f32 %v1425, %v1023
        %v1468 = vsub.f32 %v1430, %v1028
        %v1469 = vsub.f32 %v1435, %v1033
        %v1470 = vsub.f32 %v1454, %v1151
        %v1471 = vsub.f32 %v1455, %v1156
        %v1472 = vsub.f32 %v1456, %v1161
        %v1473 = vsub.f32 %v1457, %v1166
        %v1474 = vsub.f32 %v1458, %v1171
        %v1475 = vsub.f32 %v1459, %v1176
        %v1476 = vsub.f32 %v1460, %v1181
        %v1477 = vsub.f32 %v1461, %v1186
        %v1478 = vsub.f32 %v1462, %v1191
        %v1479 = vsub.f32 %v1463, %v1196
        %v1480 = vsub.f32 %v1464, %v1201
        %v1481 = vsub.f32 %v1465, %v1206
        %v1482 = vsub.f32 %v1466, %v1211
        %v1483 = vsub.f32 %v1467, %v1216
        %v1484 = vsub.f32 %v1468, %v1221
        %v1485 = vsub.f32 %v1469, %v1226
        %1488 = vrot.lane.b32.xlu0 %v1440, 16
        %v1489 = vpop.permute.xlu0 %1488
        %1490 = vrot.lane.b32.xlu0 %v1441, 16
        %v1491 = vpop.permute.xlu0 %1490
        %1496 = vrot.lane.b32.xlu0 %v1442, 32
        %v1497 = vpop.permute.xlu0 %1496
        %1498 = vrot.lane.b32.xlu0 %v1443, 32
        %v1499 = vpop.permute.xlu0 %1498
        %1504 = vrot.lane.b32.xlu0 %v1444, 48
        %v1505 = vpop.permute.xlu0 %1504
        %1506 = vrot.lane.b32.xlu0 %v1445, 48
        %v1507 = vpop.permute.xlu0 %1506
        %1512 = vrot.lane.b32.xlu0 %v1446, 64
        %v1513 = vpop.permute.xlu0 %1512
        %1514 = vrot.lane.b32.xlu0 %v1447, 64
        %v1515 = vpop.permute.xlu0 %1514
        %1520 = vrot.lane.b32.xlu0 %v1448, 80
        %v1521 = vpop.permute.xlu0 %1520
        %1522 = vrot.lane.b32.xlu0 %v1449, 80
        %v1523 = vpop.permute.xlu0 %1522
        %1528 = vrot.lane.b32.xlu0 %v1450, 96
        %v1529 = vpop.permute.xlu0 %1528
        %1530 = vrot.lane.b32.xlu0 %v1451, 96
        %v1531 = vpop.permute.xlu0 %1530
        %1536 = vrot.lane.b32.xlu0 %v1452, 112
        %v1537 = vpop.permute.xlu0 %1536
        %1538 = vrot.lane.b32.xlu0 %v1453, 112
        %v1539 = vpop.permute.xlu0 %1538
        %v1542 = vsel %vm842, %v1438, %v1489
        %v1543 = vsel %vm842, %v1439, %v1491
        %vm1544 = vcmask 261120
        %v1545 = vsel %vm1544, %v1542, %v1497
        %v1546 = vsel %vm1544, %v1543, %v1499
        %vm1547 = vcmask 392192
        %v1548 = vsel %vm1547, %v1545, %v1505
        %v1549 = vsel %vm1547, %v1546, %v1507
        %vm1550 = vcmask 523264
        %v1551 = vsel %vm1550, %v1548, %v1513
        %v1552 = vsel %vm1550, %v1549, %v1515
        %vm1553 = vcmask 654336
        %v1554 = vsel %vm1553, %v1551, %v1521
        %v1555 = vsel %vm1553, %v1552, %v1523
        %vm1556 = vcmask 785408
        %v1557 = vsel %vm1556, %v1554, %v1529
        %v1558 = vsel %vm1556, %v1555, %v1531
        %vm1559 = vcmask 916480
        %v1560 = vsel %vm1559, %v1557, %v1537
        %v1561 = vsel %vm1559, %v1558, %v1539
        %1564 = vrot.lane.b32.xlu0 %v1472, 16
        %v1565 = vpop.permute.xlu0 %1564
        %1566 = vrot.lane.b32.xlu0 %v1473, 16
        %v1567 = vpop.permute.xlu0 %1566
        %1572 = vrot.lane.b32.xlu0 %v1474, 32
        %v1573 = vpop.permute.xlu0 %1572
        %1574 = vrot.lane.b32.xlu0 %v1475, 32
        %v1575 = vpop.permute.xlu0 %1574
        %1580 = vrot.lane.b32.xlu0 %v1476, 48
        %v1581 = vpop.permute.xlu0 %1580
        %1582 = vrot.lane.b32.xlu0 %v1477, 48
        %v1583 = vpop.permute.xlu0 %1582
        %1588 = vrot.lane.b32.xlu0 %v1478, 64
        %v1589 = vpop.permute.xlu0 %1588
        %1590 = vrot.lane.b32.xlu0 %v1479, 64
        %v1591 = vpop.permute.xlu0 %1590
        %1596 = vrot.lane.b32.xlu0 %v1480, 80
        %v1597 = vpop.permute.xlu0 %1596
        %1598 = vrot.lane.b32.xlu0 %v1481, 80
        %v1599 = vpop.permute.xlu0 %1598
        %1604 = vrot.lane.b32.xlu0 %v1482, 96
        %v1605 = vpop.permute.xlu0 %1604
        %1606 = vrot.lane.b32.xlu0 %v1483, 96
        %v1607 = vpop.permute.xlu0 %1606
        %1612 = vrot.lane.b32.xlu0 %v1484, 112
        %v1613 = vpop.permute.xlu0 %1612
        %1614 = vrot.lane.b32.xlu0 %v1485, 112
        %v1615 = vpop.permute.xlu0 %1614
        %v1618 = vsel %vm842, %v1470, %v1565
        %v1619 = vsel %vm842, %v1471, %v1567
        %v1620 = vsel %vm1544, %v1618, %v1573
        %v1621 = vsel %vm1544, %v1619, %v1575
        %v1622 = vsel %vm1547, %v1620, %v1581
        %v1623 = vsel %vm1547, %v1621, %v1583
        %v1624 = vsel %vm1550, %v1622, %v1589
        %v1625 = vsel %vm1550, %v1623, %v1591
        %v1626 = vsel %vm1553, %v1624, %v1597
        %v1627 = vsel %vm1553, %v1625, %v1599
        %v1628 = vsel %vm1556, %v1626, %v1605
        %v1629 = vsel %vm1556, %v1627, %v1607
        %v1630 = vsel %vm1559, %v1628, %v1613
        %v1631 = vsel %vm1559, %v1629, %v1615
        %v1633 = vsel %vm842, %v694, 0
        %v1636 = vsel %vm842, %v695, 0
        %1638 = vmatprep.subr.mxu0 0.0
        %1639 = vmatpush1.msra.mxu0 0.0
        %1640 = vmatprep.subr.mxu0 0.0
        %1641 = vmatpush1.msra.mxu0 0.0
        %1642 = vmatprep.subr.mxu0 0.0
        %1643 = vmatpush1.msra.mxu0 0.0
        %1644 = vmatprep.subr.mxu0 0.0
        %1645 = vmatpush1.msra.mxu0 0.0
        %1646 = vmatprep.subr.mxu0 0.0
        %1647 = vmatpush1.msra.mxu0 0.0
        %1648 = vmatprep.subr.mxu0 0.0
        %1649 = vmatpush1.msra.mxu0 0.0
        %1650 = vmatprep.subr.mxu0 0.0
        %1651 = vmatpush1.msra.mxu0 0.0
        %1652 = vmatprep.subr.mxu0 0.0
        %1653 = vmatpush1.msra.mxu0 0.0
        %1654 = vmatprep.subr.mxu0 0.0
        %1655 = vmatpush1.msra.mxu0 0.0
        %1656 = vmatprep.subr.mxu0 0.0
        %1657 = vmatpush1.msra.mxu0 0.0
        %1658 = vmatprep.subr.mxu0 0.0
        %1659 = vmatpush1.msra.mxu0 0.0
        %1660 = vmatprep.subr.mxu0 0.0
        %1661 = vmatpush1.msra.mxu0 0.0
        %1662 = vmatprep.subr.mxu0 0.0
        %1663 = vmatpush1.msra.mxu0 0.0
        %1664 = vmatprep.subr.mxu0 0.0
        %1665 = vmatpush1.msra.mxu0 0.0
        %1666 = vmatprep.subr.mxu0 0.0
        %1667 = vmatpush1.msra.mxu0 %v1561
        %1668 = vmatprep.subr.mxu0 0.0
        %1669 = vmatpush1.msra.mxu0 %v1560
        %1670 = vmatprep.subr.mxu0 0.0
        %1671 = vmatpush2.msra.mxu0 0.0
        %1672 = vmatprep.subr.mxu0 0.0
        %1673 = vmatpush2.msra.mxu0 0.0
        %1674 = vmatprep.subr.mxu0 0.0
        %1675 = vmatpush2.msra.mxu0 0.0
        %1676 = vmatprep.subr.mxu0 0.0
        %1677 = vmatpush2.msra.mxu0 0.0
        %1678 = vmatprep.subr.mxu0 0.0
        %1679 = vmatpush2.msra.mxu0 0.0
        %1680 = vmatprep.subr.mxu0 0.0
        %1681 = vmatpush2.msra.mxu0 0.0
        %1682 = vmatprep.subr.mxu0 0.0
        %1683 = vmatpush2.msra.mxu0 0.0
        %1684 = vmatprep.subr.mxu0 0.0
        %1685 = vmatpush2.msra.mxu0 0.0
        %1686 = vmatprep.subr.mxu0 0.0
        %1687 = vmatpush2.msra.mxu0 0.0
        %1688 = vmatprep.subr.mxu0 0.0
        %1689 = vmatpush2.msra.mxu0 0.0
        %1690 = vmatprep.subr.mxu0 0.0
        %1691 = vmatpush2.msra.mxu0 0.0
        %1692 = vmatprep.subr.mxu0 0.0
        %1693 = vmatpush2.msra.mxu0 0.0
        %1694 = vmatprep.subr.mxu0 0.0
        %1695 = vmatpush2.msra.mxu0 0.0
        %1696 = vmatprep.subr.mxu0 0.0
        %1697 = vmatpush2.msra.mxu0 0.0
        %1698 = vmatprep.subr.mxu0 0.0
        %1699 = vmatpush2.msra.mxu0 0.0
        %1700 = vmatprep.subr.mxu0 0.0
        %1701 = vmatpush2.msra.mxu0 0.0
        %1702 = vmatprep.mubr.f32.mxu0 0.0
        %1703 = vmatmul.mubr.f32.gmra.mxu0 %v1633
        %v1704 = vpop.f32.mrf.mxu0
        %v1705 = vadd.f32 0.0, %v1704
        %v1706 = vpop.f32.mrf.mxu0
        %1707 = vmatprep.mubr.f32.mxu0 0.0
        %1708 = vmatmul.mubr.f32.gmra.mxu0 %v1636
        %v1709 = vpop.f32.mrf.mxu0
        %v1710 = vadd.f32 0.0, %v1709
        %v1711 = vpop.f32.mrf.mxu0
        %1712 = vdwg.mxu0
        %v1714 = vsel %vm842, %v697, 0
        %v1717 = vsel %vm842, %v698, 0
        %1719 = vmatprep.subr.mxu0 0.0
        %1720 = vmatpush1.msra.mxu0 0.0
        %1721 = vmatprep.subr.mxu0 0.0
        %1722 = vmatpush1.msra.mxu0 0.0
        %1723 = vmatprep.subr.mxu0 0.0
        %1724 = vmatpush1.msra.mxu0 0.0
        %1725 = vmatprep.subr.mxu0 0.0
        %1726 = vmatpush1.msra.mxu0 0.0
        %1727 = vmatprep.subr.mxu0 0.0
        %1728 = vmatpush1.msra.mxu0 0.0
        %1729 = vmatprep.subr.mxu0 0.0
        %1730 = vmatpush1.msra.mxu0 0.0
        %1731 = vmatprep.subr.mxu0 0.0
        %1732 = vmatpush1.msra.mxu0 0.0
        %1733 = vmatprep.subr.mxu0 0.0
        %1734 = vmatpush1.msra.mxu0 0.0
        %1735 = vmatprep.subr.mxu0 0.0
        %1736 = vmatpush1.msra.mxu0 0.0
        %1737 = vmatprep.subr.mxu0 0.0
        %1738 = vmatpush1.msra.mxu0 0.0
        %1739 = vmatprep.subr.mxu0 0.0
        %1740 = vmatpush1.msra.mxu0 0.0
        %1741 = vmatprep.subr.mxu0 0.0
        %1742 = vmatpush1.msra.mxu0 0.0
        %1743 = vmatprep.subr.mxu0 0.0
        %1744 = vmatpush1.msra.mxu0 0.0
        %1745 = vmatprep.subr.mxu0 0.0
        %1746 = vmatpush1.msra.mxu0 0.0
        %1747 = vmatprep.subr.mxu0 0.0
        %1748 = vmatpush1.msra.mxu0 %v1631
        %1749 = vmatprep.subr.mxu0 0.0
        %1750 = vmatpush1.msra.mxu0 %v1630
        %1751 = vmatprep.subr.mxu0 0.0
        %1752 = vmatpush2.msra.mxu0 0.0
        %1753 = vmatprep.subr.mxu0 0.0
        %1754 = vmatpush2.msra.mxu0 0.0
        %1755 = vmatprep.subr.mxu0 0.0
        %1756 = vmatpush2.msra.mxu0 0.0
        %1757 = vmatprep.subr.mxu0 0.0
        %1758 = vmatpush2.msra.mxu0 0.0
        %1759 = vmatprep.subr.mxu0 0.0
        %1760 = vmatpush2.msra.mxu0 0.0
        %1761 = vmatprep.subr.mxu0 0.0
        %1762 = vmatpush2.msra.mxu0 0.0
        %1763 = vmatprep.subr.mxu0 0.0
        %1764 = vmatpush2.msra.mxu0 0.0
        %1765 = vmatprep.subr.mxu0 0.0
        %1766 = vmatpush2.msra.mxu0 0.0
        %1767 = vmatprep.subr.mxu0 0.0
        %1768 = vmatpush2.msra.mxu0 0.0
        %1769 = vmatprep.subr.mxu0 0.0
        %1770 = vmatpush2.msra.mxu0 0.0
        %1771 = vmatprep.subr.mxu0 0.0
        %1772 = vmatpush2.msra.mxu0 0.0
        %1773 = vmatprep.subr.mxu0 0.0
        %1774 = vmatpush2.msra.mxu0 0.0
        %1775 = vmatprep.subr.mxu0 0.0
        %1776 = vmatpush2.msra.mxu0 0.0
        %1777 = vmatprep.subr.mxu0 0.0
        %1778 = vmatpush2.msra.mxu0 0.0
        %1779 = vmatprep.subr.mxu0 0.0
        %1780 = vmatpush2.msra.mxu0 0.0
        %1781 = vmatprep.subr.mxu0 0.0
        %1782 = vmatpush2.msra.mxu0 0.0
        %1783 = vmatprep.mubr.f32.mxu0 0.0
        %1784 = vmatmul.mubr.f32.gmra.mxu0 %v1714
        %v1785 = vpop.f32.mrf.mxu0
        %v1786 = vadd.f32 0.0, %v1785
        %v1787 = vpop.f32.mrf.mxu0
        %1788 = vmatprep.mubr.f32.mxu0 0.0
        %1789 = vmatmul.mubr.f32.gmra.mxu0 %v1717
        %v1790 = vpop.f32.mrf.mxu0
        %v1791 = vadd.f32 0.0, %v1790
        %v1792 = vpop.f32.mrf.mxu0
        %1793 = vdwg.mxu0
        %v1794 = vadd.f32 %v1560, %v1630
        %v1795 = vadd.f32 %v1561, %v1631
        %v1797 = vsel %vm842, %v700, 0
        %v1800 = vsel %vm842, %v701, 0
        %1802 = vmatprep.subr.mxu0 0.0
        %1803 = vmatpush1.msra.mxu0 0.0
        %1804 = vmatprep.subr.mxu0 0.0
        %1805 = vmatpush1.msra.mxu0 0.0
        %1806 = vmatprep.subr.mxu0 0.0
        %1807 = vmatpush1.msra.mxu0 0.0
        %1808 = vmatprep.subr.mxu0 0.0
        %1809 = vmatpush1.msra.mxu0 0.0
        %1810 = vmatprep.subr.mxu0 0.0
        %1811 = vmatpush1.msra.mxu0 0.0
        %1812 = vmatprep.subr.mxu0 0.0
        %1813 = vmatpush1.msra.mxu0 0.0
        %1814 = vmatprep.subr.mxu0 0.0
        %1815 = vmatpush1.msra.mxu0 0.0
        %1816 = vmatprep.subr.mxu0 0.0
        %1817 = vmatpush1.msra.mxu0 0.0
        %1818 = vmatprep.subr.mxu0 0.0
        %1819 = vmatpush1.msra.mxu0 0.0
        %1820 = vmatprep.subr.mxu0 0.0
        %1821 = vmatpush1.msra.mxu0 0.0
        %1822 = vmatprep.subr.mxu0 0.0
        %1823 = vmatpush1.msra.mxu0 0.0
        %1824 = vmatprep.subr.mxu0 0.0
        %1825 = vmatpush1.msra.mxu0 0.0
        %1826 = vmatprep.subr.mxu0 0.0
        %1827 = vmatpush1.msra.mxu0 0.0
        %1828 = vmatprep.subr.mxu0 0.0
        %1829 = vmatpush1.msra.mxu0 0.0
        %1830 = vmatprep.subr.mxu0 0.0
        %1831 = vmatpush1.msra.mxu0 %v1795
        %1832 = vmatprep.subr.mxu0 0.0
        %1833 = vmatpush1.msra.mxu0 %v1794
        %1834 = vmatprep.subr.mxu0 0.0
        %1835 = vmatpush2.msra.mxu0 0.0
        %1836 = vmatprep.subr.mxu0 0.0
        %1837 = vmatpush2.msra.mxu0 0.0
        %1838 = vmatprep.subr.mxu0 0.0
        %1839 = vmatpush2.msra.mxu0 0.0
        %1840 = vmatprep.subr.mxu0 0.0
        %1841 = vmatpush2.msra.mxu0 0.0
        %1842 = vmatprep.subr.mxu0 0.0
        %1843 = vmatpush2.msra.mxu0 0.0
        %1844 = vmatprep.subr.mxu0 0.0
        %1845 = vmatpush2.msra.mxu0 0.0
        %1846 = vmatprep.subr.mxu0 0.0
        %1847 = vmatpush2.msra.mxu0 0.0
        %1848 = vmatprep.subr.mxu0 0.0
        %1849 = vmatpush2.msra.mxu0 0.0
        %1850 = vmatprep.subr.mxu0 0.0
        %1851 = vmatpush2.msra.mxu0 0.0
        %1852 = vmatprep.subr.mxu0 0.0
        %1853 = vmatpush2.msra.mxu0 0.0
        %1854 = vmatprep.subr.mxu0 0.0
        %1855 = vmatpush2.msra.mxu0 0.0
        %1856 = vmatprep.subr.mxu0 0.0
        %1857 = vmatpush2.msra.mxu0 0.0
        %1858 = vmatprep.subr.mxu0 0.0
        %1859 = vmatpush2.msra.mxu0 0.0
        %1860 = vmatprep.subr.mxu0 0.0
        %1861 = vmatpush2.msra.mxu0 0.0
        %1862 = vmatprep.subr.mxu0 0.0
        %1863 = vmatpush2.msra.mxu0 0.0
        %1864 = vmatprep.subr.mxu0 0.0
        %1865 = vmatpush2.msra.mxu0 0.0
        %1866 = vmatprep.mubr.f32.mxu0 0.0
        %1867 = vmatmul.mubr.f32.gmra.mxu0 %v1797
        %v1868 = vpop.f32.mrf.mxu0
        %v1869 = vadd.f32 0.0, %v1868
        %v1870 = vpop.f32.mrf.mxu0
        %1871 = vmatprep.mubr.f32.mxu0 0.0
        %1872 = vmatmul.mubr.f32.gmra.mxu0 %v1800
        %v1873 = vpop.f32.mrf.mxu0
        %v1874 = vadd.f32 0.0, %v1873
        %v1875 = vpop.f32.mrf.mxu0
        %1876 = vdwg.mxu0
        %v1877 = vsub.f32 %v1705, %v1786
        %v1878 = vsub.f32 %v1710, %v1791
        %v1879 = vsub.f32 %v1869, %v1705
        %v1880 = vsub.f32 %v1874, %v1710
        %v1881 = vsub.f32 %v1879, %v1786
        %v1882 = vsub.f32 %v1880, %v1791
        %1885 = vrot.lane.b32.xlu0 %v726, 16
        %v1886 = vpop.permute.xlu0 %1885
        %1887 = vrot.lane.b32.xlu0 %v727, 16
        %v1888 = vpop.permute.xlu0 %1887
        %1891 = vrot.lane.b32.xlu0 %v726, 32
        %v1892 = vpop.permute.xlu0 %1891
        %1893 = vrot.lane.b32.xlu0 %v727, 32
        %v1894 = vpop.permute.xlu0 %1893
        %1897 = vrot.lane.b32.xlu0 %v726, 48
        %v1898 = vpop.permute.xlu0 %1897
        %1899 = vrot.lane.b32.xlu0 %v727, 48
        %v1900 = vpop.permute.xlu0 %1899
        %v1903 = vsel %vm842, %v726, %v1886
        %v1904 = vsel %vm842, %v727, %v1888
        %v1905 = vsel %vm1544, %v1903, %v1892
        %v1906 = vsel %vm1544, %v1904, %v1894
        %v1907 = vsel %vm1547, %v1905, %v1898
        %v1908 = vsel %vm1547, %v1906, %v1900
        %1911 = vrot.lane.b32.xlu0 %v1877, 64
        %v1912 = vpop.permute.xlu0 %1911
        %1913 = vrot.lane.b32.xlu0 %v1878, 64
        %v1914 = vpop.permute.xlu0 %1913
        %v1917 = vsub.f32 %v1877, %v1912
        %v1918 = vsub.f32 %v1878, %v1914
        %1921 = vrot.lane.b32.xlu0 %v1917, 64
        %v1922 = vpop.permute.xlu0 %1921
        %1923 = vrot.lane.b32.xlu0 %v1918, 64
        %v1924 = vpop.permute.xlu0 %1923
        %v1927 = vmul.f32 %v1907, %v1922
        %v1928 = vmul.f32 %v1908, %v1924
        %v1929 = vadd.f32 %v1877, %v1927
        %v1930 = vadd.f32 %v1878, %v1928
        %1933 = vrot.lane.b32.xlu0 %v1881, 64
        %v1934 = vpop.permute.xlu0 %1933
        %1935 = vrot.lane.b32.xlu0 %v1882, 64
        %v1936 = vpop.permute.xlu0 %1935
        %v1939 = vsub.f32 %v1881, %v1934
        %v1940 = vsub.f32 %v1882, %v1936
        %1943 = vrot.lane.b32.xlu0 %v1939, 64
        %v1944 = vpop.permute.xlu0 %1943
        %1945 = vrot.lane.b32.xlu0 %v1940, 64
        %v1946 = vpop.permute.xlu0 %1945
        %v1949 = vmul.f32 %v1907, %v1944
        %v1950 = vmul.f32 %v1908, %v1946
        %v1951 = vadd.f32 %v1881, %v1949
        %v1952 = vadd.f32 %v1882, %v1950
        %v1954 = vsel %vm842, %v710, 0
        %v1957 = vsel %vm842, %v711, 0
        %1959 = vmatprep.subr.mxu0 0.0
        %1960 = vmatpush1.msra.mxu0 0.0
        %1961 = vmatprep.subr.mxu0 0.0
        %1962 = vmatpush1.msra.mxu0 0.0
        %1963 = vmatprep.subr.mxu0 0.0
        %1964 = vmatpush1.msra.mxu0 0.0
        %1965 = vmatprep.subr.mxu0 0.0
        %1966 = vmatpush1.msra.mxu0 0.0
        %1967 = vmatprep.subr.mxu0 0.0
        %1968 = vmatpush1.msra.mxu0 0.0
        %1969 = vmatprep.subr.mxu0 0.0
        %1970 = vmatpush1.msra.mxu0 0.0
        %1971 = vmatprep.subr.mxu0 0.0
        %1972 = vmatpush1.msra.mxu0 0.0
        %1973 = vmatprep.subr.mxu0 0.0
        %1974 = vmatpush1.msra.mxu0 0.0
        %1975 = vmatprep.subr.mxu0 0.0
        %1976 = vmatpush1.msra.mxu0 0.0
        %1977 = vmatprep.subr.mxu0 0.0
        %1978 = vmatpush1.msra.mxu0 0.0
        %1979 = vmatprep.subr.mxu0 0.0
        %1980 = vmatpush1.msra.mxu0 0.0
        %1981 = vmatprep.subr.mxu0 0.0
        %1982 = vmatpush1.msra.mxu0 0.0
        %1983 = vmatprep.subr.mxu0 0.0
        %1984 = vmatpush1.msra.mxu0 0.0
        %1985 = vmatprep.subr.mxu0 0.0
        %1986 = vmatpush1.msra.mxu0 0.0
        %1987 = vmatprep.subr.mxu0 0.0
        %1988 = vmatpush1.msra.mxu0 %v1930
        %1989 = vmatprep.subr.mxu0 0.0
        %1990 = vmatpush1.msra.mxu0 %v1929
        %1991 = vmatprep.subr.mxu0 0.0
        %1992 = vmatpush2.msra.mxu0 0.0
        %1993 = vmatprep.subr.mxu0 0.0
        %1994 = vmatpush2.msra.mxu0 0.0
        %1995 = vmatprep.subr.mxu0 0.0
        %1996 = vmatpush2.msra.mxu0 0.0
        %1997 = vmatprep.subr.mxu0 0.0
        %1998 = vmatpush2.msra.mxu0 0.0
        %1999 = vmatprep.subr.mxu0 0.0
        %2000 = vmatpush2.msra.mxu0 0.0
        %2001 = vmatprep.subr.mxu0 0.0
        %2002 = vmatpush2.msra.mxu0 0.0
        %2003 = vmatprep.subr.mxu0 0.0
        %2004 = vmatpush2.msra.mxu0 0.0
        %2005 = vmatprep.subr.mxu0 0.0
        %2006 = vmatpush2.msra.mxu0 0.0
        %2007 = vmatprep.subr.mxu0 0.0
        %2008 = vmatpush2.msra.mxu0 0.0
        %2009 = vmatprep.subr.mxu0 0.0
        %2010 = vmatpush2.msra.mxu0 0.0
        %2011 = vmatprep.subr.mxu0 0.0
        %2012 = vmatpush2.msra.mxu0 0.0
        %2013 = vmatprep.subr.mxu0 0.0
        %2014 = vmatpush2.msra.mxu0 0.0
        %2015 = vmatprep.subr.mxu0 0.0
        %2016 = vmatpush2.msra.mxu0 0.0
        %2017 = vmatprep.subr.mxu0 0.0
        %2018 = vmatpush2.msra.mxu0 0.0
        %2019 = vmatprep.subr.mxu0 0.0
        %2020 = vmatpush2.msra.mxu0 0.0
        %2021 = vmatprep.subr.mxu0 0.0
        %2022 = vmatpush2.msra.mxu0 0.0
        %2023 = vmatprep.mubr.f32.mxu0 0.0
        %2024 = vmatmul.mubr.f32.gmra.mxu0 %v1954
        %v2025 = vpop.f32.mrf.mxu0
        %v2026 = vadd.f32 0.0, %v2025
        %v2027 = vpop.f32.mrf.mxu0
        %2028 = vmatprep.mubr.f32.mxu0 0.0
        %2029 = vmatmul.mubr.f32.gmra.mxu0 %v1957
        %v2030 = vpop.f32.mrf.mxu0
        %v2031 = vadd.f32 0.0, %v2030
        %v2032 = vpop.f32.mrf.mxu0
        %2033 = vdwg.mxu0
        %v2035 = vsel %vm842, %v713, 0
        %v2038 = vsel %vm842, %v714, 0
        %2040 = vmatprep.subr.mxu0 0.0
        %2041 = vmatpush1.msra.mxu0 0.0
        %2042 = vmatprep.subr.mxu0 0.0
        %2043 = vmatpush1.msra.mxu0 0.0
        %2044 = vmatprep.subr.mxu0 0.0
        %2045 = vmatpush1.msra.mxu0 0.0
        %2046 = vmatprep.subr.mxu0 0.0
        %2047 = vmatpush1.msra.mxu0 0.0
        %2048 = vmatprep.subr.mxu0 0.0
        %2049 = vmatpush1.msra.mxu0 0.0
        %2050 = vmatprep.subr.mxu0 0.0
        %2051 = vmatpush1.msra.mxu0 0.0
        %2052 = vmatprep.subr.mxu0 0.0
        %2053 = vmatpush1.msra.mxu0 0.0
        %2054 = vmatprep.subr.mxu0 0.0
        %2055 = vmatpush1.msra.mxu0 0.0
        %2056 = vmatprep.subr.mxu0 0.0
        %2057 = vmatpush1.msra.mxu0 0.0
        %2058 = vmatprep.subr.mxu0 0.0
        %2059 = vmatpush1.msra.mxu0 0.0
        %2060 = vmatprep.subr.mxu0 0.0
        %2061 = vmatpush1.msra.mxu0 0.0
        %2062 = vmatprep.subr.mxu0 0.0
        %2063 = vmatpush1.msra.mxu0 0.0
        %2064 = vmatprep.subr.mxu0 0.0
        %2065 = vmatpush1.msra.mxu0 0.0
        %2066 = vmatprep.subr.mxu0 0.0
        %2067 = vmatpush1.msra.mxu0 0.0
        %2068 = vmatprep.subr.mxu0 0.0
        %2069 = vmatpush1.msra.mxu0 %v1952
        %2070 = vmatprep.subr.mxu0 0.0
        %2071 = vmatpush1.msra.mxu0 %v1951
        %2072 = vmatprep.subr.mxu0 0.0
        %2073 = vmatpush2.msra.mxu0 0.0
        %2074 = vmatprep.subr.mxu0 0.0
        %2075 = vmatpush2.msra.mxu0 0.0
        %2076 = vmatprep.subr.mxu0 0.0
        %2077 = vmatpush2.msra.mxu0 0.0
        %2078 = vmatprep.subr.mxu0 0.0
        %2079 = vmatpush2.msra.mxu0 0.0
        %2080 = vmatprep.subr.mxu0 0.0
        %2081 = vmatpush2.msra.mxu0 0.0
        %2082 = vmatprep.subr.mxu0 0.0
        %2083 = vmatpush2.msra.mxu0 0.0
        %2084 = vmatprep.subr.mxu0 0.0
        %2085 = vmatpush2.msra.mxu0 0.0
        %2086 = vmatprep.subr.mxu0 0.0
        %2087 = vmatpush2.msra.mxu0 0.0
        %2088 = vmatprep.subr.mxu0 0.0
        %2089 = vmatpush2.msra.mxu0 0.0
        %2090 = vmatprep.subr.mxu0 0.0
        %2091 = vmatpush2.msra.mxu0 0.0
        %2092 = vmatprep.subr.mxu0 0.0
        %2093 = vmatpush2.msra.mxu0 0.0
        %2094 = vmatprep.subr.mxu0 0.0
        %2095 = vmatpush2.msra.mxu0 0.0
        %2096 = vmatprep.subr.mxu0 0.0
        %2097 = vmatpush2.msra.mxu0 0.0
        %2098 = vmatprep.subr.mxu0 0.0
        %2099 = vmatpush2.msra.mxu0 0.0
        %2100 = vmatprep.subr.mxu0 0.0
        %2101 = vmatpush2.msra.mxu0 0.0
        %2102 = vmatprep.subr.mxu0 0.0
        %2103 = vmatpush2.msra.mxu0 0.0
        %2104 = vmatprep.mubr.f32.mxu0 0.0
        %2105 = vmatmul.mubr.f32.gmra.mxu0 %v2035
        %v2106 = vpop.f32.mrf.mxu0
        %v2107 = vadd.f32 0.0, %v2106
        %v2108 = vpop.f32.mrf.mxu0
        %2109 = vmatprep.mubr.f32.mxu0 0.0
        %2110 = vmatmul.mubr.f32.gmra.mxu0 %v2038
        %v2111 = vpop.f32.mrf.mxu0
        %v2112 = vadd.f32 0.0, %v2111
        %v2113 = vpop.f32.mrf.mxu0
        %2114 = vdwg.mxu0
        %v2115 = vadd.f32 %v1929, %v1951
        %v2116 = vadd.f32 %v1930, %v1952
        %v2118 = vsel %vm842, %v716, 0
        %v2121 = vsel %vm842, %v717, 0
        %2123 = vmatprep.subr.mxu0 0.0
        %2124 = vmatpush1.msra.mxu0 0.0
        %2125 = vmatprep.subr.mxu0 0.0
        %2126 = vmatpush1.msra.mxu0 0.0
        %2127 = vmatprep.subr.mxu0 0.0
        %2128 = vmatpush1.msra.mxu0 0.0
        %2129 = vmatprep.subr.mxu0 0.0
        %2130 = vmatpush1.msra.mxu0 0.0
        %2131 = vmatprep.subr.mxu0 0.0
        %2132 = vmatpush1.msra.mxu0 0.0
        %2133 = vmatprep.subr.mxu0 0.0
        %2134 = vmatpush1.msra.mxu0 0.0
        %2135 = vmatprep.subr.mxu0 0.0
        %2136 = vmatpush1.msra.mxu0 0.0
        %2137 = vmatprep.subr.mxu0 0.0
        %2138 = vmatpush1.msra.mxu0 0.0
        %2139 = vmatprep.subr.mxu0 0.0
        %2140 = vmatpush1.msra.mxu0 0.0
        %2141 = vmatprep.subr.mxu0 0.0
        %2142 = vmatpush1.msra.mxu0 0.0
        %2143 = vmatprep.subr.mxu0 0.0
        %2144 = vmatpush1.msra.mxu0 0.0
        %2145 = vmatprep.subr.mxu0 0.0
        %2146 = vmatpush1.msra.mxu0 0.0
        %2147 = vmatprep.subr.mxu0 0.0
        %2148 = vmatpush1.msra.mxu0 0.0
        %2149 = vmatprep.subr.mxu0 0.0
        %2150 = vmatpush1.msra.mxu0 0.0
        %2151 = vmatprep.subr.mxu0 0.0
        %2152 = vmatpush1.msra.mxu0 %v2116
        %2153 = vmatprep.subr.mxu0 0.0
        %2154 = vmatpush1.msra.mxu0 %v2115
        %2155 = vmatprep.subr.mxu0 0.0
        %2156 = vmatpush2.msra.mxu0 0.0
        %2157 = vmatprep.subr.mxu0 0.0
        %2158 = vmatpush2.msra.mxu0 0.0
        %2159 = vmatprep.subr.mxu0 0.0
        %2160 = vmatpush2.msra.mxu0 0.0
        %2161 = vmatprep.subr.mxu0 0.0
        %2162 = vmatpush2.msra.mxu0 0.0
        %2163 = vmatprep.subr.mxu0 0.0
        %2164 = vmatpush2.msra.mxu0 0.0
        %2165 = vmatprep.subr.mxu0 0.0
        %2166 = vmatpush2.msra.mxu0 0.0
        %2167 = vmatprep.subr.mxu0 0.0
        %2168 = vmatpush2.msra.mxu0 0.0
        %2169 = vmatprep.subr.mxu0 0.0
        %2170 = vmatpush2.msra.mxu0 0.0
        %2171 = vmatprep.subr.mxu0 0.0
        %2172 = vmatpush2.msra.mxu0 0.0
        %2173 = vmatprep.subr.mxu0 0.0
        %2174 = vmatpush2.msra.mxu0 0.0
        %2175 = vmatprep.subr.mxu0 0.0
        %2176 = vmatpush2.msra.mxu0 0.0
        %2177 = vmatprep.subr.mxu0 0.0
        %2178 = vmatpush2.msra.mxu0 0.0
        %2179 = vmatprep.subr.mxu0 0.0
        %2180 = vmatpush2.msra.mxu0 0.0
        %2181 = vmatprep.subr.mxu0 0.0
        %2182 = vmatpush2.msra.mxu0 0.0
        %2183 = vmatprep.subr.mxu0 0.0
        %2184 = vmatpush2.msra.mxu0 0.0
        %2185 = vmatprep.subr.mxu0 0.0
        %2186 = vmatpush2.msra.mxu0 0.0
        %2187 = vmatprep.mubr.f32.mxu0 0.0
        %2188 = vmatmul.mubr.f32.gmra.mxu0 %v2118
        %v2189 = vpop.f32.mrf.mxu0
        %v2190 = vadd.f32 0.0, %v2189
        %v2191 = vpop.f32.mrf.mxu0
        %2192 = vmatprep.mubr.f32.mxu0 0.0
        %2193 = vmatmul.mubr.f32.gmra.mxu0 %v2121
        %v2194 = vpop.f32.mrf.mxu0
        %v2195 = vadd.f32 0.0, %v2194
        %v2196 = vpop.f32.mrf.mxu0
        %2197 = vdwg.mxu0
        %v2198 = vsub.f32 %v2026, %v2107
        %v2199 = vsub.f32 %v2031, %v2112
        %v2200 = vsub.f32 %v2190, %v2026
        %v2201 = vsub.f32 %v2195, %v2031
        %v2202 = vsub.f32 %v2200, %v2107
        %v2203 = vsub.f32 %v2201, %v2112
        %2206 = vrot.lane.b32.xlu0 %v2198, 112
        %v2207 = vpop.permute.xlu0 %2206
        %2208 = vrot.lane.b32.xlu0 %v2199, 112
        %v2209 = vpop.permute.xlu0 %2208
        %2212 = vrot.lane.b32.xlu0 %v2198, 96
        %v2213 = vpop.permute.xlu0 %2212
        %2214 = vrot.lane.b32.xlu0 %v2199, 96
        %v2215 = vpop.permute.xlu0 %2214
        %2218 = vrot.lane.b32.xlu0 %v2198, 80
        %v2219 = vpop.permute.xlu0 %2218
        %2220 = vrot.lane.b32.xlu0 %v2199, 80
        %v2221 = vpop.permute.xlu0 %2220
        %2226 = vrot.lane.b32.xlu0 %v2202, 112
        %v2227 = vpop.permute.xlu0 %2226
        %2228 = vrot.lane.b32.xlu0 %v2203, 112
        %v2229 = vpop.permute.xlu0 %2228
        %2232 = vrot.lane.b32.xlu0 %v2202, 96
        %v2233 = vpop.permute.xlu0 %2232
        %2234 = vrot.lane.b32.xlu0 %v2203, 96
        %v2235 = vpop.permute.xlu0 %2234
        %2238 = vrot.lane.b32.xlu0 %v2202, 80
        %v2239 = vpop.permute.xlu0 %2238
        %2240 = vrot.lane.b32.xlu0 %v2203, 80
        %v2241 = vpop.permute.xlu0 %2240
        %v2244 = vsel %vm842, %v2198, 0
        %v2246 = vsel %vm842, %v2199, 0
        %v2248 = vsel %vm842, %v2207, 0
        %v2250 = vsel %vm842, %v2209, 0
        %v2252 = vsel %vm842, %v2213, 0
        %v2254 = vsel %vm842, %v2215, 0
        %v2256 = vsel %vm842, %v2219, 0
        %v2258 = vsel %vm842, %v2221, 0
        %2260 = vmatprep.subr.mxu0 0.0
        %2261 = vmatpush1.msra.mxu0 0.0
        %2262 = vmatprep.subr.mxu0 0.0
        %2263 = vmatpush1.msra.mxu0 0.0
        %2264 = vmatprep.subr.mxu0 0.0
        %2265 = vmatpush1.msra.mxu0 0.0
        %2266 = vmatprep.subr.mxu0 0.0
        %2267 = vmatpush1.msra.mxu0 0.0
        %2268 = vmatprep.subr.mxu0 0.0
        %2269 = vmatpush1.msra.mxu0 0.0
        %2270 = vmatprep.subr.mxu0 0.0
        %2271 = vmatpush1.msra.mxu0 0.0
        %2272 = vmatprep.subr.mxu0 0.0
        %2273 = vmatpush1.msra.mxu0 0.0
        %2274 = vmatprep.subr.mxu0 0.0
        %2275 = vmatpush1.msra.mxu0 0.0
        %2276 = vmatprep.subr.mxu0 0.0
        %2277 = vmatpush1.msra.mxu0 0.0
        %2278 = vmatprep.subr.mxu0 0.0
        %2279 = vmatpush1.msra.mxu0 0.0
        %2280 = vmatprep.subr.mxu0 0.0
        %2281 = vmatpush1.msra.mxu0 0.0
        %2282 = vmatprep.subr.mxu0 0.0
        %2283 = vmatpush1.msra.mxu0 0.0
        %2284 = vmatprep.subr.mxu0 0.0
        %2285 = vmatpush1.msra.mxu0 0.0
        %2286 = vmatprep.subr.mxu0 0.0
        %2287 = vmatpush1.msra.mxu0 0.0
        %2288 = vmatprep.subr.mxu0 0.0
        %2289 = vmatpush1.msra.mxu0 %v719
        %2290 = vmatprep.subr.mxu0 0.0
        %2291 = vmatpush1.msra.mxu0 %v718
        %2292 = vmatprep.subr.mxu0 0.0
        %2293 = vmatpush2.msra.mxu0 0.0
        %2294 = vmatprep.subr.mxu0 0.0
        %2295 = vmatpush2.msra.mxu0 0.0
        %2296 = vmatprep.subr.mxu0 0.0
        %2297 = vmatpush2.msra.mxu0 0.0
        %2298 = vmatprep.subr.mxu0 0.0
        %2299 = vmatpush2.msra.mxu0 0.0
        %2300 = vmatprep.subr.mxu0 0.0
        %2301 = vmatpush2.msra.mxu0 0.0
        %2302 = vmatprep.subr.mxu0 0.0
        %2303 = vmatpush2.msra.mxu0 0.0
        %2304 = vmatprep.subr.mxu0 0.0
        %2305 = vmatpush2.msra.mxu0 0.0
        %2306 = vmatprep.subr.mxu0 0.0
        %2307 = vmatpush2.msra.mxu0 0.0
        %2308 = vmatprep.subr.mxu0 0.0
        %2309 = vmatpush2.msra.mxu0 0.0
        %2310 = vmatprep.subr.mxu0 0.0
        %2311 = vmatpush2.msra.mxu0 0.0
        %2312 = vmatprep.subr.mxu0 0.0
        %2313 = vmatpush2.msra.mxu0 0.0
        %2314 = vmatprep.subr.mxu0 0.0
        %2315 = vmatpush2.msra.mxu0 0.0
        %2316 = vmatprep.subr.mxu0 0.0
        %2317 = vmatpush2.msra.mxu0 0.0
        %2318 = vmatprep.subr.mxu0 0.0
        %2319 = vmatpush2.msra.mxu0 0.0
        %2320 = vmatprep.subr.mxu0 0.0
        %2321 = vmatpush2.msra.mxu0 0.0
        %2322 = vmatprep.subr.mxu0 0.0
        %2323 = vmatpush2.msra.mxu0 0.0
        %2324 = vmatprep.mubr.f32.mxu0 0.0
        %2325 = vmatmul.mubr.f32.gmra.mxu0 %v2244
        %v2326 = vpop.f32.mrf.mxu0
        %v2327 = vadd.f32 0.0, %v2326
        %v2328 = vpop.f32.mrf.mxu0
        %2329 = vmatprep.mubr.f32.mxu0 0.0
        %2330 = vmatmul.mubr.f32.gmra.mxu0 %v2246
        %v2331 = vpop.f32.mrf.mxu0
        %v2332 = vadd.f32 0.0, %v2331
        %v2333 = vpop.f32.mrf.mxu0
        %2334 = vmatprep.mubr.f32.mxu0 0.0
        %2335 = vmatmul.mubr.f32.gmra.mxu0 %v2248
        %v2336 = vpop.f32.mrf.mxu0
        %v2337 = vadd.f32 0.0, %v2336
        %v2338 = vpop.f32.mrf.mxu0
        %2339 = vmatprep.mubr.f32.mxu0 0.0
        %2340 = vmatmul.mubr.f32.gmra.mxu0 %v2250
        %v2341 = vpop.f32.mrf.mxu0
        %v2342 = vadd.f32 0.0, %v2341
        %v2343 = vpop.f32.mrf.mxu0
        %2344 = vmatprep.mubr.f32.mxu0 0.0
        %2345 = vmatmul.mubr.f32.gmra.mxu0 %v2252
        %v2346 = vpop.f32.mrf.mxu0
        %v2347 = vadd.f32 0.0, %v2346
        %v2348 = vpop.f32.mrf.mxu0
        %2349 = vmatprep.mubr.f32.mxu0 0.0
        %2350 = vmatmul.mubr.f32.gmra.mxu0 %v2254
        %v2351 = vpop.f32.mrf.mxu0
        %v2352 = vadd.f32 0.0, %v2351
        %v2353 = vpop.f32.mrf.mxu0
        %2354 = vmatprep.mubr.f32.mxu0 0.0
        %2355 = vmatmul.mubr.f32.gmra.mxu0 %v2256
        %v2356 = vpop.f32.mrf.mxu0
        %v2357 = vadd.f32 0.0, %v2356
        %v2358 = vpop.f32.mrf.mxu0
        %2359 = vmatprep.mubr.f32.mxu0 0.0
        %2360 = vmatmul.mubr.f32.gmra.mxu0 %v2258
        %v2361 = vpop.f32.mrf.mxu0
        %v2362 = vadd.f32 0.0, %v2361
        %v2363 = vpop.f32.mrf.mxu0
        %2364 = vdwg.mxu0
        %v2365 = vsel %vm842, %v2202, 0
        %v2367 = vsel %vm842, %v2203, 0
        %v2369 = vsel %vm842, %v2227, 0
        %v2371 = vsel %vm842, %v2229, 0
        %v2373 = vsel %vm842, %v2233, 0
        %v2375 = vsel %vm842, %v2235, 0
        %v2377 = vsel %vm842, %v2239, 0
        %v2379 = vsel %vm842, %v2241, 0
        %2381 = vmatprep.subr.mxu0 0.0
        %2382 = vmatpush1.msra.mxu0 0.0
        %2383 = vmatprep.subr.mxu0 0.0
        %2384 = vmatpush1.msra.mxu0 0.0
        %2385 = vmatprep.subr.mxu0 0.0
        %2386 = vmatpush1.msra.mxu0 0.0
        %2387 = vmatprep.subr.mxu0 0.0
        %2388 = vmatpush1.msra.mxu0 0.0
        %2389 = vmatprep.subr.mxu0 0.0
        %2390 = vmatpush1.msra.mxu0 0.0
        %2391 = vmatprep.subr.mxu0 0.0
        %2392 = vmatpush1.msra.mxu0 0.0
        %2393 = vmatprep.subr.mxu0 0.0
        %2394 = vmatpush1.msra.mxu0 0.0
        %2395 = vmatprep.subr.mxu0 0.0
        %2396 = vmatpush1.msra.mxu0 0.0
        %2397 = vmatprep.subr.mxu0 0.0
        %2398 = vmatpush1.msra.mxu0 0.0
        %2399 = vmatprep.subr.mxu0 0.0
        %2400 = vmatpush1.msra.mxu0 0.0
        %2401 = vmatprep.subr.mxu0 0.0
        %2402 = vmatpush1.msra.mxu0 0.0
        %2403 = vmatprep.subr.mxu0 0.0
        %2404 = vmatpush1.msra.mxu0 0.0
        %2405 = vmatprep.subr.mxu0 0.0
        %2406 = vmatpush1.msra.mxu0 0.0
        %2407 = vmatprep.subr.mxu0 0.0
        %2408 = vmatpush1.msra.mxu0 0.0
        %2409 = vmatprep.subr.mxu0 0.0
        %2410 = vmatpush1.msra.mxu0 %v722
        %2411 = vmatprep.subr.mxu0 0.0
        %2412 = vmatpush1.msra.mxu0 %v721
        %2413 = vmatprep.subr.mxu0 0.0
        %2414 = vmatpush2.msra.mxu0 0.0
        %2415 = vmatprep.subr.mxu0 0.0
        %2416 = vmatpush2.msra.mxu0 0.0
        %2417 = vmatprep.subr.mxu0 0.0
        %2418 = vmatpush2.msra.mxu0 0.0
        %2419 = vmatprep.subr.mxu0 0.0
        %2420 = vmatpush2.msra.mxu0 0.0
        %2421 = vmatprep.subr.mxu0 0.0
        %2422 = vmatpush2.msra.mxu0 0.0
        %2423 = vmatprep.subr.mxu0 0.0
        %2424 = vmatpush2.msra.mxu0 0.0
        %2425 = vmatprep.subr.mxu0 0.0
        %2426 = vmatpush2.msra.mxu0 0.0
        %2427 = vmatprep.subr.mxu0 0.0
        %2428 = vmatpush2.msra.mxu0 0.0
        %2429 = vmatprep.subr.mxu0 0.0
        %2430 = vmatpush2.msra.mxu0 0.0
        %2431 = vmatprep.subr.mxu0 0.0
        %2432 = vmatpush2.msra.mxu0 0.0
        %2433 = vmatprep.subr.mxu0 0.0
        %2434 = vmatpush2.msra.mxu0 0.0
        %2435 = vmatprep.subr.mxu0 0.0
        %2436 = vmatpush2.msra.mxu0 0.0
        %2437 = vmatprep.subr.mxu0 0.0
        %2438 = vmatpush2.msra.mxu0 0.0
        %2439 = vmatprep.subr.mxu0 0.0
        %2440 = vmatpush2.msra.mxu0 0.0
        %2441 = vmatprep.subr.mxu0 0.0
        %2442 = vmatpush2.msra.mxu0 0.0
        %2443 = vmatprep.subr.mxu0 0.0
        %2444 = vmatpush2.msra.mxu0 0.0
        %2445 = vmatprep.mubr.f32.mxu0 0.0
        %2446 = vmatmul.mubr.f32.gmra.mxu0 %v2365
        %v2447 = vpop.f32.mrf.mxu0
        %v2448 = vadd.f32 0.0, %v2447
        %v2449 = vpop.f32.mrf.mxu0
        %2450 = vmatprep.mubr.f32.mxu0 0.0
        %2451 = vmatmul.mubr.f32.gmra.mxu0 %v2367
        %v2452 = vpop.f32.mrf.mxu0
        %v2453 = vadd.f32 0.0, %v2452
        %v2454 = vpop.f32.mrf.mxu0
        %2455 = vmatprep.mubr.f32.mxu0 0.0
        %2456 = vmatmul.mubr.f32.gmra.mxu0 %v2369
        %v2457 = vpop.f32.mrf.mxu0
        %v2458 = vadd.f32 0.0, %v2457
        %v2459 = vpop.f32.mrf.mxu0
        %2460 = vmatprep.mubr.f32.mxu0 0.0
        %2461 = vmatmul.mubr.f32.gmra.mxu0 %v2371
        %v2462 = vpop.f32.mrf.mxu0
        %v2463 = vadd.f32 0.0, %v2462
        %v2464 = vpop.f32.mrf.mxu0
        %2465 = vmatprep.mubr.f32.mxu0 0.0
        %2466 = vmatmul.mubr.f32.gmra.mxu0 %v2373
        %v2467 = vpop.f32.mrf.mxu0
        %v2468 = vadd.f32 0.0, %v2467
        %v2469 = vpop.f32.mrf.mxu0
        %2470 = vmatprep.mubr.f32.mxu0 0.0
        %2471 = vmatmul.mubr.f32.gmra.mxu0 %v2375
        %v2472 = vpop.f32.mrf.mxu0
        %v2473 = vadd.f32 0.0, %v2472
        %v2474 = vpop.f32.mrf.mxu0
        %2475 = vmatprep.mubr.f32.mxu0 0.0
        %2476 = vmatmul.mubr.f32.gmra.mxu0 %v2377
        %v2477 = vpop.f32.mrf.mxu0
        %v2478 = vadd.f32 0.0, %v2477
        %v2479 = vpop.f32.mrf.mxu0
        %2480 = vmatprep.mubr.f32.mxu0 0.0
        %2481 = vmatmul.mubr.f32.gmra.mxu0 %v2379
        %v2482 = vpop.f32.mrf.mxu0
        %v2483 = vadd.f32 0.0, %v2482
        %v2484 = vpop.f32.mrf.mxu0
        %2485 = vdwg.mxu0
        %v2486 = vadd.f32 %v2198, %v2202
        %v2487 = vadd.f32 %v2199, %v2203
        %v2488 = vadd.f32 %v2207, %v2227
        %v2489 = vadd.f32 %v2209, %v2229
        %v2490 = vadd.f32 %v2213, %v2233
        %v2491 = vadd.f32 %v2215, %v2235
        %v2492 = vadd.f32 %v2219, %v2239
        %v2493 = vadd.f32 %v2221, %v2241
        %v2495 = vsel %vm842, %v2486, 0
        %v2498 = vsel %vm842, %v2487, 0
        %v2501 = vsel %vm842, %v2488, 0
        %v2504 = vsel %vm842, %v2489, 0
        %v2507 = vsel %vm842, %v2490, 0
        %v2510 = vsel %vm842, %v2491, 0
        %v2513 = vsel %vm842, %v2492, 0
        %v2516 = vsel %vm842, %v2493, 0
        %2518 = vmatprep.subr.mxu0 0.0
        %2519 = vmatpush1.msra.mxu0 0.0
        %2520 = vmatprep.subr.mxu0 0.0
        %2521 = vmatpush1.msra.mxu0 0.0
        %2522 = vmatprep.subr.mxu0 0.0
        %2523 = vmatpush1.msra.mxu0 0.0
        %2524 = vmatprep.subr.mxu0 0.0
        %2525 = vmatpush1.msra.mxu0 0.0
        %2526 = vmatprep.subr.mxu0 0.0
        %2527 = vmatpush1.msra.mxu0 0.0
        %2528 = vmatprep.subr.mxu0 0.0
        %2529 = vmatpush1.msra.mxu0 0.0
        %2530 = vmatprep.subr.mxu0 0.0
        %2531 = vmatpush1.msra.mxu0 0.0
        %2532 = vmatprep.subr.mxu0 0.0
        %2533 = vmatpush1.msra.mxu0 0.0
        %2534 = vmatprep.subr.mxu0 0.0
        %2535 = vmatpush1.msra.mxu0 0.0
        %2536 = vmatprep.subr.mxu0 0.0
        %2537 = vmatpush1.msra.mxu0 0.0
        %2538 = vmatprep.subr.mxu0 0.0
        %2539 = vmatpush1.msra.mxu0 0.0
        %2540 = vmatprep.subr.mxu0 0.0
        %2541 = vmatpush1.msra.mxu0 0.0
        %2542 = vmatprep.subr.mxu0 0.0
        %2543 = vmatpush1.msra.mxu0 0.0
        %2544 = vmatprep.subr.mxu0 0.0
        %2545 = vmatpush1.msra.mxu0 0.0
        %2546 = vmatprep.subr.mxu0 0.0
        %2547 = vmatpush1.msra.mxu0 %v725
        %2548 = vmatprep.subr.mxu0 0.0
        %2549 = vmatpush1.msra.mxu0 %v724
        %2550 = vmatprep.subr.mxu0 0.0
        %2551 = vmatpush2.msra.mxu0 0.0
        %2552 = vmatprep.subr.mxu0 0.0
        %2553 = vmatpush2.msra.mxu0 0.0
        %2554 = vmatprep.subr.mxu0 0.0
        %2555 = vmatpush2.msra.mxu0 0.0
        %2556 = vmatprep.subr.mxu0 0.0
        %2557 = vmatpush2.msra.mxu0 0.0
        %2558 = vmatprep.subr.mxu0 0.0
        %2559 = vmatpush2.msra.mxu0 0.0
        %2560 = vmatprep.subr.mxu0 0.0
        %2561 = vmatpush2.msra.mxu0 0.0
        %2562 = vmatprep.subr.mxu0 0.0
        %2563 = vmatpush2.msra.mxu0 0.0
        %2564 = vmatprep.subr.mxu0 0.0
        %2565 = vmatpush2.msra.mxu0 0.0
        %2566 = vmatprep.subr.mxu0 0.0
        %2567 = vmatpush2.msra.mxu0 0.0
        %2568 = vmatprep.subr.mxu0 0.0
        %2569 = vmatpush2.msra.mxu0 0.0
        %2570 = vmatprep.subr.mxu0 0.0
        %2571 = vmatpush2.msra.mxu0 0.0
        %2572 = vmatprep.subr.mxu0 0.0
        %2573 = vmatpush2.msra.mxu0 0.0
        %2574 = vmatprep.subr.mxu0 0.0
        %2575 = vmatpush2.msra.mxu0 0.0
        %2576 = vmatprep.subr.mxu0 0.0
        %2577 = vmatpush2.msra.mxu0 0.0
        %2578 = vmatprep.subr.mxu0 0.0
        %2579 = vmatpush2.msra.mxu0 0.0
        %2580 = vmatprep.subr.mxu0 0.0
        %2581 = vmatpush2.msra.mxu0 0.0
        %2582 = vmatprep.mubr.f32.mxu0 0.0
        %2583 = vmatmul.mubr.f32.gmra.mxu0 %v2495
        %v2584 = vpop.f32.mrf.mxu0
        %v2585 = vadd.f32 0.0, %v2584
        %v2586 = vpop.f32.mrf.mxu0
        %2587 = vmatprep.mubr.f32.mxu0 0.0
        %2588 = vmatmul.mubr.f32.gmra.mxu0 %v2498
        %v2589 = vpop.f32.mrf.mxu0
        %v2590 = vadd.f32 0.0, %v2589
        %v2591 = vpop.f32.mrf.mxu0
        %2592 = vmatprep.mubr.f32.mxu0 0.0
        %2593 = vmatmul.mubr.f32.gmra.mxu0 %v2501
        %v2594 = vpop.f32.mrf.mxu0
        %v2595 = vadd.f32 0.0, %v2594
        %v2596 = vpop.f32.mrf.mxu0
        %2597 = vmatprep.mubr.f32.mxu0 0.0
        %2598 = vmatmul.mubr.f32.gmra.mxu0 %v2504
        %v2599 = vpop.f32.mrf.mxu0
        %v2600 = vadd.f32 0.0, %v2599
        %v2601 = vpop.f32.mrf.mxu0
        %2602 = vmatprep.mubr.f32.mxu0 0.0
        %2603 = vmatmul.mubr.f32.gmra.mxu0 %v2507
        %v2604 = vpop.f32.mrf.mxu0
        %v2605 = vadd.f32 0.0, %v2604
        %v2606 = vpop.f32.mrf.mxu0
        %2607 = vmatprep.mubr.f32.mxu0 0.0
        %2608 = vmatmul.mubr.f32.gmra.mxu0 %v2510
        %v2609 = vpop.f32.mrf.mxu0
        %v2610 = vadd.f32 0.0, %v2609
        %v2611 = vpop.f32.mrf.mxu0
        %2612 = vmatprep.mubr.f32.mxu0 0.0
        %2613 = vmatmul.mubr.f32.gmra.mxu0 %v2513
        %v2614 = vpop.f32.mrf.mxu0
        %v2615 = vadd.f32 0.0, %v2614
        %v2616 = vpop.f32.mrf.mxu0
        %2617 = vmatprep.mubr.f32.mxu0 0.0
        %2618 = vmatmul.mubr.f32.gmra.mxu0 %v2516
        %v2619 = vpop.f32.mrf.mxu0
        %v2620 = vadd.f32 0.0, %v2619
        %v2621 = vpop.f32.mrf.mxu0
        %2622 = vdwg.mxu0
        %v2623 = vsub.f32 %v2327, %v2448
        %v2624 = vsub.f32 %v2332, %v2453
        %v2625 = vsub.f32 %v2337, %v2458
        %v2626 = vsub.f32 %v2342, %v2463
        %v2627 = vsub.f32 %v2347, %v2468
        %v2628 = vsub.f32 %v2352, %v2473
        %v2629 = vsub.f32 %v2357, %v2478
        %v2630 = vsub.f32 %v2362, %v2483
        %v2631 = vsub.f32 %v2585, %v2327
        %v2632 = vsub.f32 %v2590, %v2332
        %v2633 = vsub.f32 %v2595, %v2337
        %v2634 = vsub.f32 %v2600, %v2342
        %v2635 = vsub.f32 %v2605, %v2347
        %v2636 = vsub.f32 %v2610, %v2352
        %v2637 = vsub.f32 %v2615, %v2357
        %v2638 = vsub.f32 %v2620, %v2362
        %v2639 = vsub.f32 %v2631, %v2448
        %v2640 = vsub.f32 %v2632, %v2453
        %v2641 = vsub.f32 %v2633, %v2458
        %v2642 = vsub.f32 %v2634, %v2463
        %v2643 = vsub.f32 %v2635, %v2468
        %v2644 = vsub.f32 %v2636, %v2473
        %v2645 = vsub.f32 %v2637, %v2478
        %v2646 = vsub.f32 %v2638, %v2483
        %v2647 = vmul.f32 %v732, %v2623
        %v2648 = vmul.f32 %v733, %v2624
        %v2649 = vadd.f32 %v2647, 0.0
        %v2650 = vadd.f32 %v2648, 0.0
        %v2651 = vmul.f32 %v734, %v2639
        %v2652 = vmul.f32 %v735, %v2640
        %v2653 = vadd.f32 %v2649, %v2651
        %v2654 = vadd.f32 %v2650, %v2652
        %v2655 = vmul.f32 %v732, %v2639
        %v2656 = vmul.f32 %v733, %v2640
        %v2657 = vadd.f32 %v2655, 0.0
        %v2658 = vadd.f32 %v2656, 0.0
        %v2659 = vmul.f32 %v734, %v2623
        %v2660 = vmul.f32 %v735, %v2624
        %v2661 = vsub.f32 %v2657, %v2659
        %v2662 = vsub.f32 %v2658, %v2660
        %v2663 = vmul.f32 %v755, %v2625
        %v2664 = vmul.f32 %v756, %v2626
        %v2665 = vadd.f32 %v2653, %v2663
        %v2666 = vadd.f32 %v2654, %v2664
        %v2667 = vmul.f32 %v758, %v2641
        %v2668 = vmul.f32 %v759, %v2642
        %v2669 = vadd.f32 %v2665, %v2667
        %v2670 = vadd.f32 %v2666, %v2668
        %v2671 = vmul.f32 %v755, %v2641
        %v2672 = vmul.f32 %v756, %v2642
        %v2673 = vadd.f32 %v2661, %v2671
        %v2674 = vadd.f32 %v2662, %v2672
        %v2675 = vmul.f32 %v758, %v2625
        %v2676 = vmul.f32 %v759, %v2626
        %v2677 = vsub.f32 %v2673, %v2675
        %v2678 = vsub.f32 %v2674, %v2676
        %v2679 = vmul.f32 %v779, %v2627
        %v2680 = vmul.f32 %v780, %v2628
        %v2681 = vadd.f32 %v2669, %v2679
        %v2682 = vadd.f32 %v2670, %v2680
        %v2683 = vmul.f32 %v782, %v2643
        %v2684 = vmul.f32 %v783, %v2644
        %v2685 = vadd.f32 %v2681, %v2683
        %v2686 = vadd.f32 %v2682, %v2684
        %v2687 = vmul.f32 %v779, %v2643
        %v2688 = vmul.f32 %v780, %v2644
        %v2689 = vadd.f32 %v2677, %v2687
        %v2690 = vadd.f32 %v2678, %v2688
        %v2691 = vmul.f32 %v782, %v2627
        %v2692 = vmul.f32 %v783, %v2628
        %v2693 = vsub.f32 %v2689, %v2691
        %v2694 = vsub.f32 %v2690, %v2692
        %v2695 = vmul.f32 %v803, %v2629
        %v2696 = vmul.f32 %v804, %v2630
        %v2697 = vadd.f32 %v2685, %v2695
        %v2698 = vadd.f32 %v2686, %v2696
        %v2699 = vmul.f32 %v806, %v2645
        %v2700 = vmul.f32 %v807, %v2646
        %v2701 = vadd.f32 %v2697, %v2699
        %v2702 = vadd.f32 %v2698, %v2700
        %v2703 = vmul.f32 %v803, %v2645
        %v2704 = vmul.f32 %v804, %v2646
        %v2705 = vadd.f32 %v2693, %v2703
        %v2706 = vadd.f32 %v2694, %v2704
        %v2707 = vmul.f32 %v806, %v2629
        %v2708 = vmul.f32 %v807, %v2630
        %v2709 = vsub.f32 %v2705, %v2707
        %v2710 = vsub.f32 %v2706, %v2708
        %2711 = vst.msk [vmem:[%s693] sm:$0xff] %vm842, %v2701
        %2712 = vst.msk [vmem:[%s693 + $0x8] sm:$0xff] %vm842, %v2702
        %s2713 = scalar_lea.vmem %s693, 16 [#allocation20]
        %2714 = vst.msk [vmem:[%s2713] sm:$0xff] %vm842, %v2709
        %2715 = vst.msk [vmem:[%s2713 + $0x8] sm:$0xff] %vm842, %v2710
        %s2716 = sand.u32 %s313, 1
        %s2717 = scalar_lea.sflag [#allocation4], %s2716
        %s2718 = sand.u32 %s313, 1
        %s2719 = smul.addr %s2718, 32
        %s2720 = scalar_lea.vmem [#allocation20], %s2719
        // Predicated region
        $region109: #{tpu_custom_call.1} parent=63 // pred_check
          %p2721 = pneg %p323
        $region110: #{tpu_custom_call.1} parent=63 // pred_check_branch
          %2723 = sbr.rel (%p2721) target = $region112
        $region111: #{tpu_custom_call.1} parent=63 // pred_region
          %s2725 = ssub.s32 512, 512
          %2726 = vsyncadd %s2717, %s2725
          %s2727 = smul.addr %s39, 4
          %s2728 = smul.addr %s2727, 128
          %s2729 = scalar_lea.hbm %s11, %s2728
          %s2730 = sshll.u32 %s2720, 4
          %s2731 = int_to_ptr.vmem [resolvable:$true] %s2730
          %2736 = dma.vmem_to_hbm [thread:$0]  %s2731, 512, %s2729, %s2717, 128, 128, 8
        $region112: #{tpu_custom_call.1} parent=63 // pred_fallthru
          _
      $region64: #{tpu_custom_call.1} parent=5 // pred_fallthru
        _
      %p2737 = scmp.le.s32.totalorder 2, %s34
      // Predicated region
      $region113: #{tpu_custom_call.1} parent=5 // pred_check
        %p2738 = pneg %p2737
      $region114: #{tpu_custom_call.1} parent=5 // pred_check_branch
        %2740 = sbr.rel (%p2738) target = $region116
      $region115: #{tpu_custom_call.1} parent=5 // pred_region
        %s2741 = ssub.s32 %s34, 2
        // Predicated region
        $region117: #{tpu_custom_call.1} parent=115 // pred_check
          %p2742 = pneg %p329
        $region118: #{tpu_custom_call.1} parent=115 // pred_check_branch
          %2744 = sbr.rel (%p2742) target = $region120
        $region119: #{tpu_custom_call.1} parent=115 // pred_region
          %s2745 = sand.u32 %s314, 1
          %s2746 = scalar_lea.sflag [#allocation4], %s2745
          %s2747 = sand.u32 %s314, 1
          %s2748 = smul.addr %s2747, 32
          %s2749 = scalar_lea.vmem [#allocation20], %s2748
          %2750 = dma.done %s2746, 512
        $region120: #{tpu_custom_call.1} parent=115 // pred_fallthru
          _
      $region116: #{tpu_custom_call.1} parent=5 // pred_fallthru
        _
    $region6: #{tpu_custom_call.1} parent=1 // loop_footer
      %s38 = sadd.s32 1, %s34
    $region7: #{tpu_custom_call.1} parent=1 // loop_footer_branch
      %33 = sbr.rel target = $region3
    $region8: #{tpu_custom_call.1} parent=1 // loop_exit
      _
    %2751 = vsyncpa [#allocation3], 1
    %s2752 = scalar_lea.sflag [#allocation3], 1
    %2753 = vsyncpa %s2752, 1
    %2754 = vsyncpa [#allocation6], 1
    %s2755 = scalar_lea.sflag [#allocation6], 1
    %2756 = vsyncpa %s2755, 1
    %2757 = vsyncpa [#allocation9], 1
    %s2758 = scalar_lea.sflag [#allocation9], 1
    %2759 = vsyncpa %s2758, 1
    %2760 = vsyncpa [#allocation12], 1
    %s2761 = scalar_lea.sflag [#allocation12], 1
    %2762 = vsyncpa %s2761, 1
    %2763 = vsyncpa [#allocation15], 1
    %2764 = vsyncpa [#allocation18], 1
    %2765 = vsyncpa [#allocation4], 1
    %s2766 = scalar_lea.sflag [#allocation4], 1
    %2767 = vsyncpa %s2766, 1

</llo_original>
